<compile_context>
chip_gen: v5e
topology: v5e:2x2
jax: 0.10.0
libtpu: 0.0.40
codegen_flags: <defaults>
</compile_context>

<pallas_src>
import jax
import jax.numpy as jnp
from jax.experimental import pallas as pl
from jax.experimental.pallas import tpu as pltpu


def mul_conv1x1_kernel(x_ref, s_ref, w_ref, o_ref):
    # x_ref : (HW, Cin)      resident activation (already scale-free, row-major NHWC-flat)
    # s_ref : (1, Cin)       resident per-channel scale -> sublane broadcast (VPU)
    # w_ref : (Cin, TILE_N)  pipelined weight slab for this grid step
    # o_ref : (HW, TILE_N)   lane-dense output block (unmasked vst)
    xs = x_ref[...] * s_ref[...]                       # (HW, Cin), VPU
    o_ref[...] = jnp.dot(                              # (HW, TILE_N), MXU, f32 accumulate
        xs, w_ref[...], preferred_element_type=jnp.float32
    ).astype(o_ref.dtype)


def mul_conv1x1(x_nchw, scale_nc11, weight_oihw, *, tile_n=256):
    """Conv2d(Cin->Cout, 1x1, bias=False)(scale * x) for batch 1, NCHW in / NCHW out."""
    n, cin, h, w = x_nchw.shape
    assert n == 1, "kernel written for batch 1 (matches the reference module)"
    assert tile_n % 128 == 0, "Cout tile must be a multiple of 128 (lane-dense blocks)"
    cout = weight_oihw.shape[0]
    hw = h * w

    # Activation: (1,Cin,H,W) -> (Cin,HW) is a pure reshape; the small (~0.4 MB) transpose
    # to (HW, Cin) buys lane-dense MXU N and unmasked output stores inside the kernel.
    x_t = x_nchw.reshape(cin, hw).T                    # (HW, Cin)
    s_row = scale_nc11.reshape(1, cin)                 # (1, Cin) -> sublane broadcast
    # One-time weight re-layout (static conv weight in a real model -> folded at init).
    w_t = weight_oihw.reshape(cout, cin).T             # (Cin, Cout)

    grid_n = pl.cdiv(cout, tile_n)                     # 344 / 256 -> 2 steps
    itemsize = x_t.dtype.itemsize
    cost = pl.CostEstimate(
        flops=2 * hw * cin * cout,
        transcendentals=0,
        bytes_accessed=(x_t.size + s_row.size + w_t.size + hw * cout) * itemsize,
    )

    out_t = pl.pallas_call(
        mul_conv1x1_kernel,
        out_shape=jax.ShapeDtypeStruct((hw, cout), x_nchw.dtype),
        grid_spec=pltpu.PrefetchScalarGridSpec(
            num_scalar_prefetch=0,
            grid=(grid_n,),
            in_specs=[
                pl.BlockSpec((hw, cin), lambda j: (0, 0)),      # x resident across steps
                pl.BlockSpec((1, cin), lambda j: (0, 0)),       # scale resident
                pl.BlockSpec((cin, tile_n), lambda j: (0, j)),  # weight slab pipelined
            ],
            out_specs=pl.BlockSpec((hw, tile_n), lambda j: (0, j)),
        ),
        compiler_params=pltpu.CompilerParams(
            dimension_semantics=("parallel",),        # shards Cout steps across v7x's 2 TCs
        ),
        cost_estimate=cost,
    )(x_t, s_row, w_t)

    # (HW, Cout) -> (1, Cout, H, W): tiny (~67 KB) transpose + pure reshape back to NCHW.
    return out_t.T.reshape(1, cout, h, w)


if __name__ == "__main__":
    # The module's real (already small) shapes: x516 (1, 2064, 7, 7), x521 (1, 2064, 1, 1),
    # Conv2d(2064 -> 344, kernel 1x1, bias=False).
    N, CIN, COUT, H, W = 1, 2064, 344, 7, 7

    key = jax.random.PRNGKey(0)
    k1, k2, k3 = jax.random.split(key, 3)
    x516 = jax.random.normal(k1, (N, CIN, H, W), dtype=jnp.float32)
    x521 = jax.random.normal(k2, (N, CIN, 1, 1), dtype=jnp.float32)
    weight = (jax.random.normal(k3, (COUT, CIN, 1, 1), dtype=jnp.float32)
              * (1.0 / jnp.sqrt(CIN)))

    out = mul_conv1x1(x516, x521, weight)
    out = jax.block_until_ready(out)

    # Pure-JAX reference of the same semantics (broadcast mul + 1x1 conv), same default
    # MXU precision as the kernel's jnp.dot.
    x_scaled = x521 * x516
    ref = jnp.einsum("oc,nchw->nohw", weight.reshape(COUT, CIN), x_scaled)

    assert out.shape == (N, COUT, H, W), out.shape
    max_err = float(jnp.max(jnp.abs(out - ref)))
    assert jnp.allclose(out, ref, atol=2e-3, rtol=2e-3), max_err

    print("KERNEL_OK")
</pallas_src>

<mosaic_0001>
module attributes {stable_mosaic.version = 11 : i64} {
  func.func @mul_conv1x1_kernel(%arg0: i32, %arg1: memref<49x2064xf32, #tpu.memory_space<vmem>>, %arg2: memref<1x2064xf32, #tpu.memory_space<vmem>>, %arg3: memref<2064x256xf32, #tpu.memory_space<vmem>>, %arg4: memref<49x256xf32, #tpu.memory_space<vmem>>) attributes {dimension_semantics = [#tpu.dimension_semantics<parallel>], iteration_bounds = array<i64: 2>, scalar_prefetch = 0 : i64, scratch_operands = 0 : i64, tpu.core_type = #tpu.core_type<tc>, window_params = [{pipeline_mode = #tpu.pipeline_mode<synchronous>, transform_indices = @transform_0, window_bounds = array<i64: 49, 2064>}, {pipeline_mode = #tpu.pipeline_mode<synchronous>, transform_indices = @transform_1, window_bounds = array<i64: 1, 2064>}, {transform_indices = @transform_2, window_bounds = array<i64: 2064, 256>}, {transform_indices = @transform_3, window_bounds = array<i64: 49, 256>}]} {
    %c0 = arith.constant 0 : index
    %c0_0 = arith.constant 0 : index
    %0 = vector.load %arg1[%c0, %c0_0] : memref<49x2064xf32, #tpu.memory_space<vmem>>, vector<49x2064xf32>
    %c0_1 = arith.constant 0 : index
    %c0_2 = arith.constant 0 : index
    %1 = vector.load %arg2[%c0_1, %c0_2] : memref<1x2064xf32, #tpu.memory_space<vmem>>, vector<1x2064xf32>
    %2 = vector.broadcast %1 : vector<1x2064xf32> to vector<49x2064xf32>
    %3 = arith.mulf %0, %2 : vector<49x2064xf32>
    %c0_3 = arith.constant 0 : index
    %c0_4 = arith.constant 0 : index
    %4 = vector.load %arg3[%c0_3, %c0_4] : memref<2064x256xf32, #tpu.memory_space<vmem>>, vector<2064x256xf32>
    %cst = arith.constant dense<0.000000e+00> : vector<49x256xf32>
    %5 = tpu.matmul %3, %4, %cst {dimension_numbers = #tpu.dot_dimension_numbers<[1], [0], [0], [1], [0, 0, 1, 1], [], []>} : vector<49x2064xf32>, vector<2064x256xf32>, vector<49x256xf32> -> vector<49x256xf32>
    %c0_5 = arith.constant 0 : index
    %c0_6 = arith.constant 0 : index
    %6 = vector.load %arg4[%c0_5, %c0_6] : memref<49x256xf32, #tpu.memory_space<vmem>>, vector<49x256xf32>
    tpu.vector_store %arg4[%c0_5, %c0_6], %5 {strides = array<i32>} : memref<49x256xf32, #tpu.memory_space<vmem>>, vector<49x256xf32>,
    return
  }
  func.func @transform_0(%arg0: i32) -> (i32, i32) {
    %c0_i32 = arith.constant 0 : i32
    %c0_i32_0 = arith.constant 0 : i32
    %c0_i32_1 = arith.constant 0 : i32
    return %c0_i32, %c0_i32_0 : i32, i32
  }
  func.func @transform_1(%arg0: i32) -> (i32, i32) {
    %c0_i32 = arith.constant 0 : i32
    %c0_i32_0 = arith.constant 0 : i32
    %c0_i32_1 = arith.constant 0 : i32
    return %c0_i32, %c0_i32_0 : i32, i32
  }
  func.func @transform_2(%arg0: i32) -> (i32, i32) {
    %c0_i32 = arith.constant 0 : i32
    %c0_i32_0 = arith.constant 0 : i32
    return %c0_i32, %arg0 : i32, i32
  }
  func.func @transform_3(%arg0: i32) -> (i32, i32) {
    %c0_i32 = arith.constant 0 : i32
    %c0_i32_0 = arith.constant 0 : i32
    return %c0_i32, %arg0 : i32, i32
  }
}

</mosaic_0001>

<llo_original>
// kernel: tpu_custom_call.1
$region0: #{tpu_custom_call.1}
  #allocation0 [shape = 'u32[]', space=smem, size = 0x4, offset = 0x4, fixed_abs, tag = 'smem constant byte address 0x4 - core index']
  #allocation1 [shape = 'u32[72,128]{1,0:T(1,128)}', space=vmem, size = 0x9000, scoped, tag = 'internal scratch']
  %s0 = inlined_call_operand.vmem [shape: f32[49,2064], index: 0, kind: input, shape index: {}]
  %s1 = inlined_call_operand.vmem [shape: f32[1,2064], index: 1, kind: input, shape index: {}]
  %s2 = inlined_call_operand.vmem [shape: f32[2064,344], index: 2, kind: input, shape index: {}]
  %s3 = inlined_call_operand.hbm [shape: f32[49,344], index: 3, kind: output, shape index: {}]
  %s4 = sld [smem:[#allocation0]]
  $region97: #{tpu_custom_call.1} parent=0
    _
  %s6 = ssub.s32 1, %s4
  %s7 = scalar_select 0, %s6, %s4
  $region1: #{tpu_custom_call.1} parent=0
    #allocation2 [shape = 'u8[4227072]{0}', space=vmem, size = 0x408000, scoped, tag = 'input window, operand 2']
    #allocation3 [shape = 'u8[114688]{0}', space=vmem, size = 0x1c000, scoped, tag = 'output window, operand 0']
    #allocation4 [shape = 's32[2]{0}', space=sflag, size = 0x8, scoped, tag = 'scoped memory for tpu_custom_call.1']
    %8 = vsyncpa [#allocation4], 0
    %s9 = scalar_lea.sflag [#allocation4], 1
    %10 = vsyncpa %s9, 0
    loop: start=0, step=1, limit=4
    $region2: #{tpu_custom_call.1} parent=1 // loop_pre_header
      _
    $region3: #{tpu_custom_call.1} parent=1 // loop_header
      %s12 = sphi 0, %s16
      %p13 = scmp.ge.s32.totalorder %s12, 4
      %s20 = sphi 0, %s20
      %s22 = sphi 0, %s20
      %s23 = sphi 0, %s22
      %s37 = sphi 0, %s23
      %s41 = sphi 0, %s41
      %s43 = sphi 0, %s41
      %s44 = sphi 0, %s43
      %s58 = sphi 0, %s44
      %s64 = sphi 0, %s66
      %s67 = sphi 0, %s64
      %s68 = sphi 0, %s67
      %s84 = sphi 0, %s68
      %s90 = sphi 0, %s92
      %s93 = sphi 0, %s90
      %s94 = sphi 0, %s93
      %s110 = sphi 0, %s94
    $region4: #{tpu_custom_call.1} parent=1 // loop_header_branch
      %15 = sbr.rel (%p13) target = $region8
    $region5: #{tpu_custom_call.1} parent=1 // loop_body
      %s17 = ssub.s32 %s12, 1
      %s18 = ssub.s32 %s12, 2
      %s19 = sadd.s32 %s12, 1
      %s21 = sadd.s32 %s20, 1
      %p24 = scmp.eq.s32.totalorder %s12, 1
      %p25 = scmp.ne.s32.totalorder %s20, %s22
      %p26 = scmp.eq.s32.totalorder %s12, 0
      %p27 = por %p25, %p26
      %p28 = scmp.ne.s32.totalorder %s20, %s22
      %p29 = scmp.eq.s32.totalorder %s17, 1
      %p30 = por %p28, %p29
      %p31 = scmp.ne.s32.totalorder %s22, %s23
      %p32 = scmp.eq.s32.totalorder %s17, 0
      %p33 = por %p31, %p32
      %p34 = scmp.ne.s32.totalorder %s22, %s23
      %p35 = scmp.eq.s32.totalorder %s18, 1
      %p36 = por %p34, %p35
      %p38 = scmp.ne.s32.totalorder %s23, %s37
      %p39 = scmp.eq.s32.totalorder %s18, 0
      %p40 = por %p38, %p39
      %s42 = sadd.s32 %s41, 1
      %p45 = scmp.eq.s32.totalorder %s12, 1
      %p46 = scmp.ne.s32.totalorder %s41, %s43
      %p47 = scmp.eq.s32.totalorder %s12, 0
      %p48 = por %p46, %p47
      %p49 = scmp.ne.s32.totalorder %s41, %s43
      %p50 = scmp.eq.s32.totalorder %s17, 1
      %p51 = por %p49, %p50
      %p52 = scmp.ne.s32.totalorder %s43, %s44
      %p53 = scmp.eq.s32.totalorder %s17, 0
      %p54 = por %p52, %p53
      %p55 = scmp.ne.s32.totalorder %s43, %s44
      %p56 = scmp.eq.s32.totalorder %s18, 1
      %p57 = por %p55, %p56
      %p59 = scmp.ne.s32.totalorder %s44, %s58
      %p60 = scmp.eq.s32.totalorder %s18, 0
      %p61 = por %p59, %p60
      %s62 = ssub.s32 %s12, %s19
      %p63 = scmp.eq.s32.totalorder %s62, 0
      %s65 = sadd.s32 %s64, 1
      %s66 = scalar_select %p63, %s64, %s65
      %p69 = pneg %p63
      %p70 = scmp.eq.s32.totalorder %s12, 1
      %p71 = por %p69, %p70
      %p72 = scmp.ne.s32.totalorder %s64, %s67
      %p73 = scmp.eq.s32.totalorder %s12, 0
      %p74 = por %p72, %p73
      %p75 = scmp.ne.s32.totalorder %s64, %s67
      %p76 = scmp.eq.s32.totalorder %s17, 1
      %p77 = por %p75, %p76
      %p78 = scmp.ne.s32.totalorder %s67, %s68
      %p79 = scmp.eq.s32.totalorder %s17, 0
      %p80 = por %p78, %p79
      %p81 = scmp.ne.s32.totalorder %s67, %s68
      %p82 = scmp.eq.s32.totalorder %s18, 1
      %p83 = por %p81, %p82
      %p85 = scmp.ne.s32.totalorder %s68, %s84
      %p86 = scmp.eq.s32.totalorder %s18, 0
      %p87 = por %p85, %p86
      %s88 = ssub.s32 %s12, %s19
      %p89 = scmp.eq.s32.totalorder %s88, 0
      %s91 = sadd.s32 %s90, 1
      %s92 = scalar_select %p89, %s90, %s91
      %p95 = pneg %p89
      %p96 = scmp.eq.s32.totalorder %s12, 1
      %p97 = por %p95, %p96
      %p98 = scmp.ne.s32.totalorder %s90, %s93
      %p99 = scmp.eq.s32.totalorder %s12, 0
      %p100 = por %p98, %p99
      %p101 = scmp.ne.s32.totalorder %s90, %s93
      %p102 = scmp.eq.s32.totalorder %s17, 1
      %p103 = por %p101, %p102
      %p104 = scmp.ne.s32.totalorder %s93, %s94
      %p105 = scmp.eq.s32.totalorder %s17, 0
      %p106 = por %p104, %p105
      %p107 = scmp.ne.s32.totalorder %s93, %s94
      %p108 = scmp.eq.s32.totalorder %s18, 1
      %p109 = por %p107, %p108
      %p111 = scmp.ne.s32.totalorder %s94, %s110
      %p112 = scmp.eq.s32.totalorder %s18, 0
      %p113 = por %p111, %p112
      %p114 = scmp.le.s32.totalorder 1, %s12
      %p115 = scmp.lt.s32.totalorder %s12, 3
      %p116 = pnand %p114, %p115
      %p117 = pneg %p116
      // Predicated region
      $region9: #{tpu_custom_call.1} parent=5 // pred_check
        _
      $region10: #{tpu_custom_call.1} parent=5 // pred_check_branch
        %119 = sbr.rel (%p116) target = $region12
      $region11: #{tpu_custom_call.1} parent=5 // pred_region
        %s120 = ssub.s32 %s12, 1
        // Predicated region
        $region13: #{tpu_custom_call.1} parent=11 // pred_check
          %p121 = pneg %p33
        $region14: #{tpu_custom_call.1} parent=11 // pred_check_branch
          %123 = sbr.rel (%p121) target = $region16
        $region15: #{tpu_custom_call.1} parent=11 // pred_region
          _
        $region16: #{tpu_custom_call.1} parent=11 // pred_fallthru
          _
        // Predicated region
        $region17: #{tpu_custom_call.1} parent=11 // pred_check
          %p124 = pneg %p54
        $region18: #{tpu_custom_call.1} parent=11 // pred_check_branch
          %126 = sbr.rel (%p124) target = $region20
        $region19: #{tpu_custom_call.1} parent=11 // pred_region
          _
        $region20: #{tpu_custom_call.1} parent=11 // pred_fallthru
          _
      $region12: #{tpu_custom_call.1} parent=5 // pred_fallthru
        _
      %p127 = scmp.lt.s32.totalorder %s12, 2
      // Predicated region
      $region21: #{tpu_custom_call.1} parent=5 // pred_check
        %p128 = pneg %p127
      $region22: #{tpu_custom_call.1} parent=5 // pred_check_branch
        %130 = sbr.rel (%p128) target = $region24
      $region23: #{tpu_custom_call.1} parent=5 // pred_region
        // Predicated region
        $region25: #{tpu_custom_call.1} parent=23 // pred_check
          %p131 = pneg %p74
        $region26: #{tpu_custom_call.1} parent=23 // pred_check_branch
          %133 = sbr.rel (%p131) target = $region28
        $region27: #{tpu_custom_call.1} parent=23 // pred_region
          %s134 = sand.u32 %s64, 1
          %s135 = sand.u32 %s64, 1
          %s136 = smul.addr %s135, 4128
          %s137 = scalar_lea.vmem [#allocation2], %s136
          %s138 = smul.u32 2, %s12
          %s139 = ssub.s32 3, %s138
          %p140 = scmp.lt.s32.totalorder %s139, 2
          %s141 = scalar_select %p140, %s139, 2
          %s142 = smul.u32 2064, %s141
          %p143 = scmp.ne.s32.totalorder 0, %s142
          %s144 = smul.addr %s138, 8
          %s145 = scalar_lea.vmem %s2, %s144
          %s146 = smul.u32 %s141, 8
          // Predicated region
          $region29: #{tpu_custom_call.1} parent=27 // pred_check
            %p147 = pneg %p143
          $region30: #{tpu_custom_call.1} parent=27 // pred_check_branch
            %149 = sbr.rel (%p147) target = $region32
          $region31: #{tpu_custom_call.1} parent=27 // pred_region
            %p150 = scmp.lt.u32.totalorder %s146, 8
            %p151 = pneg %p150
            // Predicated region
            $region33: #{tpu_custom_call.1} parent=31 // pred_check
              _
            $region34: #{tpu_custom_call.1} parent=31 // pred_check_branch
              %153 = sbr.rel (%p150) target = $region36
            $region35: #{tpu_custom_call.1} parent=31 // pred_region
              %s683 = sand.u32 %s146, 7
              %p684 = scmp.eq.s32.totalorder %s683, 0
              // Predicated region
              $region48: #{tpu_custom_call.1} parent=35 // pred_check
                %p685 = pneg %p684
              $region49: #{tpu_custom_call.1} parent=35 // pred_check_branch
                %687 = sbr.rel (%p685) target = $region51
              $region50: #{tpu_custom_call.1} parent=35 // pred_region
                %s688 = sshrl.u32 %s146, 3
                // While loop
                $region52: #{tpu_custom_call.1} parent=50 // loop_pre_header
                  _
                $region53: #{tpu_custom_call.1} parent=50 // loop_header
                  %s690 = sphi 0, %s692
                  %p691 = scmp.ge.s32.totalorder %s690, %s688
                  %s695 = sphi 0, %s1216
                  %s696 = sphi %s145, %s1219
                  %s697 = sphi %s137, %s1220
                $region54: #{tpu_custom_call.1} parent=50 // loop_header_branch
                  %694 = sbr.rel (%p691) target = $region58
                $region55: #{tpu_custom_call.1} parent=50 // loop_body
                  %v698 = vld [vmem:[%s696] sm:$0xff]
                  %699 = vst [vmem:[%s697] sm:$0xff] %v698
                  %v700 = vld [vmem:[%s696 + $0x18] sm:$0xff]
                  %701 = vst [vmem:[%s697 + $0x10] sm:$0xff] %v700
                  %v702 = vld [vmem:[%s696 + $0x30] sm:$0xff]
                  %703 = vst [vmem:[%s697 + $0x20] sm:$0xff] %v702
                  %v704 = vld [vmem:[%s696 + $0x48] sm:$0xff]
                  %705 = vst [vmem:[%s697 + $0x30] sm:$0xff] %v704
                  %v706 = vld [vmem:[%s696 + $0x60] sm:$0xff]
                  %707 = vst [vmem:[%s697 + $0x40] sm:$0xff] %v706
                  %v708 = vld [vmem:[%s696 + $0x78] sm:$0xff]
                  %709 = vst [vmem:[%s697 + $0x50] sm:$0xff] %v708
                  %v710 = vld [vmem:[%s696 + $0x90] sm:$0xff]
                  %711 = vst [vmem:[%s697 + $0x60] sm:$0xff] %v710
                  %v712 = vld [vmem:[%s696 + $0xa8] sm:$0xff]
                  %713 = vst [vmem:[%s697 + $0x70] sm:$0xff] %v712
                  %v714 = vld [vmem:[%s696 + $0xc0] sm:$0xff]
                  %715 = vst [vmem:[%s697 + $0x80] sm:$0xff] %v714
                  %v716 = vld [vmem:[%s696 + $0xd8] sm:$0xff]
                  %717 = vst [vmem:[%s697 + $0x90] sm:$0xff] %v716
                  %v718 = vld [vmem:[%s696 + $0xf0] sm:$0xff]
                  %719 = vst [vmem:[%s697 + $0xa0] sm:$0xff] %v718
                  %v720 = vld [vmem:[%s696 + $0x108] sm:$0xff]
                  %721 = vst [vmem:[%s697 + $0xb0] sm:$0xff] %v720
                  %v722 = vld [vmem:[%s696 + $0x120] sm:$0xff]
                  %723 = vst [vmem:[%s697 + $0xc0] sm:$0xff] %v722
                  %v724 = vld [vmem:[%s696 + $0x138] sm:$0xff]
                  %725 = vst [vmem:[%s697 + $0xd0] sm:$0xff] %v724
                  %v726 = vld [vmem:[%s696 + $0x150] sm:$0xff]
                  %727 = vst [vmem:[%s697 + $0xe0] sm:$0xff] %v726
                  %v728 = vld [vmem:[%s696 + $0x168] sm:$0xff]
                  %729 = vst [vmem:[%s697 + $0xf0] sm:$0xff] %v728
                  %v730 = vld [vmem:[%s696 + $0x180] sm:$0xff]
                  %731 = vst [vmem:[%s697 + $0x100] sm:$0xff] %v730
                  %v732 = vld [vmem:[%s696 + $0x198] sm:$0xff]
                  %733 = vst [vmem:[%s697 + $0x110] sm:$0xff] %v732
                  %v734 = vld [vmem:[%s696 + $0x1b0] sm:$0xff]
                  %735 = vst [vmem:[%s697 + $0x120] sm:$0xff] %v734
                  %v736 = vld [vmem:[%s696 + $0x1c8] sm:$0xff]
                  %737 = vst [vmem:[%s697 + $0x130] sm:$0xff] %v736
                  %v738 = vld [vmem:[%s696 + $0x1e0] sm:$0xff]
                  %739 = vst [vmem:[%s697 + $0x140] sm:$0xff] %v738
                  %v740 = vld [vmem:[%s696 + $0x1f8] sm:$0xff]
                  %741 = vst [vmem:[%s697 + $0x150] sm:$0xff] %v740
                  %v742 = vld [vmem:[%s696 + $0x210] sm:$0xff]
                  %743 = vst [vmem:[%s697 + $0x160] sm:$0xff] %v742
                  %v744 = vld [vmem:[%s696 + $0x228] sm:$0xff]
                  %745 = vst [vmem:[%s697 + $0x170] sm:$0xff] %v744
                  %v746 = vld [vmem:[%s696 + $0x240] sm:$0xff]
                  %747 = vst [vmem:[%s697 + $0x180] sm:$0xff] %v746
                  %v748 = vld [vmem:[%s696 + $0x258] sm:$0xff]
                  %749 = vst [vmem:[%s697 + $0x190] sm:$0xff] %v748
                  %v750 = vld [vmem:[%s696 + $0x270] sm:$0xff]
                  %751 = vst [vmem:[%s697 + $0x1a0] sm:$0xff] %v750
                  %v752 = vld [vmem:[%s696 + $0x288] sm:$0xff]
                  %753 = vst [vmem:[%s697 + $0x1b0] sm:$0xff] %v752
                  %v754 = vld [vmem:[%s696 + $0x2a0] sm:$0xff]
                  %755 = vst [vmem:[%s697 + $0x1c0] sm:$0xff] %v754
                  %v756 = vld [vmem:[%s696 + $0x2b8] sm:$0xff]
                  %757 = vst [vmem:[%s697 + $0x1d0] sm:$0xff] %v756
                  %v758 = vld [vmem:[%s696 + $0x2d0] sm:$0xff]
                  %759 = vst [vmem:[%s697 + $0x1e0] sm:$0xff] %v758
                  %v760 = vld [vmem:[%s696 + $0x2e8] sm:$0xff]
                  %761 = vst [vmem:[%s697 + $0x1f0] sm:$0xff] %v760
                  %v762 = vld [vmem:[%s696 + $0x300] sm:$0xff]
                  %763 = vst [vmem:[%s697 + $0x200] sm:$0xff] %v762
                  %v764 = vld [vmem:[%s696 + $0x318] sm:$0xff]
                  %765 = vst [vmem:[%s697 + $0x210] sm:$0xff] %v764
                  %v766 = vld [vmem:[%s696 + $0x330] sm:$0xff]
                  %767 = vst [vmem:[%s697 + $0x220] sm:$0xff] %v766
                  %v768 = vld [vmem:[%s696 + $0x348] sm:$0xff]
                  %769 = vst [vmem:[%s697 + $0x230] sm:$0xff] %v768
                  %v770 = vld [vmem:[%s696 + $0x360] sm:$0xff]
                  %771 = vst [vmem:[%s697 + $0x240] sm:$0xff] %v770
                  %v772 = vld [vmem:[%s696 + $0x378] sm:$0xff]
                  %773 = vst [vmem:[%s697 + $0x250] sm:$0xff] %v772
                  %v774 = vld [vmem:[%s696 + $0x390] sm:$0xff]
                  %775 = vst [vmem:[%s697 + $0x260] sm:$0xff] %v774
                  %v776 = vld [vmem:[%s696 + $0x3a8] sm:$0xff]
                  %777 = vst [vmem:[%s697 + $0x270] sm:$0xff] %v776
                  %v778 = vld [vmem:[%s696 + $0x3c0] sm:$0xff]
                  %779 = vst [vmem:[%s697 + $0x280] sm:$0xff] %v778
                  %v780 = vld [vmem:[%s696 + $0x3d8] sm:$0xff]
                  %781 = vst [vmem:[%s697 + $0x290] sm:$0xff] %v780
                  %v782 = vld [vmem:[%s696 + $0x3f0] sm:$0xff]
                  %783 = vst [vmem:[%s697 + $0x2a0] sm:$0xff] %v782
                  %v784 = vld [vmem:[%s696 + $0x408] sm:$0xff]
                  %785 = vst [vmem:[%s697 + $0x2b0] sm:$0xff] %v784
                  %v786 = vld [vmem:[%s696 + $0x420] sm:$0xff]
                  %787 = vst [vmem:[%s697 + $0x2c0] sm:$0xff] %v786
                  %v788 = vld [vmem:[%s696 + $0x438] sm:$0xff]
                  %789 = vst [vmem:[%s697 + $0x2d0] sm:$0xff] %v788
                  %v790 = vld [vmem:[%s696 + $0x450] sm:$0xff]
                  %791 = vst [vmem:[%s697 + $0x2e0] sm:$0xff] %v790
                  %v792 = vld [vmem:[%s696 + $0x468] sm:$0xff]
                  %793 = vst [vmem:[%s697 + $0x2f0] sm:$0xff] %v792
                  %v794 = vld [vmem:[%s696 + $0x480] sm:$0xff]
                  %795 = vst [vmem:[%s697 + $0x300] sm:$0xff] %v794
                  %v796 = vld [vmem:[%s696 + $0x498] sm:$0xff]
                  %797 = vst [vmem:[%s697 + $0x310] sm:$0xff] %v796
                  %v798 = vld [vmem:[%s696 + $0x4b0] sm:$0xff]
                  %799 = vst [vmem:[%s697 + $0x320] sm:$0xff] %v798
                  %v800 = vld [vmem:[%s696 + $0x4c8] sm:$0xff]
                  %801 = vst [vmem:[%s697 + $0x330] sm:$0xff] %v800
                  %v802 = vld [vmem:[%s696 + $0x4e0] sm:$0xff]
                  %803 = vst [vmem:[%s697 + $0x340] sm:$0xff] %v802
                  %v804 = vld [vmem:[%s696 + $0x4f8] sm:$0xff]
                  %805 = vst [vmem:[%s697 + $0x350] sm:$0xff] %v804
                  %v806 = vld [vmem:[%s696 + $0x510] sm:$0xff]
                  %807 = vst [vmem:[%s697 + $0x360] sm:$0xff] %v806
                  %v808 = vld [vmem:[%s696 + $0x528] sm:$0xff]
                  %809 = vst [vmem:[%s697 + $0x370] sm:$0xff] %v808
                  %v810 = vld [vmem:[%s696 + $0x540] sm:$0xff]
                  %811 = vst [vmem:[%s697 + $0x380] sm:$0xff] %v810
                  %v812 = vld [vmem:[%s696 + $0x558] sm:$0xff]
                  %813 = vst [vmem:[%s697 + $0x390] sm:$0xff] %v812
                  %v814 = vld [vmem:[%s696 + $0x570] sm:$0xff]
                  %815 = vst [vmem:[%s697 + $0x3a0] sm:$0xff] %v814
                  %v816 = vld [vmem:[%s696 + $0x588] sm:$0xff]
                  %817 = vst [vmem:[%s697 + $0x3b0] sm:$0xff] %v816
                  %v818 = vld [vmem:[%s696 + $0x5a0] sm:$0xff]
                  %819 = vst [vmem:[%s697 + $0x3c0] sm:$0xff] %v818
                  %v820 = vld [vmem:[%s696 + $0x5b8] sm:$0xff]
                  %821 = vst [vmem:[%s697 + $0x3d0] sm:$0xff] %v820
                  %v822 = vld [vmem:[%s696 + $0x5d0] sm:$0xff]
                  %823 = vst [vmem:[%s697 + $0x3e0] sm:$0xff] %v822
                  %v824 = vld [vmem:[%s696 + $0x5e8] sm:$0xff]
                  %825 = vst [vmem:[%s697 + $0x3f0] sm:$0xff] %v824
                  %v826 = vld [vmem:[%s696 + $0x600] sm:$0xff]
                  %827 = vst [vmem:[%s697 + $0x400] sm:$0xff] %v826
                  %v828 = vld [vmem:[%s696 + $0x618] sm:$0xff]
                  %829 = vst [vmem:[%s697 + $0x410] sm:$0xff] %v828
                  %v830 = vld [vmem:[%s696 + $0x630] sm:$0xff]
                  %831 = vst [vmem:[%s697 + $0x420] sm:$0xff] %v830
                  %v832 = vld [vmem:[%s696 + $0x648] sm:$0xff]
                  %833 = vst [vmem:[%s697 + $0x430] sm:$0xff] %v832
                  %v834 = vld [vmem:[%s696 + $0x660] sm:$0xff]
                  %835 = vst [vmem:[%s697 + $0x440] sm:$0xff] %v834
                  %v836 = vld [vmem:[%s696 + $0x678] sm:$0xff]
                  %837 = vst [vmem:[%s697 + $0x450] sm:$0xff] %v836
                  %v838 = vld [vmem:[%s696 + $0x690] sm:$0xff]
                  %839 = vst [vmem:[%s697 + $0x460] sm:$0xff] %v838
                  %v840 = vld [vmem:[%s696 + $0x6a8] sm:$0xff]
                  %841 = vst [vmem:[%s697 + $0x470] sm:$0xff] %v840
                  %v842 = vld [vmem:[%s696 + $0x6c0] sm:$0xff]
                  %843 = vst [vmem:[%s697 + $0x480] sm:$0xff] %v842
                  %v844 = vld [vmem:[%s696 + $0x6d8] sm:$0xff]
                  %845 = vst [vmem:[%s697 + $0x490] sm:$0xff] %v844
                  %v846 = vld [vmem:[%s696 + $0x6f0] sm:$0xff]
                  %847 = vst [vmem:[%s697 + $0x4a0] sm:$0xff] %v846
                  %v848 = vld [vmem:[%s696 + $0x708] sm:$0xff]
                  %849 = vst [vmem:[%s697 + $0x4b0] sm:$0xff] %v848
                  %v850 = vld [vmem:[%s696 + $0x720] sm:$0xff]
                  %851 = vst [vmem:[%s697 + $0x4c0] sm:$0xff] %v850
                  %v852 = vld [vmem:[%s696 + $0x738] sm:$0xff]
                  %853 = vst [vmem:[%s697 + $0x4d0] sm:$0xff] %v852
                  %v854 = vld [vmem:[%s696 + $0x750] sm:$0xff]
                  %855 = vst [vmem:[%s697 + $0x4e0] sm:$0xff] %v854
                  %v856 = vld [vmem:[%s696 + $0x768] sm:$0xff]
                  %857 = vst [vmem:[%s697 + $0x4f0] sm:$0xff] %v856
                  %v858 = vld [vmem:[%s696 + $0x780] sm:$0xff]
                  %859 = vst [vmem:[%s697 + $0x500] sm:$0xff] %v858
                  %v860 = vld [vmem:[%s696 + $0x798] sm:$0xff]
                  %861 = vst [vmem:[%s697 + $0x510] sm:$0xff] %v860
                  %v862 = vld [vmem:[%s696 + $0x7b0] sm:$0xff]
                  %863 = vst [vmem:[%s697 + $0x520] sm:$0xff] %v862
                  %v864 = vld [vmem:[%s696 + $0x7c8] sm:$0xff]
                  %865 = vst [vmem:[%s697 + $0x530] sm:$0xff] %v864
                  %v866 = vld [vmem:[%s696 + $0x7e0] sm:$0xff]
                  %867 = vst [vmem:[%s697 + $0x540] sm:$0xff] %v866
                  %v868 = vld [vmem:[%s696 + $0x7f8] sm:$0xff]
                  %869 = vst [vmem:[%s697 + $0x550] sm:$0xff] %v868
                  %v870 = vld [vmem:[%s696 + $0x810] sm:$0xff]
                  %871 = vst [vmem:[%s697 + $0x560] sm:$0xff] %v870
                  %v872 = vld [vmem:[%s696 + $0x828] sm:$0xff]
                  %873 = vst [vmem:[%s697 + $0x570] sm:$0xff] %v872
                  %v874 = vld [vmem:[%s696 + $0x840] sm:$0xff]
                  %875 = vst [vmem:[%s697 + $0x580] sm:$0xff] %v874
                  %v876 = vld [vmem:[%s696 + $0x858] sm:$0xff]
                  %877 = vst [vmem:[%s697 + $0x590] sm:$0xff] %v876
                  %v878 = vld [vmem:[%s696 + $0x870] sm:$0xff]
                  %879 = vst [vmem:[%s697 + $0x5a0] sm:$0xff] %v878
                  %v880 = vld [vmem:[%s696 + $0x888] sm:$0xff]
                  %881 = vst [vmem:[%s697 + $0x5b0] sm:$0xff] %v880
                  %v882 = vld [vmem:[%s696 + $0x8a0] sm:$0xff]
                  %883 = vst [vmem:[%s697 + $0x5c0] sm:$0xff] %v882
                  %v884 = vld [vmem:[%s696 + $0x8b8] sm:$0xff]
                  %885 = vst [vmem:[%s697 + $0x5d0] sm:$0xff] %v884
                  %v886 = vld [vmem:[%s696 + $0x8d0] sm:$0xff]
                  %887 = vst [vmem:[%s697 + $0x5e0] sm:$0xff] %v886
                  %v888 = vld [vmem:[%s696 + $0x8e8] sm:$0xff]
                  %889 = vst [vmem:[%s697 + $0x5f0] sm:$0xff] %v888
                  %v890 = vld [vmem:[%s696 + $0x900] sm:$0xff]
                  %891 = vst [vmem:[%s697 + $0x600] sm:$0xff] %v890
                  %v892 = vld [vmem:[%s696 + $0x918] sm:$0xff]
                  %893 = vst [vmem:[%s697 + $0x610] sm:$0xff] %v892
                  %v894 = vld [vmem:[%s696 + $0x930] sm:$0xff]
                  %895 = vst [vmem:[%s697 + $0x620] sm:$0xff] %v894
                  %v896 = vld [vmem:[%s696 + $0x948] sm:$0xff]
                  %897 = vst [vmem:[%s697 + $0x630] sm:$0xff] %v896
                  %v898 = vld [vmem:[%s696 + $0x960] sm:$0xff]
                  %899 = vst [vmem:[%s697 + $0x640] sm:$0xff] %v898
                  %v900 = vld [vmem:[%s696 + $0x978] sm:$0xff]
                  %901 = vst [vmem:[%s697 + $0x650] sm:$0xff] %v900
                  %v902 = vld [vmem:[%s696 + $0x990] sm:$0xff]
                  %903 = vst [vmem:[%s697 + $0x660] sm:$0xff] %v902
                  %v904 = vld [vmem:[%s696 + $0x9a8] sm:$0xff]
                  %905 = vst [vmem:[%s697 + $0x670] sm:$0xff] %v904
                  %v906 = vld [vmem:[%s696 + $0x9c0] sm:$0xff]
                  %907 = vst [vmem:[%s697 + $0x680] sm:$0xff] %v906
                  %v908 = vld [vmem:[%s696 + $0x9d8] sm:$0xff]
                  %909 = vst [vmem:[%s697 + $0x690] sm:$0xff] %v908
                  %v910 = vld [vmem:[%s696 + $0x9f0] sm:$0xff]
                  %911 = vst [vmem:[%s697 + $0x6a0] sm:$0xff] %v910
                  %v912 = vld [vmem:[%s696 + $0xa08] sm:$0xff]
                  %913 = vst [vmem:[%s697 + $0x6b0] sm:$0xff] %v912
                  %v914 = vld [vmem:[%s696 + $0xa20] sm:$0xff]
                  %915 = vst [vmem:[%s697 + $0x6c0] sm:$0xff] %v914
                  %v916 = vld [vmem:[%s696 + $0xa38] sm:$0xff]
                  %917 = vst [vmem:[%s697 + $0x6d0] sm:$0xff] %v916
                  %v918 = vld [vmem:[%s696 + $0xa50] sm:$0xff]
                  %919 = vst [vmem:[%s697 + $0x6e0] sm:$0xff] %v918
                  %v920 = vld [vmem:[%s696 + $0xa68] sm:$0xff]
                  %921 = vst [vmem:[%s697 + $0x6f0] sm:$0xff] %v920
                  %v922 = vld [vmem:[%s696 + $0xa80] sm:$0xff]
                  %923 = vst [vmem:[%s697 + $0x700] sm:$0xff] %v922
                  %v924 = vld [vmem:[%s696 + $0xa98] sm:$0xff]
                  %925 = vst [vmem:[%s697 + $0x710] sm:$0xff] %v924
                  %v926 = vld [vmem:[%s696 + $0xab0] sm:$0xff]
                  %927 = vst [vmem:[%s697 + $0x720] sm:$0xff] %v926
                  %v928 = vld [vmem:[%s696 + $0xac8] sm:$0xff]
                  %929 = vst [vmem:[%s697 + $0x730] sm:$0xff] %v928
                  %v930 = vld [vmem:[%s696 + $0xae0] sm:$0xff]
                  %931 = vst [vmem:[%s697 + $0x740] sm:$0xff] %v930
                  %v932 = vld [vmem:[%s696 + $0xaf8] sm:$0xff]
                  %933 = vst [vmem:[%s697 + $0x750] sm:$0xff] %v932
                  %v934 = vld [vmem:[%s696 + $0xb10] sm:$0xff]
                  %935 = vst [vmem:[%s697 + $0x760] sm:$0xff] %v934
                  %v936 = vld [vmem:[%s696 + $0xb28] sm:$0xff]
                  %937 = vst [vmem:[%s697 + $0x770] sm:$0xff] %v936
                  %v938 = vld [vmem:[%s696 + $0xb40] sm:$0xff]
                  %939 = vst [vmem:[%s697 + $0x780] sm:$0xff] %v938
                  %v940 = vld [vmem:[%s696 + $0xb58] sm:$0xff]
                  %941 = vst [vmem:[%s697 + $0x790] sm:$0xff] %v940
                  %v942 = vld [vmem:[%s696 + $0xb70] sm:$0xff]
                  %943 = vst [vmem:[%s697 + $0x7a0] sm:$0xff] %v942
                  %v944 = vld [vmem:[%s696 + $0xb88] sm:$0xff]
                  %945 = vst [vmem:[%s697 + $0x7b0] sm:$0xff] %v944
                  %v946 = vld [vmem:[%s696 + $0xba0] sm:$0xff]
                  %947 = vst [vmem:[%s697 + $0x7c0] sm:$0xff] %v946
                  %v948 = vld [vmem:[%s696 + $0xbb8] sm:$0xff]
                  %949 = vst [vmem:[%s697 + $0x7d0] sm:$0xff] %v948
                  %v950 = vld [vmem:[%s696 + $0xbd0] sm:$0xff]
                  %951 = vst [vmem:[%s697 + $0x7e0] sm:$0xff] %v950
                  %v952 = vld [vmem:[%s696 + $0xbe8] sm:$0xff]
                  %953 = vst [vmem:[%s697 + $0x7f0] sm:$0xff] %v952
                  %v954 = vld [vmem:[%s696 + $0xc00] sm:$0xff]
                  %955 = vst [vmem:[%s697 + $0x800] sm:$0xff] %v954
                  %v956 = vld [vmem:[%s696 + $0xc18] sm:$0xff]
                  %957 = vst [vmem:[%s697 + $0x810] sm:$0xff] %v956
                  %v958 = vld [vmem:[%s696 + $0xc30] sm:$0xff]
                  %959 = vst [vmem:[%s697 + $0x820] sm:$0xff] %v958
                  %v960 = vld [vmem:[%s696 + $0xc48] sm:$0xff]
                  %961 = vst [vmem:[%s697 + $0x830] sm:$0xff] %v960
                  %v962 = vld [vmem:[%s696 + $0xc60] sm:$0xff]
                  %963 = vst [vmem:[%s697 + $0x840] sm:$0xff] %v962
                  %v964 = vld [vmem:[%s696 + $0xc78] sm:$0xff]
                  %965 = vst [vmem:[%s697 + $0x850] sm:$0xff] %v964
                  %v966 = vld [vmem:[%s696 + $0xc90] sm:$0xff]
                  %967 = vst [vmem:[%s697 + $0x860] sm:$0xff] %v966
                  %v968 = vld [vmem:[%s696 + $0xca8] sm:$0xff]
                  %969 = vst [vmem:[%s697 + $0x870] sm:$0xff] %v968
                  %v970 = vld [vmem:[%s696 + $0xcc0] sm:$0xff]
                  %971 = vst [vmem:[%s697 + $0x880] sm:$0xff] %v970
                  %v972 = vld [vmem:[%s696 + $0xcd8] sm:$0xff]
                  %973 = vst [vmem:[%s697 + $0x890] sm:$0xff] %v972
                  %v974 = vld [vmem:[%s696 + $0xcf0] sm:$0xff]
                  %975 = vst [vmem:[%s697 + $0x8a0] sm:$0xff] %v974
                  %v976 = vld [vmem:[%s696 + $0xd08] sm:$0xff]
                  %977 = vst [vmem:[%s697 + $0x8b0] sm:$0xff] %v976
                  %v978 = vld [vmem:[%s696 + $0xd20] sm:$0xff]
                  %979 = vst [vmem:[%s697 + $0x8c0] sm:$0xff] %v978
                  %v980 = vld [vmem:[%s696 + $0xd38] sm:$0xff]
                  %981 = vst [vmem:[%s697 + $0x8d0] sm:$0xff] %v980
                  %v982 = vld [vmem:[%s696 + $0xd50] sm:$0xff]
                  %983 = vst [vmem:[%s697 + $0x8e0] sm:$0xff] %v982
                  %v984 = vld [vmem:[%s696 + $0xd68] sm:$0xff]
                  %985 = vst [vmem:[%s697 + $0x8f0] sm:$0xff] %v984
                  %v986 = vld [vmem:[%s696 + $0xd80] sm:$0xff]
                  %987 = vst [vmem:[%s697 + $0x900] sm:$0xff] %v986
                  %v988 = vld [vmem:[%s696 + $0xd98] sm:$0xff]
                  %989 = vst [vmem:[%s697 + $0x910] sm:$0xff] %v988
                  %v990 = vld [vmem:[%s696 + $0xdb0] sm:$0xff]
                  %991 = vst [vmem:[%s697 + $0x920] sm:$0xff] %v990
                  %v992 = vld [vmem:[%s696 + $0xdc8] sm:$0xff]
                  %993 = vst [vmem:[%s697 + $0x930] sm:$0xff] %v992
                  %v994 = vld [vmem:[%s696 + $0xde0] sm:$0xff]
                  %995 = vst [vmem:[%s697 + $0x940] sm:$0xff] %v994
                  %v996 = vld [vmem:[%s696 + $0xdf8] sm:$0xff]
                  %997 = vst [vmem:[%s697 + $0x950] sm:$0xff] %v996
                  %v998 = vld [vmem:[%s696 + $0xe10] sm:$0xff]
                  %999 = vst [vmem:[%s697 + $0x960] sm:$0xff] %v998
                  %v1000 = vld [vmem:[%s696 + $0xe28] sm:$0xff]
                  %1001 = vst [vmem:[%s697 + $0x970] sm:$0xff] %v1000
                  %v1002 = vld [vmem:[%s696 + $0xe40] sm:$0xff]
                  %1003 = vst [vmem:[%s697 + $0x980] sm:$0xff] %v1002
                  %v1004 = vld [vmem:[%s696 + $0xe58] sm:$0xff]
                  %1005 = vst [vmem:[%s697 + $0x990] sm:$0xff] %v1004
                  %v1006 = vld [vmem:[%s696 + $0xe70] sm:$0xff]
                  %1007 = vst [vmem:[%s697 + $0x9a0] sm:$0xff] %v1006
                  %v1008 = vld [vmem:[%s696 + $0xe88] sm:$0xff]
                  %1009 = vst [vmem:[%s697 + $0x9b0] sm:$0xff] %v1008
                  %v1010 = vld [vmem:[%s696 + $0xea0] sm:$0xff]
                  %1011 = vst [vmem:[%s697 + $0x9c0] sm:$0xff] %v1010
                  %v1012 = vld [vmem:[%s696 + $0xeb8] sm:$0xff]
                  %1013 = vst [vmem:[%s697 + $0x9d0] sm:$0xff] %v1012
                  %v1014 = vld [vmem:[%s696 + $0xed0] sm:$0xff]
                  %1015 = vst [vmem:[%s697 + $0x9e0] sm:$0xff] %v1014
                  %v1016 = vld [vmem:[%s696 + $0xee8] sm:$0xff]
                  %1017 = vst [vmem:[%s697 + $0x9f0] sm:$0xff] %v1016
                  %v1018 = vld [vmem:[%s696 + $0xf00] sm:$0xff]
                  %1019 = vst [vmem:[%s697 + $0xa00] sm:$0xff] %v1018
                  %v1020 = vld [vmem:[%s696 + $0xf18] sm:$0xff]
                  %1021 = vst [vmem:[%s697 + $0xa10] sm:$0xff] %v1020
                  %v1022 = vld [vmem:[%s696 + $0xf30] sm:$0xff]
                  %1023 = vst [vmem:[%s697 + $0xa20] sm:$0xff] %v1022
                  %v1024 = vld [vmem:[%s696 + $0xf48] sm:$0xff]
                  %1025 = vst [vmem:[%s697 + $0xa30] sm:$0xff] %v1024
                  %v1026 = vld [vmem:[%s696 + $0xf60] sm:$0xff]
                  %1027 = vst [vmem:[%s697 + $0xa40] sm:$0xff] %v1026
                  %v1028 = vld [vmem:[%s696 + $0xf78] sm:$0xff]
                  %1029 = vst [vmem:[%s697 + $0xa50] sm:$0xff] %v1028
                  %v1030 = vld [vmem:[%s696 + $0xf90] sm:$0xff]
                  %1031 = vst [vmem:[%s697 + $0xa60] sm:$0xff] %v1030
                  %v1032 = vld [vmem:[%s696 + $0xfa8] sm:$0xff]
                  %1033 = vst [vmem:[%s697 + $0xa70] sm:$0xff] %v1032
                  %v1034 = vld [vmem:[%s696 + $0xfc0] sm:$0xff]
                  %1035 = vst [vmem:[%s697 + $0xa80] sm:$0xff] %v1034
                  %v1036 = vld [vmem:[%s696 + $0xfd8] sm:$0xff]
                  %1037 = vst [vmem:[%s697 + $0xa90] sm:$0xff] %v1036
                  %v1038 = vld [vmem:[%s696 + $0xff0] sm:$0xff]
                  %1039 = vst [vmem:[%s697 + $0xaa0] sm:$0xff] %v1038
                  %v1040 = vld [vmem:[%s696 + $0x1008] sm:$0xff]
                  %1041 = vst [vmem:[%s697 + $0xab0] sm:$0xff] %v1040
                  %v1042 = vld [vmem:[%s696 + $0x1020] sm:$0xff]
                  %1043 = vst [vmem:[%s697 + $0xac0] sm:$0xff] %v1042
                  %v1044 = vld [vmem:[%s696 + $0x1038] sm:$0xff]
                  %1045 = vst [vmem:[%s697 + $0xad0] sm:$0xff] %v1044
                  %v1046 = vld [vmem:[%s696 + $0x1050] sm:$0xff]
                  %1047 = vst [vmem:[%s697 + $0xae0] sm:$0xff] %v1046
                  %v1048 = vld [vmem:[%s696 + $0x1068] sm:$0xff]
                  %1049 = vst [vmem:[%s697 + $0xaf0] sm:$0xff] %v1048
                  %v1050 = vld [vmem:[%s696 + $0x1080] sm:$0xff]
                  %1051 = vst [vmem:[%s697 + $0xb00] sm:$0xff] %v1050
                  %v1052 = vld [vmem:[%s696 + $0x1098] sm:$0xff]
                  %1053 = vst [vmem:[%s697 + $0xb10] sm:$0xff] %v1052
                  %v1054 = vld [vmem:[%s696 + $0x10b0] sm:$0xff]
                  %1055 = vst [vmem:[%s697 + $0xb20] sm:$0xff] %v1054
                  %v1056 = vld [vmem:[%s696 + $0x10c8] sm:$0xff]
                  %1057 = vst [vmem:[%s697 + $0xb30] sm:$0xff] %v1056
                  %v1058 = vld [vmem:[%s696 + $0x10e0] sm:$0xff]
                  %1059 = vst [vmem:[%s697 + $0xb40] sm:$0xff] %v1058
                  %v1060 = vld [vmem:[%s696 + $0x10f8] sm:$0xff]
                  %1061 = vst [vmem:[%s697 + $0xb50] sm:$0xff] %v1060
                  %v1062 = vld [vmem:[%s696 + $0x1110] sm:$0xff]
                  %1063 = vst [vmem:[%s697 + $0xb60] sm:$0xff] %v1062
                  %v1064 = vld [vmem:[%s696 + $0x1128] sm:$0xff]
                  %1065 = vst [vmem:[%s697 + $0xb70] sm:$0xff] %v1064
                  %v1066 = vld [vmem:[%s696 + $0x1140] sm:$0xff]
                  %1067 = vst [vmem:[%s697 + $0xb80] sm:$0xff] %v1066
                  %v1068 = vld [vmem:[%s696 + $0x1158] sm:$0xff]
                  %1069 = vst [vmem:[%s697 + $0xb90] sm:$0xff] %v1068
                  %v1070 = vld [vmem:[%s696 + $0x1170] sm:$0xff]
                  %1071 = vst [vmem:[%s697 + $0xba0] sm:$0xff] %v1070
                  %v1072 = vld [vmem:[%s696 + $0x1188] sm:$0xff]
                  %1073 = vst [vmem:[%s697 + $0xbb0] sm:$0xff] %v1072
                  %v1074 = vld [vmem:[%s696 + $0x11a0] sm:$0xff]
                  %1075 = vst [vmem:[%s697 + $0xbc0] sm:$0xff] %v1074
                  %v1076 = vld [vmem:[%s696 + $0x11b8] sm:$0xff]
                  %1077 = vst [vmem:[%s697 + $0xbd0] sm:$0xff] %v1076
                  %v1078 = vld [vmem:[%s696 + $0x11d0] sm:$0xff]
                  %1079 = vst [vmem:[%s697 + $0xbe0] sm:$0xff] %v1078
                  %v1080 = vld [vmem:[%s696 + $0x11e8] sm:$0xff]
                  %1081 = vst [vmem:[%s697 + $0xbf0] sm:$0xff] %v1080
                  %v1082 = vld [vmem:[%s696 + $0x1200] sm:$0xff]
                  %1083 = vst [vmem:[%s697 + $0xc00] sm:$0xff] %v1082
                  %v1084 = vld [vmem:[%s696 + $0x1218] sm:$0xff]
                  %1085 = vst [vmem:[%s697 + $0xc10] sm:$0xff] %v1084
                  %v1086 = vld [vmem:[%s696 + $0x1230] sm:$0xff]
                  %1087 = vst [vmem:[%s697 + $0xc20] sm:$0xff] %v1086
                  %v1088 = vld [vmem:[%s696 + $0x1248] sm:$0xff]
                  %1089 = vst [vmem:[%s697 + $0xc30] sm:$0xff] %v1088
                  %v1090 = vld [vmem:[%s696 + $0x1260] sm:$0xff]
                  %1091 = vst [vmem:[%s697 + $0xc40] sm:$0xff] %v1090
                  %v1092 = vld [vmem:[%s696 + $0x1278] sm:$0xff]
                  %1093 = vst [vmem:[%s697 + $0xc50] sm:$0xff] %v1092
                  %v1094 = vld [vmem:[%s696 + $0x1290] sm:$0xff]
                  %1095 = vst [vmem:[%s697 + $0xc60] sm:$0xff] %v1094
                  %v1096 = vld [vmem:[%s696 + $0x12a8] sm:$0xff]
                  %1097 = vst [vmem:[%s697 + $0xc70] sm:$0xff] %v1096
                  %v1098 = vld [vmem:[%s696 + $0x12c0] sm:$0xff]
                  %1099 = vst [vmem:[%s697 + $0xc80] sm:$0xff] %v1098
                  %v1100 = vld [vmem:[%s696 + $0x12d8] sm:$0xff]
                  %1101 = vst [vmem:[%s697 + $0xc90] sm:$0xff] %v1100
                  %v1102 = vld [vmem:[%s696 + $0x12f0] sm:$0xff]
                  %1103 = vst [vmem:[%s697 + $0xca0] sm:$0xff] %v1102
                  %v1104 = vld [vmem:[%s696 + $0x1308] sm:$0xff]
                  %1105 = vst [vmem:[%s697 + $0xcb0] sm:$0xff] %v1104
                  %v1106 = vld [vmem:[%s696 + $0x1320] sm:$0xff]
                  %1107 = vst [vmem:[%s697 + $0xcc0] sm:$0xff] %v1106
                  %v1108 = vld [vmem:[%s696 + $0x1338] sm:$0xff]
                  %1109 = vst [vmem:[%s697 + $0xcd0] sm:$0xff] %v1108
                  %v1110 = vld [vmem:[%s696 + $0x1350] sm:$0xff]
                  %1111 = vst [vmem:[%s697 + $0xce0] sm:$0xff] %v1110
                  %v1112 = vld [vmem:[%s696 + $0x1368] sm:$0xff]
                  %1113 = vst [vmem:[%s697 + $0xcf0] sm:$0xff] %v1112
                  %v1114 = vld [vmem:[%s696 + $0x1380] sm:$0xff]
                  %1115 = vst [vmem:[%s697 + $0xd00] sm:$0xff] %v1114
                  %v1116 = vld [vmem:[%s696 + $0x1398] sm:$0xff]
                  %1117 = vst [vmem:[%s697 + $0xd10] sm:$0xff] %v1116
                  %v1118 = vld [vmem:[%s696 + $0x13b0] sm:$0xff]
                  %1119 = vst [vmem:[%s697 + $0xd20] sm:$0xff] %v1118
                  %v1120 = vld [vmem:[%s696 + $0x13c8] sm:$0xff]
                  %1121 = vst [vmem:[%s697 + $0xd30] sm:$0xff] %v1120
                  %v1122 = vld [vmem:[%s696 + $0x13e0] sm:$0xff]
                  %1123 = vst [vmem:[%s697 + $0xd40] sm:$0xff] %v1122
                  %v1124 = vld [vmem:[%s696 + $0x13f8] sm:$0xff]
                  %1125 = vst [vmem:[%s697 + $0xd50] sm:$0xff] %v1124
                  %v1126 = vld [vmem:[%s696 + $0x1410] sm:$0xff]
                  %1127 = vst [vmem:[%s697 + $0xd60] sm:$0xff] %v1126
                  %v1128 = vld [vmem:[%s696 + $0x1428] sm:$0xff]
                  %1129 = vst [vmem:[%s697 + $0xd70] sm:$0xff] %v1128
                  %v1130 = vld [vmem:[%s696 + $0x1440] sm:$0xff]
                  %1131 = vst [vmem:[%s697 + $0xd80] sm:$0xff] %v1130
                  %v1132 = vld [vmem:[%s696 + $0x1458] sm:$0xff]
                  %1133 = vst [vmem:[%s697 + $0xd90] sm:$0xff] %v1132
                  %v1134 = vld [vmem:[%s696 + $0x1470] sm:$0xff]
                  %1135 = vst [vmem:[%s697 + $0xda0] sm:$0xff] %v1134
                  %v1136 = vld [vmem:[%s696 + $0x1488] sm:$0xff]
                  %1137 = vst [vmem:[%s697 + $0xdb0] sm:$0xff] %v1136
                  %v1138 = vld [vmem:[%s696 + $0x14a0] sm:$0xff]
                  %1139 = vst [vmem:[%s697 + $0xdc0] sm:$0xff] %v1138
                  %v1140 = vld [vmem:[%s696 + $0x14b8] sm:$0xff]
                  %1141 = vst [vmem:[%s697 + $0xdd0] sm:$0xff] %v1140
                  %v1142 = vld [vmem:[%s696 + $0x14d0] sm:$0xff]
                  %1143 = vst [vmem:[%s697 + $0xde0] sm:$0xff] %v1142
                  %v1144 = vld [vmem:[%s696 + $0x14e8] sm:$0xff]
                  %1145 = vst [vmem:[%s697 + $0xdf0] sm:$0xff] %v1144
                  %v1146 = vld [vmem:[%s696 + $0x1500] sm:$0xff]
                  %1147 = vst [vmem:[%s697 + $0xe00] sm:$0xff] %v1146
                  %v1148 = vld [vmem:[%s696 + $0x1518] sm:$0xff]
                  %1149 = vst [vmem:[%s697 + $0xe10] sm:$0xff] %v1148
                  %v1150 = vld [vmem:[%s696 + $0x1530] sm:$0xff]
                  %1151 = vst [vmem:[%s697 + $0xe20] sm:$0xff] %v1150
                  %v1152 = vld [vmem:[%s696 + $0x1548] sm:$0xff]
                  %1153 = vst [vmem:[%s697 + $0xe30] sm:$0xff] %v1152
                  %v1154 = vld [vmem:[%s696 + $0x1560] sm:$0xff]
                  %1155 = vst [vmem:[%s697 + $0xe40] sm:$0xff] %v1154
                  %v1156 = vld [vmem:[%s696 + $0x1578] sm:$0xff]
                  %1157 = vst [vmem:[%s697 + $0xe50] sm:$0xff] %v1156
                  %v1158 = vld [vmem:[%s696 + $0x1590] sm:$0xff]
                  %1159 = vst [vmem:[%s697 + $0xe60] sm:$0xff] %v1158
                  %v1160 = vld [vmem:[%s696 + $0x15a8] sm:$0xff]
                  %1161 = vst [vmem:[%s697 + $0xe70] sm:$0xff] %v1160
                  %v1162 = vld [vmem:[%s696 + $0x15c0] sm:$0xff]
                  %1163 = vst [vmem:[%s697 + $0xe80] sm:$0xff] %v1162
                  %v1164 = vld [vmem:[%s696 + $0x15d8] sm:$0xff]
                  %1165 = vst [vmem:[%s697 + $0xe90] sm:$0xff] %v1164
                  %v1166 = vld [vmem:[%s696 + $0x15f0] sm:$0xff]
                  %1167 = vst [vmem:[%s697 + $0xea0] sm:$0xff] %v1166
                  %v1168 = vld [vmem:[%s696 + $0x1608] sm:$0xff]
                  %1169 = vst [vmem:[%s697 + $0xeb0] sm:$0xff] %v1168
                  %v1170 = vld [vmem:[%s696 + $0x1620] sm:$0xff]
                  %1171 = vst [vmem:[%s697 + $0xec0] sm:$0xff] %v1170
                  %v1172 = vld [vmem:[%s696 + $0x1638] sm:$0xff]
                  %1173 = vst [vmem:[%s697 + $0xed0] sm:$0xff] %v1172
                  %v1174 = vld [vmem:[%s696 + $0x1650] sm:$0xff]
                  %1175 = vst [vmem:[%s697 + $0xee0] sm:$0xff] %v1174
                  %v1176 = vld [vmem:[%s696 + $0x1668] sm:$0xff]
                  %1177 = vst [vmem:[%s697 + $0xef0] sm:$0xff] %v1176
                  %v1178 = vld [vmem:[%s696 + $0x1680] sm:$0xff]
                  %1179 = vst [vmem:[%s697 + $0xf00] sm:$0xff] %v1178
                  %v1180 = vld [vmem:[%s696 + $0x1698] sm:$0xff]
                  %1181 = vst [vmem:[%s697 + $0xf10] sm:$0xff] %v1180
                  %v1182 = vld [vmem:[%s696 + $0x16b0] sm:$0xff]
                  %1183 = vst [vmem:[%s697 + $0xf20] sm:$0xff] %v1182
                  %v1184 = vld [vmem:[%s696 + $0x16c8] sm:$0xff]
                  %1185 = vst [vmem:[%s697 + $0xf30] sm:$0xff] %v1184
                  %v1186 = vld [vmem:[%s696 + $0x16e0] sm:$0xff]
                  %1187 = vst [vmem:[%s697 + $0xf40] sm:$0xff] %v1186
                  %v1188 = vld [vmem:[%s696 + $0x16f8] sm:$0xff]
                  %1189 = vst [vmem:[%s697 + $0xf50] sm:$0xff] %v1188
                  %v1190 = vld [vmem:[%s696 + $0x1710] sm:$0xff]
                  %1191 = vst [vmem:[%s697 + $0xf60] sm:$0xff] %v1190
                  %v1192 = vld [vmem:[%s696 + $0x1728] sm:$0xff]
                  %1193 = vst [vmem:[%s697 + $0xf70] sm:$0xff] %v1192
                  %v1194 = vld [vmem:[%s696 + $0x1740] sm:$0xff]
                  %1195 = vst [vmem:[%s697 + $0xf80] sm:$0xff] %v1194
                  %v1196 = vld [vmem:[%s696 + $0x1758] sm:$0xff]
                  %1197 = vst [vmem:[%s697 + $0xf90] sm:$0xff] %v1196
                  %v1198 = vld [vmem:[%s696 + $0x1770] sm:$0xff]
                  %1199 = vst [vmem:[%s697 + $0xfa0] sm:$0xff] %v1198
                  %v1200 = vld [vmem:[%s696 + $0x1788] sm:$0xff]
                  %1201 = vst [vmem:[%s697 + $0xfb0] sm:$0xff] %v1200
                  %v1202 = vld [vmem:[%s696 + $0x17a0] sm:$0xff]
                  %1203 = vst [vmem:[%s697 + $0xfc0] sm:$0xff] %v1202
                  %v1204 = vld [vmem:[%s696 + $0x17b8] sm:$0xff]
                  %1205 = vst [vmem:[%s697 + $0xfd0] sm:$0xff] %v1204
                  %v1206 = vld [vmem:[%s696 + $0x17d0] sm:$0xff]
                  %1207 = vst [vmem:[%s697 + $0xfe0] sm:$0xff] %v1206
                  %v1208 = vld [vmem:[%s696 + $0x17e8] sm:$0xff]
                  %1209 = vst [vmem:[%s697 + $0xff0] sm:$0xff] %v1208
                  %v1210 = vld [vmem:[%s696 + $0x1800] sm:$0xff]
                  %1211 = vst [vmem:[%s697 + $0x1000] sm:$0xff] %v1210
                  %v1212 = vld [vmem:[%s696 + $0x1818] sm:$0xff]
                  %1213 = vst [vmem:[%s697 + $0x1010] sm:$0xff] %v1212
                  %s1214 = sadd.s32 1, %s695
                  %p1215 = scmp.ge.s32.totalorder %s1214, %s688
                  %s1216 = scalar_select %p1215, 0, %s1214
                  %s1217 = smul.u32 %s1216, 8
                  %s1218 = smul.u32 %s1216, 8
                  %s1219 = scalar_lea.vmem %s145, %s1217
                  %s1220 = scalar_lea.vmem %s137, %s1218 [#allocation2]
                $region56: #{tpu_custom_call.1} parent=50 // loop_footer
                  %s692 = sadd.s32 %s690, 1
                $region57: #{tpu_custom_call.1} parent=50 // loop_footer_branch
                  %689 = sbr.rel target = $region53
                $region58: #{tpu_custom_call.1} parent=50 // loop_exit
                  _
              $region51: #{tpu_custom_call.1} parent=35 // pred_fallthru
                _
              %p1221 = pneg %p684
              // Predicated region
              $region59: #{tpu_custom_call.1} parent=35 // pred_check
                _
              $region60: #{tpu_custom_call.1} parent=35 // pred_check_branch
                %1223 = sbr.rel (%p684) target = $region62
              $region61: #{tpu_custom_call.1} parent=35 // pred_region
                %s1224 = sand.u32 %s146, 7
                %s1225 = ssub.s32 %s146, %s1224
                %s1226 = scalar_lea.vmem %s145, %s1225
                %s1227 = ssub.s32 %s146, %s1224
                %s1228 = scalar_lea.vmem %s137, %s1227 [#allocation2]
                %s1229 = sshrl.u32 %s146, 3
                // While loop
                $region63: #{tpu_custom_call.1} parent=61 // loop_pre_header
                  _
                $region64: #{tpu_custom_call.1} parent=61 // loop_header
                  %s1231 = sphi 0, %s1233
                  %p1232 = scmp.ge.s32.totalorder %s1231, %s1229
                  %s1236 = sphi 0, %s1757
                  %s1237 = sphi %s145, %s1760
                  %s1238 = sphi %s137, %s1761
                $region65: #{tpu_custom_call.1} parent=61 // loop_header_branch
                  %1235 = sbr.rel (%p1232) target = $region69
                $region66: #{tpu_custom_call.1} parent=61 // loop_body
                  %v1239 = vld [vmem:[%s1237] sm:$0xff]
                  %1240 = vst [vmem:[%s1238] sm:$0xff] %v1239
                  %v1241 = vld [vmem:[%s1237 + $0x18] sm:$0xff]
                  %1242 = vst [vmem:[%s1238 + $0x10] sm:$0xff] %v1241
                  %v1243 = vld [vmem:[%s1237 + $0x30] sm:$0xff]
                  %1244 = vst [vmem:[%s1238 + $0x20] sm:$0xff] %v1243
                  %v1245 = vld [vmem:[%s1237 + $0x48] sm:$0xff]
                  %1246 = vst [vmem:[%s1238 + $0x30] sm:$0xff] %v1245
                  %v1247 = vld [vmem:[%s1237 + $0x60] sm:$0xff]
                  %1248 = vst [vmem:[%s1238 + $0x40] sm:$0xff] %v1247
                  %v1249 = vld [vmem:[%s1237 + $0x78] sm:$0xff]
                  %1250 = vst [vmem:[%s1238 + $0x50] sm:$0xff] %v1249
                  %v1251 = vld [vmem:[%s1237 + $0x90] sm:$0xff]
                  %1252 = vst [vmem:[%s1238 + $0x60] sm:$0xff] %v1251
                  %v1253 = vld [vmem:[%s1237 + $0xa8] sm:$0xff]
                  %1254 = vst [vmem:[%s1238 + $0x70] sm:$0xff] %v1253
                  %v1255 = vld [vmem:[%s1237 + $0xc0] sm:$0xff]
                  %1256 = vst [vmem:[%s1238 + $0x80] sm:$0xff] %v1255
                  %v1257 = vld [vmem:[%s1237 + $0xd8] sm:$0xff]
                  %1258 = vst [vmem:[%s1238 + $0x90] sm:$0xff] %v1257
                  %v1259 = vld [vmem:[%s1237 + $0xf0] sm:$0xff]
                  %1260 = vst [vmem:[%s1238 + $0xa0] sm:$0xff] %v1259
                  %v1261 = vld [vmem:[%s1237 + $0x108] sm:$0xff]
                  %1262 = vst [vmem:[%s1238 + $0xb0] sm:$0xff] %v1261
                  %v1263 = vld [vmem:[%s1237 + $0x120] sm:$0xff]
                  %1264 = vst [vmem:[%s1238 + $0xc0] sm:$0xff] %v1263
                  %v1265 = vld [vmem:[%s1237 + $0x138] sm:$0xff]
                  %1266 = vst [vmem:[%s1238 + $0xd0] sm:$0xff] %v1265
                  %v1267 = vld [vmem:[%s1237 + $0x150] sm:$0xff]
                  %1268 = vst [vmem:[%s1238 + $0xe0] sm:$0xff] %v1267
                  %v1269 = vld [vmem:[%s1237 + $0x168] sm:$0xff]
                  %1270 = vst [vmem:[%s1238 + $0xf0] sm:$0xff] %v1269
                  %v1271 = vld [vmem:[%s1237 + $0x180] sm:$0xff]
                  %1272 = vst [vmem:[%s1238 + $0x100] sm:$0xff] %v1271
                  %v1273 = vld [vmem:[%s1237 + $0x198] sm:$0xff]
                  %1274 = vst [vmem:[%s1238 + $0x110] sm:$0xff] %v1273
                  %v1275 = vld [vmem:[%s1237 + $0x1b0] sm:$0xff]
                  %1276 = vst [vmem:[%s1238 + $0x120] sm:$0xff] %v1275
                  %v1277 = vld [vmem:[%s1237 + $0x1c8] sm:$0xff]
                  %1278 = vst [vmem:[%s1238 + $0x130] sm:$0xff] %v1277
                  %v1279 = vld [vmem:[%s1237 + $0x1e0] sm:$0xff]
                  %1280 = vst [vmem:[%s1238 + $0x140] sm:$0xff] %v1279
                  %v1281 = vld [vmem:[%s1237 + $0x1f8] sm:$0xff]
                  %1282 = vst [vmem:[%s1238 + $0x150] sm:$0xff] %v1281
                  %v1283 = vld [vmem:[%s1237 + $0x210] sm:$0xff]
                  %1284 = vst [vmem:[%s1238 + $0x160] sm:$0xff] %v1283
                  %v1285 = vld [vmem:[%s1237 + $0x228] sm:$0xff]
                  %1286 = vst [vmem:[%s1238 + $0x170] sm:$0xff] %v1285
                  %v1287 = vld [vmem:[%s1237 + $0x240] sm:$0xff]
                  %1288 = vst [vmem:[%s1238 + $0x180] sm:$0xff] %v1287
                  %v1289 = vld [vmem:[%s1237 + $0x258] sm:$0xff]
                  %1290 = vst [vmem:[%s1238 + $0x190] sm:$0xff] %v1289
                  %v1291 = vld [vmem:[%s1237 + $0x270] sm:$0xff]
                  %1292 = vst [vmem:[%s1238 + $0x1a0] sm:$0xff] %v1291
                  %v1293 = vld [vmem:[%s1237 + $0x288] sm:$0xff]
                  %1294 = vst [vmem:[%s1238 + $0x1b0] sm:$0xff] %v1293
                  %v1295 = vld [vmem:[%s1237 + $0x2a0] sm:$0xff]
                  %1296 = vst [vmem:[%s1238 + $0x1c0] sm:$0xff] %v1295
                  %v1297 = vld [vmem:[%s1237 + $0x2b8] sm:$0xff]
                  %1298 = vst [vmem:[%s1238 + $0x1d0] sm:$0xff] %v1297
                  %v1299 = vld [vmem:[%s1237 + $0x2d0] sm:$0xff]
                  %1300 = vst [vmem:[%s1238 + $0x1e0] sm:$0xff] %v1299
                  %v1301 = vld [vmem:[%s1237 + $0x2e8] sm:$0xff]
                  %1302 = vst [vmem:[%s1238 + $0x1f0] sm:$0xff] %v1301
                  %v1303 = vld [vmem:[%s1237 + $0x300] sm:$0xff]
                  %1304 = vst [vmem:[%s1238 + $0x200] sm:$0xff] %v1303
                  %v1305 = vld [vmem:[%s1237 + $0x318] sm:$0xff]
                  %1306 = vst [vmem:[%s1238 + $0x210] sm:$0xff] %v1305
                  %v1307 = vld [vmem:[%s1237 + $0x330] sm:$0xff]
                  %1308 = vst [vmem:[%s1238 + $0x220] sm:$0xff] %v1307
                  %v1309 = vld [vmem:[%s1237 + $0x348] sm:$0xff]
                  %1310 = vst [vmem:[%s1238 + $0x230] sm:$0xff] %v1309
                  %v1311 = vld [vmem:[%s1237 + $0x360] sm:$0xff]
                  %1312 = vst [vmem:[%s1238 + $0x240] sm:$0xff] %v1311
                  %v1313 = vld [vmem:[%s1237 + $0x378] sm:$0xff]
                  %1314 = vst [vmem:[%s1238 + $0x250] sm:$0xff] %v1313
                  %v1315 = vld [vmem:[%s1237 + $0x390] sm:$0xff]
                  %1316 = vst [vmem:[%s1238 + $0x260] sm:$0xff] %v1315
                  %v1317 = vld [vmem:[%s1237 + $0x3a8] sm:$0xff]
                  %1318 = vst [vmem:[%s1238 + $0x270] sm:$0xff] %v1317
                  %v1319 = vld [vmem:[%s1237 + $0x3c0] sm:$0xff]
                  %1320 = vst [vmem:[%s1238 + $0x280] sm:$0xff] %v1319
                  %v1321 = vld [vmem:[%s1237 + $0x3d8] sm:$0xff]
                  %1322 = vst [vmem:[%s1238 + $0x290] sm:$0xff] %v1321
                  %v1323 = vld [vmem:[%s1237 + $0x3f0] sm:$0xff]
                  %1324 = vst [vmem:[%s1238 + $0x2a0] sm:$0xff] %v1323
                  %v1325 = vld [vmem:[%s1237 + $0x408] sm:$0xff]
                  %1326 = vst [vmem:[%s1238 + $0x2b0] sm:$0xff] %v1325
                  %v1327 = vld [vmem:[%s1237 + $0x420] sm:$0xff]
                  %1328 = vst [vmem:[%s1238 + $0x2c0] sm:$0xff] %v1327
                  %v1329 = vld [vmem:[%s1237 + $0x438] sm:$0xff]
                  %1330 = vst [vmem:[%s1238 + $0x2d0] sm:$0xff] %v1329
                  %v1331 = vld [vmem:[%s1237 + $0x450] sm:$0xff]
                  %1332 = vst [vmem:[%s1238 + $0x2e0] sm:$0xff] %v1331
                  %v1333 = vld [vmem:[%s1237 + $0x468] sm:$0xff]
                  %1334 = vst [vmem:[%s1238 + $0x2f0] sm:$0xff] %v1333
                  %v1335 = vld [vmem:[%s1237 + $0x480] sm:$0xff]
                  %1336 = vst [vmem:[%s1238 + $0x300] sm:$0xff] %v1335
                  %v1337 = vld [vmem:[%s1237 + $0x498] sm:$0xff]
                  %1338 = vst [vmem:[%s1238 + $0x310] sm:$0xff] %v1337
                  %v1339 = vld [vmem:[%s1237 + $0x4b0] sm:$0xff]
                  %1340 = vst [vmem:[%s1238 + $0x320] sm:$0xff] %v1339
                  %v1341 = vld [vmem:[%s1237 + $0x4c8] sm:$0xff]
                  %1342 = vst [vmem:[%s1238 + $0x330] sm:$0xff] %v1341
                  %v1343 = vld [vmem:[%s1237 + $0x4e0] sm:$0xff]
                  %1344 = vst [vmem:[%s1238 + $0x340] sm:$0xff] %v1343
                  %v1345 = vld [vmem:[%s1237 + $0x4f8] sm:$0xff]
                  %1346 = vst [vmem:[%s1238 + $0x350] sm:$0xff] %v1345
                  %v1347 = vld [vmem:[%s1237 + $0x510] sm:$0xff]
                  %1348 = vst [vmem:[%s1238 + $0x360] sm:$0xff] %v1347
                  %v1349 = vld [vmem:[%s1237 + $0x528] sm:$0xff]
                  %1350 = vst [vmem:[%s1238 + $0x370] sm:$0xff] %v1349
                  %v1351 = vld [vmem:[%s1237 + $0x540] sm:$0xff]
                  %1352 = vst [vmem:[%s1238 + $0x380] sm:$0xff] %v1351
                  %v1353 = vld [vmem:[%s1237 + $0x558] sm:$0xff]
                  %1354 = vst [vmem:[%s1238 + $0x390] sm:$0xff] %v1353
                  %v1355 = vld [vmem:[%s1237 + $0x570] sm:$0xff]
                  %1356 = vst [vmem:[%s1238 + $0x3a0] sm:$0xff] %v1355
                  %v1357 = vld [vmem:[%s1237 + $0x588] sm:$0xff]
                  %1358 = vst [vmem:[%s1238 + $0x3b0] sm:$0xff] %v1357
                  %v1359 = vld [vmem:[%s1237 + $0x5a0] sm:$0xff]
                  %1360 = vst [vmem:[%s1238 + $0x3c0] sm:$0xff] %v1359
                  %v1361 = vld [vmem:[%s1237 + $0x5b8] sm:$0xff]
                  %1362 = vst [vmem:[%s1238 + $0x3d0] sm:$0xff] %v1361
                  %v1363 = vld [vmem:[%s1237 + $0x5d0] sm:$0xff]
                  %1364 = vst [vmem:[%s1238 + $0x3e0] sm:$0xff] %v1363
                  %v1365 = vld [vmem:[%s1237 + $0x5e8] sm:$0xff]
                  %1366 = vst [vmem:[%s1238 + $0x3f0] sm:$0xff] %v1365
                  %v1367 = vld [vmem:[%s1237 + $0x600] sm:$0xff]
                  %1368 = vst [vmem:[%s1238 + $0x400] sm:$0xff] %v1367
                  %v1369 = vld [vmem:[%s1237 + $0x618] sm:$0xff]
                  %1370 = vst [vmem:[%s1238 + $0x410] sm:$0xff] %v1369
                  %v1371 = vld [vmem:[%s1237 + $0x630] sm:$0xff]
                  %1372 = vst [vmem:[%s1238 + $0x420] sm:$0xff] %v1371
                  %v1373 = vld [vmem:[%s1237 + $0x648] sm:$0xff]
                  %1374 = vst [vmem:[%s1238 + $0x430] sm:$0xff] %v1373
                  %v1375 = vld [vmem:[%s1237 + $0x660] sm:$0xff]
                  %1376 = vst [vmem:[%s1238 + $0x440] sm:$0xff] %v1375
                  %v1377 = vld [vmem:[%s1237 + $0x678] sm:$0xff]
                  %1378 = vst [vmem:[%s1238 + $0x450] sm:$0xff] %v1377
                  %v1379 = vld [vmem:[%s1237 + $0x690] sm:$0xff]
                  %1380 = vst [vmem:[%s1238 + $0x460] sm:$0xff] %v1379
                  %v1381 = vld [vmem:[%s1237 + $0x6a8] sm:$0xff]
                  %1382 = vst [vmem:[%s1238 + $0x470] sm:$0xff] %v1381
                  %v1383 = vld [vmem:[%s1237 + $0x6c0] sm:$0xff]
                  %1384 = vst [vmem:[%s1238 + $0x480] sm:$0xff] %v1383
                  %v1385 = vld [vmem:[%s1237 + $0x6d8] sm:$0xff]
                  %1386 = vst [vmem:[%s1238 + $0x490] sm:$0xff] %v1385
                  %v1387 = vld [vmem:[%s1237 + $0x6f0] sm:$0xff]
                  %1388 = vst [vmem:[%s1238 + $0x4a0] sm:$0xff] %v1387
                  %v1389 = vld [vmem:[%s1237 + $0x708] sm:$0xff]
                  %1390 = vst [vmem:[%s1238 + $0x4b0] sm:$0xff] %v1389
                  %v1391 = vld [vmem:[%s1237 + $0x720] sm:$0xff]
                  %1392 = vst [vmem:[%s1238 + $0x4c0] sm:$0xff] %v1391
                  %v1393 = vld [vmem:[%s1237 + $0x738] sm:$0xff]
                  %1394 = vst [vmem:[%s1238 + $0x4d0] sm:$0xff] %v1393
                  %v1395 = vld [vmem:[%s1237 + $0x750] sm:$0xff]
                  %1396 = vst [vmem:[%s1238 + $0x4e0] sm:$0xff] %v1395
                  %v1397 = vld [vmem:[%s1237 + $0x768] sm:$0xff]
                  %1398 = vst [vmem:[%s1238 + $0x4f0] sm:$0xff] %v1397
                  %v1399 = vld [vmem:[%s1237 + $0x780] sm:$0xff]
                  %1400 = vst [vmem:[%s1238 + $0x500] sm:$0xff] %v1399
                  %v1401 = vld [vmem:[%s1237 + $0x798] sm:$0xff]
                  %1402 = vst [vmem:[%s1238 + $0x510] sm:$0xff] %v1401
                  %v1403 = vld [vmem:[%s1237 + $0x7b0] sm:$0xff]
                  %1404 = vst [vmem:[%s1238 + $0x520] sm:$0xff] %v1403
                  %v1405 = vld [vmem:[%s1237 + $0x7c8] sm:$0xff]
                  %1406 = vst [vmem:[%s1238 + $0x530] sm:$0xff] %v1405
                  %v1407 = vld [vmem:[%s1237 + $0x7e0] sm:$0xff]
                  %1408 = vst [vmem:[%s1238 + $0x540] sm:$0xff] %v1407
                  %v1409 = vld [vmem:[%s1237 + $0x7f8] sm:$0xff]
                  %1410 = vst [vmem:[%s1238 + $0x550] sm:$0xff] %v1409
                  %v1411 = vld [vmem:[%s1237 + $0x810] sm:$0xff]
                  %1412 = vst [vmem:[%s1238 + $0x560] sm:$0xff] %v1411
                  %v1413 = vld [vmem:[%s1237 + $0x828] sm:$0xff]
                  %1414 = vst [vmem:[%s1238 + $0x570] sm:$0xff] %v1413
                  %v1415 = vld [vmem:[%s1237 + $0x840] sm:$0xff]
                  %1416 = vst [vmem:[%s1238 + $0x580] sm:$0xff] %v1415
                  %v1417 = vld [vmem:[%s1237 + $0x858] sm:$0xff]
                  %1418 = vst [vmem:[%s1238 + $0x590] sm:$0xff] %v1417
                  %v1419 = vld [vmem:[%s1237 + $0x870] sm:$0xff]
                  %1420 = vst [vmem:[%s1238 + $0x5a0] sm:$0xff] %v1419
                  %v1421 = vld [vmem:[%s1237 + $0x888] sm:$0xff]
                  %1422 = vst [vmem:[%s1238 + $0x5b0] sm:$0xff] %v1421
                  %v1423 = vld [vmem:[%s1237 + $0x8a0] sm:$0xff]
                  %1424 = vst [vmem:[%s1238 + $0x5c0] sm:$0xff] %v1423
                  %v1425 = vld [vmem:[%s1237 + $0x8b8] sm:$0xff]
                  %1426 = vst [vmem:[%s1238 + $0x5d0] sm:$0xff] %v1425
                  %v1427 = vld [vmem:[%s1237 + $0x8d0] sm:$0xff]
                  %1428 = vst [vmem:[%s1238 + $0x5e0] sm:$0xff] %v1427
                  %v1429 = vld [vmem:[%s1237 + $0x8e8] sm:$0xff]
                  %1430 = vst [vmem:[%s1238 + $0x5f0] sm:$0xff] %v1429
                  %v1431 = vld [vmem:[%s1237 + $0x900] sm:$0xff]
                  %1432 = vst [vmem:[%s1238 + $0x600] sm:$0xff] %v1431
                  %v1433 = vld [vmem:[%s1237 + $0x918] sm:$0xff]
                  %1434 = vst [vmem:[%s1238 + $0x610] sm:$0xff] %v1433
                  %v1435 = vld [vmem:[%s1237 + $0x930] sm:$0xff]
                  %1436 = vst [vmem:[%s1238 + $0x620] sm:$0xff] %v1435
                  %v1437 = vld [vmem:[%s1237 + $0x948] sm:$0xff]
                  %1438 = vst [vmem:[%s1238 + $0x630] sm:$0xff] %v1437
                  %v1439 = vld [vmem:[%s1237 + $0x960] sm:$0xff]
                  %1440 = vst [vmem:[%s1238 + $0x640] sm:$0xff] %v1439
                  %v1441 = vld [vmem:[%s1237 + $0x978] sm:$0xff]
                  %1442 = vst [vmem:[%s1238 + $0x650] sm:$0xff] %v1441
                  %v1443 = vld [vmem:[%s1237 + $0x990] sm:$0xff]
                  %1444 = vst [vmem:[%s1238 + $0x660] sm:$0xff] %v1443
                  %v1445 = vld [vmem:[%s1237 + $0x9a8] sm:$0xff]
                  %1446 = vst [vmem:[%s1238 + $0x670] sm:$0xff] %v1445
                  %v1447 = vld [vmem:[%s1237 + $0x9c0] sm:$0xff]
                  %1448 = vst [vmem:[%s1238 + $0x680] sm:$0xff] %v1447
                  %v1449 = vld [vmem:[%s1237 + $0x9d8] sm:$0xff]
                  %1450 = vst [vmem:[%s1238 + $0x690] sm:$0xff] %v1449
                  %v1451 = vld [vmem:[%s1237 + $0x9f0] sm:$0xff]
                  %1452 = vst [vmem:[%s1238 + $0x6a0] sm:$0xff] %v1451
                  %v1453 = vld [vmem:[%s1237 + $0xa08] sm:$0xff]
                  %1454 = vst [vmem:[%s1238 + $0x6b0] sm:$0xff] %v1453
                  %v1455 = vld [vmem:[%s1237 + $0xa20] sm:$0xff]
                  %1456 = vst [vmem:[%s1238 + $0x6c0] sm:$0xff] %v1455
                  %v1457 = vld [vmem:[%s1237 + $0xa38] sm:$0xff]
                  %1458 = vst [vmem:[%s1238 + $0x6d0] sm:$0xff] %v1457
                  %v1459 = vld [vmem:[%s1237 + $0xa50] sm:$0xff]
                  %1460 = vst [vmem:[%s1238 + $0x6e0] sm:$0xff] %v1459
                  %v1461 = vld [vmem:[%s1237 + $0xa68] sm:$0xff]
                  %1462 = vst [vmem:[%s1238 + $0x6f0] sm:$0xff] %v1461
                  %v1463 = vld [vmem:[%s1237 + $0xa80] sm:$0xff]
                  %1464 = vst [vmem:[%s1238 + $0x700] sm:$0xff] %v1463
                  %v1465 = vld [vmem:[%s1237 + $0xa98] sm:$0xff]
                  %1466 = vst [vmem:[%s1238 + $0x710] sm:$0xff] %v1465
                  %v1467 = vld [vmem:[%s1237 + $0xab0] sm:$0xff]
                  %1468 = vst [vmem:[%s1238 + $0x720] sm:$0xff] %v1467
                  %v1469 = vld [vmem:[%s1237 + $0xac8] sm:$0xff]
                  %1470 = vst [vmem:[%s1238 + $0x730] sm:$0xff] %v1469
                  %v1471 = vld [vmem:[%s1237 + $0xae0] sm:$0xff]
                  %1472 = vst [vmem:[%s1238 + $0x740] sm:$0xff] %v1471
                  %v1473 = vld [vmem:[%s1237 + $0xaf8] sm:$0xff]
                  %1474 = vst [vmem:[%s1238 + $0x750] sm:$0xff] %v1473
                  %v1475 = vld [vmem:[%s1237 + $0xb10] sm:$0xff]
                  %1476 = vst [vmem:[%s1238 + $0x760] sm:$0xff] %v1475
                  %v1477 = vld [vmem:[%s1237 + $0xb28] sm:$0xff]
                  %1478 = vst [vmem:[%s1238 + $0x770] sm:$0xff] %v1477
                  %v1479 = vld [vmem:[%s1237 + $0xb40] sm:$0xff]
                  %1480 = vst [vmem:[%s1238 + $0x780] sm:$0xff] %v1479
                  %v1481 = vld [vmem:[%s1237 + $0xb58] sm:$0xff]
                  %1482 = vst [vmem:[%s1238 + $0x790] sm:$0xff] %v1481
                  %v1483 = vld [vmem:[%s1237 + $0xb70] sm:$0xff]
                  %1484 = vst [vmem:[%s1238 + $0x7a0] sm:$0xff] %v1483
                  %v1485 = vld [vmem:[%s1237 + $0xb88] sm:$0xff]
                  %1486 = vst [vmem:[%s1238 + $0x7b0] sm:$0xff] %v1485
                  %v1487 = vld [vmem:[%s1237 + $0xba0] sm:$0xff]
                  %1488 = vst [vmem:[%s1238 + $0x7c0] sm:$0xff] %v1487
                  %v1489 = vld [vmem:[%s1237 + $0xbb8] sm:$0xff]
                  %1490 = vst [vmem:[%s1238 + $0x7d0] sm:$0xff] %v1489
                  %v1491 = vld [vmem:[%s1237 + $0xbd0] sm:$0xff]
                  %1492 = vst [vmem:[%s1238 + $0x7e0] sm:$0xff] %v1491
                  %v1493 = vld [vmem:[%s1237 + $0xbe8] sm:$0xff]
                  %1494 = vst [vmem:[%s1238 + $0x7f0] sm:$0xff] %v1493
                  %v1495 = vld [vmem:[%s1237 + $0xc00] sm:$0xff]
                  %1496 = vst [vmem:[%s1238 + $0x800] sm:$0xff] %v1495
                  %v1497 = vld [vmem:[%s1237 + $0xc18] sm:$0xff]
                  %1498 = vst [vmem:[%s1238 + $0x810] sm:$0xff] %v1497
                  %v1499 = vld [vmem:[%s1237 + $0xc30] sm:$0xff]
                  %1500 = vst [vmem:[%s1238 + $0x820] sm:$0xff] %v1499
                  %v1501 = vld [vmem:[%s1237 + $0xc48] sm:$0xff]
                  %1502 = vst [vmem:[%s1238 + $0x830] sm:$0xff] %v1501
                  %v1503 = vld [vmem:[%s1237 + $0xc60] sm:$0xff]
                  %1504 = vst [vmem:[%s1238 + $0x840] sm:$0xff] %v1503
                  %v1505 = vld [vmem:[%s1237 + $0xc78] sm:$0xff]
                  %1506 = vst [vmem:[%s1238 + $0x850] sm:$0xff] %v1505
                  %v1507 = vld [vmem:[%s1237 + $0xc90] sm:$0xff]
                  %1508 = vst [vmem:[%s1238 + $0x860] sm:$0xff] %v1507
                  %v1509 = vld [vmem:[%s1237 + $0xca8] sm:$0xff]
                  %1510 = vst [vmem:[%s1238 + $0x870] sm:$0xff] %v1509
                  %v1511 = vld [vmem:[%s1237 + $0xcc0] sm:$0xff]
                  %1512 = vst [vmem:[%s1238 + $0x880] sm:$0xff] %v1511
                  %v1513 = vld [vmem:[%s1237 + $0xcd8] sm:$0xff]
                  %1514 = vst [vmem:[%s1238 + $0x890] sm:$0xff] %v1513
                  %v1515 = vld [vmem:[%s1237 + $0xcf0] sm:$0xff]
                  %1516 = vst [vmem:[%s1238 + $0x8a0] sm:$0xff] %v1515
                  %v1517 = vld [vmem:[%s1237 + $0xd08] sm:$0xff]
                  %1518 = vst [vmem:[%s1238 + $0x8b0] sm:$0xff] %v1517
                  %v1519 = vld [vmem:[%s1237 + $0xd20] sm:$0xff]
                  %1520 = vst [vmem:[%s1238 + $0x8c0] sm:$0xff] %v1519
                  %v1521 = vld [vmem:[%s1237 + $0xd38] sm:$0xff]
                  %1522 = vst [vmem:[%s1238 + $0x8d0] sm:$0xff] %v1521
                  %v1523 = vld [vmem:[%s1237 + $0xd50] sm:$0xff]
                  %1524 = vst [vmem:[%s1238 + $0x8e0] sm:$0xff] %v1523
                  %v1525 = vld [vmem:[%s1237 + $0xd68] sm:$0xff]
                  %1526 = vst [vmem:[%s1238 + $0x8f0] sm:$0xff] %v1525
                  %v1527 = vld [vmem:[%s1237 + $0xd80] sm:$0xff]
                  %1528 = vst [vmem:[%s1238 + $0x900] sm:$0xff] %v1527
                  %v1529 = vld [vmem:[%s1237 + $0xd98] sm:$0xff]
                  %1530 = vst [vmem:[%s1238 + $0x910] sm:$0xff] %v1529
                  %v1531 = vld [vmem:[%s1237 + $0xdb0] sm:$0xff]
                  %1532 = vst [vmem:[%s1238 + $0x920] sm:$0xff] %v1531
                  %v1533 = vld [vmem:[%s1237 + $0xdc8] sm:$0xff]
                  %1534 = vst [vmem:[%s1238 + $0x930] sm:$0xff] %v1533
                  %v1535 = vld [vmem:[%s1237 + $0xde0] sm:$0xff]
                  %1536 = vst [vmem:[%s1238 + $0x940] sm:$0xff] %v1535
                  %v1537 = vld [vmem:[%s1237 + $0xdf8] sm:$0xff]
                  %1538 = vst [vmem:[%s1238 + $0x950] sm:$0xff] %v1537
                  %v1539 = vld [vmem:[%s1237 + $0xe10] sm:$0xff]
                  %1540 = vst [vmem:[%s1238 + $0x960] sm:$0xff] %v1539
                  %v1541 = vld [vmem:[%s1237 + $0xe28] sm:$0xff]
                  %1542 = vst [vmem:[%s1238 + $0x970] sm:$0xff] %v1541
                  %v1543 = vld [vmem:[%s1237 + $0xe40] sm:$0xff]
                  %1544 = vst [vmem:[%s1238 + $0x980] sm:$0xff] %v1543
                  %v1545 = vld [vmem:[%s1237 + $0xe58] sm:$0xff]
                  %1546 = vst [vmem:[%s1238 + $0x990] sm:$0xff] %v1545
                  %v1547 = vld [vmem:[%s1237 + $0xe70] sm:$0xff]
                  %1548 = vst [vmem:[%s1238 + $0x9a0] sm:$0xff] %v1547
                  %v1549 = vld [vmem:[%s1237 + $0xe88] sm:$0xff]
                  %1550 = vst [vmem:[%s1238 + $0x9b0] sm:$0xff] %v1549
                  %v1551 = vld [vmem:[%s1237 + $0xea0] sm:$0xff]
                  %1552 = vst [vmem:[%s1238 + $0x9c0] sm:$0xff] %v1551
                  %v1553 = vld [vmem:[%s1237 + $0xeb8] sm:$0xff]
                  %1554 = vst [vmem:[%s1238 + $0x9d0] sm:$0xff] %v1553
                  %v1555 = vld [vmem:[%s1237 + $0xed0] sm:$0xff]
                  %1556 = vst [vmem:[%s1238 + $0x9e0] sm:$0xff] %v1555
                  %v1557 = vld [vmem:[%s1237 + $0xee8] sm:$0xff]
                  %1558 = vst [vmem:[%s1238 + $0x9f0] sm:$0xff] %v1557
                  %v1559 = vld [vmem:[%s1237 + $0xf00] sm:$0xff]
                  %1560 = vst [vmem:[%s1238 + $0xa00] sm:$0xff] %v1559
                  %v1561 = vld [vmem:[%s1237 + $0xf18] sm:$0xff]
                  %1562 = vst [vmem:[%s1238 + $0xa10] sm:$0xff] %v1561
                  %v1563 = vld [vmem:[%s1237 + $0xf30] sm:$0xff]
                  %1564 = vst [vmem:[%s1238 + $0xa20] sm:$0xff] %v1563
                  %v1565 = vld [vmem:[%s1237 + $0xf48] sm:$0xff]
                  %1566 = vst [vmem:[%s1238 + $0xa30] sm:$0xff] %v1565
                  %v1567 = vld [vmem:[%s1237 + $0xf60] sm:$0xff]
                  %1568 = vst [vmem:[%s1238 + $0xa40] sm:$0xff] %v1567
                  %v1569 = vld [vmem:[%s1237 + $0xf78] sm:$0xff]
                  %1570 = vst [vmem:[%s1238 + $0xa50] sm:$0xff] %v1569
                  %v1571 = vld [vmem:[%s1237 + $0xf90] sm:$0xff]
                  %1572 = vst [vmem:[%s1238 + $0xa60] sm:$0xff] %v1571
                  %v1573 = vld [vmem:[%s1237 + $0xfa8] sm:$0xff]
                  %1574 = vst [vmem:[%s1238 + $0xa70] sm:$0xff] %v1573
                  %v1575 = vld [vmem:[%s1237 + $0xfc0] sm:$0xff]
                  %1576 = vst [vmem:[%s1238 + $0xa80] sm:$0xff] %v1575
                  %v1577 = vld [vmem:[%s1237 + $0xfd8] sm:$0xff]
                  %1578 = vst [vmem:[%s1238 + $0xa90] sm:$0xff] %v1577
                  %v1579 = vld [vmem:[%s1237 + $0xff0] sm:$0xff]
                  %1580 = vst [vmem:[%s1238 + $0xaa0] sm:$0xff] %v1579
                  %v1581 = vld [vmem:[%s1237 + $0x1008] sm:$0xff]
                  %1582 = vst [vmem:[%s1238 + $0xab0] sm:$0xff] %v1581
                  %v1583 = vld [vmem:[%s1237 + $0x1020] sm:$0xff]
                  %1584 = vst [vmem:[%s1238 + $0xac0] sm:$0xff] %v1583
                  %v1585 = vld [vmem:[%s1237 + $0x1038] sm:$0xff]
                  %1586 = vst [vmem:[%s1238 + $0xad0] sm:$0xff] %v1585
                  %v1587 = vld [vmem:[%s1237 + $0x1050] sm:$0xff]
                  %1588 = vst [vmem:[%s1238 + $0xae0] sm:$0xff] %v1587
                  %v1589 = vld [vmem:[%s1237 + $0x1068] sm:$0xff]
                  %1590 = vst [vmem:[%s1238 + $0xaf0] sm:$0xff] %v1589
                  %v1591 = vld [vmem:[%s1237 + $0x1080] sm:$0xff]
                  %1592 = vst [vmem:[%s1238 + $0xb00] sm:$0xff] %v1591
                  %v1593 = vld [vmem:[%s1237 + $0x1098] sm:$0xff]
                  %1594 = vst [vmem:[%s1238 + $0xb10] sm:$0xff] %v1593
                  %v1595 = vld [vmem:[%s1237 + $0x10b0] sm:$0xff]
                  %1596 = vst [vmem:[%s1238 + $0xb20] sm:$0xff] %v1595
                  %v1597 = vld [vmem:[%s1237 + $0x10c8] sm:$0xff]
                  %1598 = vst [vmem:[%s1238 + $0xb30] sm:$0xff] %v1597
                  %v1599 = vld [vmem:[%s1237 + $0x10e0] sm:$0xff]
                  %1600 = vst [vmem:[%s1238 + $0xb40] sm:$0xff] %v1599
                  %v1601 = vld [vmem:[%s1237 + $0x10f8] sm:$0xff]
                  %1602 = vst [vmem:[%s1238 + $0xb50] sm:$0xff] %v1601
                  %v1603 = vld [vmem:[%s1237 + $0x1110] sm:$0xff]
                  %1604 = vst [vmem:[%s1238 + $0xb60] sm:$0xff] %v1603
                  %v1605 = vld [vmem:[%s1237 + $0x1128] sm:$0xff]
                  %1606 = vst [vmem:[%s1238 + $0xb70] sm:$0xff] %v1605
                  %v1607 = vld [vmem:[%s1237 + $0x1140] sm:$0xff]
                  %1608 = vst [vmem:[%s1238 + $0xb80] sm:$0xff] %v1607
                  %v1609 = vld [vmem:[%s1237 + $0x1158] sm:$0xff]
                  %1610 = vst [vmem:[%s1238 + $0xb90] sm:$0xff] %v1609
                  %v1611 = vld [vmem:[%s1237 + $0x1170] sm:$0xff]
                  %1612 = vst [vmem:[%s1238 + $0xba0] sm:$0xff] %v1611
                  %v1613 = vld [vmem:[%s1237 + $0x1188] sm:$0xff]
                  %1614 = vst [vmem:[%s1238 + $0xbb0] sm:$0xff] %v1613
                  %v1615 = vld [vmem:[%s1237 + $0x11a0] sm:$0xff]
                  %1616 = vst [vmem:[%s1238 + $0xbc0] sm:$0xff] %v1615
                  %v1617 = vld [vmem:[%s1237 + $0x11b8] sm:$0xff]
                  %1618 = vst [vmem:[%s1238 + $0xbd0] sm:$0xff] %v1617
                  %v1619 = vld [vmem:[%s1237 + $0x11d0] sm:$0xff]
                  %1620 = vst [vmem:[%s1238 + $0xbe0] sm:$0xff] %v1619
                  %v1621 = vld [vmem:[%s1237 + $0x11e8] sm:$0xff]
                  %1622 = vst [vmem:[%s1238 + $0xbf0] sm:$0xff] %v1621
                  %v1623 = vld [vmem:[%s1237 + $0x1200] sm:$0xff]
                  %1624 = vst [vmem:[%s1238 + $0xc00] sm:$0xff] %v1623
                  %v1625 = vld [vmem:[%s1237 + $0x1218] sm:$0xff]
                  %1626 = vst [vmem:[%s1238 + $0xc10] sm:$0xff] %v1625
                  %v1627 = vld [vmem:[%s1237 + $0x1230] sm:$0xff]
                  %1628 = vst [vmem:[%s1238 + $0xc20] sm:$0xff] %v1627
                  %v1629 = vld [vmem:[%s1237 + $0x1248] sm:$0xff]
                  %1630 = vst [vmem:[%s1238 + $0xc30] sm:$0xff] %v1629
                  %v1631 = vld [vmem:[%s1237 + $0x1260] sm:$0xff]
                  %1632 = vst [vmem:[%s1238 + $0xc40] sm:$0xff] %v1631
                  %v1633 = vld [vmem:[%s1237 + $0x1278] sm:$0xff]
                  %1634 = vst [vmem:[%s1238 + $0xc50] sm:$0xff] %v1633
                  %v1635 = vld [vmem:[%s1237 + $0x1290] sm:$0xff]
                  %1636 = vst [vmem:[%s1238 + $0xc60] sm:$0xff] %v1635
                  %v1637 = vld [vmem:[%s1237 + $0x12a8] sm:$0xff]
                  %1638 = vst [vmem:[%s1238 + $0xc70] sm:$0xff] %v1637
                  %v1639 = vld [vmem:[%s1237 + $0x12c0] sm:$0xff]
                  %1640 = vst [vmem:[%s1238 + $0xc80] sm:$0xff] %v1639
                  %v1641 = vld [vmem:[%s1237 + $0x12d8] sm:$0xff]
                  %1642 = vst [vmem:[%s1238 + $0xc90] sm:$0xff] %v1641
                  %v1643 = vld [vmem:[%s1237 + $0x12f0] sm:$0xff]
                  %1644 = vst [vmem:[%s1238 + $0xca0] sm:$0xff] %v1643
                  %v1645 = vld [vmem:[%s1237 + $0x1308] sm:$0xff]
                  %1646 = vst [vmem:[%s1238 + $0xcb0] sm:$0xff] %v1645
                  %v1647 = vld [vmem:[%s1237 + $0x1320] sm:$0xff]
                  %1648 = vst [vmem:[%s1238 + $0xcc0] sm:$0xff] %v1647
                  %v1649 = vld [vmem:[%s1237 + $0x1338] sm:$0xff]
                  %1650 = vst [vmem:[%s1238 + $0xcd0] sm:$0xff] %v1649
                  %v1651 = vld [vmem:[%s1237 + $0x1350] sm:$0xff]
                  %1652 = vst [vmem:[%s1238 + $0xce0] sm:$0xff] %v1651
                  %v1653 = vld [vmem:[%s1237 + $0x1368] sm:$0xff]
                  %1654 = vst [vmem:[%s1238 + $0xcf0] sm:$0xff] %v1653
                  %v1655 = vld [vmem:[%s1237 + $0x1380] sm:$0xff]
                  %1656 = vst [vmem:[%s1238 + $0xd00] sm:$0xff] %v1655
                  %v1657 = vld [vmem:[%s1237 + $0x1398] sm:$0xff]
                  %1658 = vst [vmem:[%s1238 + $0xd10] sm:$0xff] %v1657
                  %v1659 = vld [vmem:[%s1237 + $0x13b0] sm:$0xff]
                  %1660 = vst [vmem:[%s1238 + $0xd20] sm:$0xff] %v1659
                  %v1661 = vld [vmem:[%s1237 + $0x13c8] sm:$0xff]
                  %1662 = vst [vmem:[%s1238 + $0xd30] sm:$0xff] %v1661
                  %v1663 = vld [vmem:[%s1237 + $0x13e0] sm:$0xff]
                  %1664 = vst [vmem:[%s1238 + $0xd40] sm:$0xff] %v1663
                  %v1665 = vld [vmem:[%s1237 + $0x13f8] sm:$0xff]
                  %1666 = vst [vmem:[%s1238 + $0xd50] sm:$0xff] %v1665
                  %v1667 = vld [vmem:[%s1237 + $0x1410] sm:$0xff]
                  %1668 = vst [vmem:[%s1238 + $0xd60] sm:$0xff] %v1667
                  %v1669 = vld [vmem:[%s1237 + $0x1428] sm:$0xff]
                  %1670 = vst [vmem:[%s1238 + $0xd70] sm:$0xff] %v1669
                  %v1671 = vld [vmem:[%s1237 + $0x1440] sm:$0xff]
                  %1672 = vst [vmem:[%s1238 + $0xd80] sm:$0xff] %v1671
                  %v1673 = vld [vmem:[%s1237 + $0x1458] sm:$0xff]
                  %1674 = vst [vmem:[%s1238 + $0xd90] sm:$0xff] %v1673
                  %v1675 = vld [vmem:[%s1237 + $0x1470] sm:$0xff]
                  %1676 = vst [vmem:[%s1238 + $0xda0] sm:$0xff] %v1675
                  %v1677 = vld [vmem:[%s1237 + $0x1488] sm:$0xff]
                  %1678 = vst [vmem:[%s1238 + $0xdb0] sm:$0xff] %v1677
                  %v1679 = vld [vmem:[%s1237 + $0x14a0] sm:$0xff]
                  %1680 = vst [vmem:[%s1238 + $0xdc0] sm:$0xff] %v1679
                  %v1681 = vld [vmem:[%s1237 + $0x14b8] sm:$0xff]
                  %1682 = vst [vmem:[%s1238 + $0xdd0] sm:$0xff] %v1681
                  %v1683 = vld [vmem:[%s1237 + $0x14d0] sm:$0xff]
                  %1684 = vst [vmem:[%s1238 + $0xde0] sm:$0xff] %v1683
                  %v1685 = vld [vmem:[%s1237 + $0x14e8] sm:$0xff]
                  %1686 = vst [vmem:[%s1238 + $0xdf0] sm:$0xff] %v1685
                  %v1687 = vld [vmem:[%s1237 + $0x1500] sm:$0xff]
                  %1688 = vst [vmem:[%s1238 + $0xe00] sm:$0xff] %v1687
                  %v1689 = vld [vmem:[%s1237 + $0x1518] sm:$0xff]
                  %1690 = vst [vmem:[%s1238 + $0xe10] sm:$0xff] %v1689
                  %v1691 = vld [vmem:[%s1237 + $0x1530] sm:$0xff]
                  %1692 = vst [vmem:[%s1238 + $0xe20] sm:$0xff] %v1691
                  %v1693 = vld [vmem:[%s1237 + $0x1548] sm:$0xff]
                  %1694 = vst [vmem:[%s1238 + $0xe30] sm:$0xff] %v1693
                  %v1695 = vld [vmem:[%s1237 + $0x1560] sm:$0xff]
                  %1696 = vst [vmem:[%s1238 + $0xe40] sm:$0xff] %v1695
                  %v1697 = vld [vmem:[%s1237 + $0x1578] sm:$0xff]
                  %1698 = vst [vmem:[%s1238 + $0xe50] sm:$0xff] %v1697
                  %v1699 = vld [vmem:[%s1237 + $0x1590] sm:$0xff]
                  %1700 = vst [vmem:[%s1238 + $0xe60] sm:$0xff] %v1699
                  %v1701 = vld [vmem:[%s1237 + $0x15a8] sm:$0xff]
                  %1702 = vst [vmem:[%s1238 + $0xe70] sm:$0xff] %v1701
                  %v1703 = vld [vmem:[%s1237 + $0x15c0] sm:$0xff]
                  %1704 = vst [vmem:[%s1238 + $0xe80] sm:$0xff] %v1703
                  %v1705 = vld [vmem:[%s1237 + $0x15d8] sm:$0xff]
                  %1706 = vst [vmem:[%s1238 + $0xe90] sm:$0xff] %v1705
                  %v1707 = vld [vmem:[%s1237 + $0x15f0] sm:$0xff]
                  %1708 = vst [vmem:[%s1238 + $0xea0] sm:$0xff] %v1707
                  %v1709 = vld [vmem:[%s1237 + $0x1608] sm:$0xff]
                  %1710 = vst [vmem:[%s1238 + $0xeb0] sm:$0xff] %v1709
                  %v1711 = vld [vmem:[%s1237 + $0x1620] sm:$0xff]
                  %1712 = vst [vmem:[%s1238 + $0xec0] sm:$0xff] %v1711
                  %v1713 = vld [vmem:[%s1237 + $0x1638] sm:$0xff]
                  %1714 = vst [vmem:[%s1238 + $0xed0] sm:$0xff] %v1713
                  %v1715 = vld [vmem:[%s1237 + $0x1650] sm:$0xff]
                  %1716 = vst [vmem:[%s1238 + $0xee0] sm:$0xff] %v1715
                  %v1717 = vld [vmem:[%s1237 + $0x1668] sm:$0xff]
                  %1718 = vst [vmem:[%s1238 + $0xef0] sm:$0xff] %v1717
                  %v1719 = vld [vmem:[%s1237 + $0x1680] sm:$0xff]
                  %1720 = vst [vmem:[%s1238 + $0xf00] sm:$0xff] %v1719
                  %v1721 = vld [vmem:[%s1237 + $0x1698] sm:$0xff]
                  %1722 = vst [vmem:[%s1238 + $0xf10] sm:$0xff] %v1721
                  %v1723 = vld [vmem:[%s1237 + $0x16b0] sm:$0xff]
                  %1724 = vst [vmem:[%s1238 + $0xf20] sm:$0xff] %v1723
                  %v1725 = vld [vmem:[%s1237 + $0x16c8] sm:$0xff]
                  %1726 = vst [vmem:[%s1238 + $0xf30] sm:$0xff] %v1725
                  %v1727 = vld [vmem:[%s1237 + $0x16e0] sm:$0xff]
                  %1728 = vst [vmem:[%s1238 + $0xf40] sm:$0xff] %v1727
                  %v1729 = vld [vmem:[%s1237 + $0x16f8] sm:$0xff]
                  %1730 = vst [vmem:[%s1238 + $0xf50] sm:$0xff] %v1729
                  %v1731 = vld [vmem:[%s1237 + $0x1710] sm:$0xff]
                  %1732 = vst [vmem:[%s1238 + $0xf60] sm:$0xff] %v1731
                  %v1733 = vld [vmem:[%s1237 + $0x1728] sm:$0xff]
                  %1734 = vst [vmem:[%s1238 + $0xf70] sm:$0xff] %v1733
                  %v1735 = vld [vmem:[%s1237 + $0x1740] sm:$0xff]
                  %1736 = vst [vmem:[%s1238 + $0xf80] sm:$0xff] %v1735
                  %v1737 = vld [vmem:[%s1237 + $0x1758] sm:$0xff]
                  %1738 = vst [vmem:[%s1238 + $0xf90] sm:$0xff] %v1737
                  %v1739 = vld [vmem:[%s1237 + $0x1770] sm:$0xff]
                  %1740 = vst [vmem:[%s1238 + $0xfa0] sm:$0xff] %v1739
                  %v1741 = vld [vmem:[%s1237 + $0x1788] sm:$0xff]
                  %1742 = vst [vmem:[%s1238 + $0xfb0] sm:$0xff] %v1741
                  %v1743 = vld [vmem:[%s1237 + $0x17a0] sm:$0xff]
                  %1744 = vst [vmem:[%s1238 + $0xfc0] sm:$0xff] %v1743
                  %v1745 = vld [vmem:[%s1237 + $0x17b8] sm:$0xff]
                  %1746 = vst [vmem:[%s1238 + $0xfd0] sm:$0xff] %v1745
                  %v1747 = vld [vmem:[%s1237 + $0x17d0] sm:$0xff]
                  %1748 = vst [vmem:[%s1238 + $0xfe0] sm:$0xff] %v1747
                  %v1749 = vld [vmem:[%s1237 + $0x17e8] sm:$0xff]
                  %1750 = vst [vmem:[%s1238 + $0xff0] sm:$0xff] %v1749
                  %v1751 = vld [vmem:[%s1237 + $0x1800] sm:$0xff]
                  %1752 = vst [vmem:[%s1238 + $0x1000] sm:$0xff] %v1751
                  %v1753 = vld [vmem:[%s1237 + $0x1818] sm:$0xff]
                  %1754 = vst [vmem:[%s1238 + $0x1010] sm:$0xff] %v1753
                  %s1755 = sadd.s32 1, %s1236
                  %p1756 = scmp.ge.s32.totalorder %s1755, %s1229
                  %s1757 = scalar_select %p1756, 0, %s1755
                  %s1758 = smul.u32 %s1757, 8
                  %s1759 = smul.u32 %s1757, 8
                  %s1760 = scalar_lea.vmem %s145, %s1758
                  %s1761 = scalar_lea.vmem %s137, %s1759 [#allocation2]
                $region67: #{tpu_custom_call.1} parent=61 // loop_footer
                  %s1233 = sadd.s32 %s1231, 1
                $region68: #{tpu_custom_call.1} parent=61 // loop_footer_branch
                  %1230 = sbr.rel target = $region64
                $region69: #{tpu_custom_call.1} parent=61 // loop_exit
                  _
                %s1762 = sshll.u32 1, %s1224
                %s1763 = ssub.s32 %s1762, 1
                loop: start=0, step=1, limit=1
                $region70: #{tpu_custom_call.1} parent=61 // loop_pre_header
                  _
                $region71: #{tpu_custom_call.1} parent=61 // loop_header
                  %s1765 = sphi 0, %s1769
                  %p1766 = scmp.ge.s32.totalorder %s1765, 1
                  %s1770 = sphi %s1226, %s1226
                  %s1771 = sphi %s1228, %s1228
                $region72: #{tpu_custom_call.1} parent=61 // loop_header_branch
                  %1768 = sbr.rel (%p1766) target = $region76
                $region73: #{tpu_custom_call.1} parent=61 // loop_body
                  %v1772 = vld [vmem:[%s1770] sm:%s1763]
                  %1773 = vst [vmem:[%s1771] sm:%s1763] %v1772
                  %v1774 = vld [vmem:[%s1770 + $0x18] sm:%s1763]
                  %1775 = vst [vmem:[%s1771 + $0x10] sm:%s1763] %v1774
                  %v1776 = vld [vmem:[%s1770 + $0x30] sm:%s1763]
                  %1777 = vst [vmem:[%s1771 + $0x20] sm:%s1763] %v1776
                  %v1778 = vld [vmem:[%s1770 + $0x48] sm:%s1763]
                  %1779 = vst [vmem:[%s1771 + $0x30] sm:%s1763] %v1778
                  %v1780 = vld [vmem:[%s1770 + $0x60] sm:%s1763]
                  %1781 = vst [vmem:[%s1771 + $0x40] sm:%s1763] %v1780
                  %v1782 = vld [vmem:[%s1770 + $0x78] sm:%s1763]
                  %1783 = vst [vmem:[%s1771 + $0x50] sm:%s1763] %v1782
                  %v1784 = vld [vmem:[%s1770 + $0x90] sm:%s1763]
                  %1785 = vst [vmem:[%s1771 + $0x60] sm:%s1763] %v1784
                  %v1786 = vld [vmem:[%s1770 + $0xa8] sm:%s1763]
                  %1787 = vst [vmem:[%s1771 + $0x70] sm:%s1763] %v1786
                  %v1788 = vld [vmem:[%s1770 + $0xc0] sm:%s1763]
                  %1789 = vst [vmem:[%s1771 + $0x80] sm:%s1763] %v1788
                  %v1790 = vld [vmem:[%s1770 + $0xd8] sm:%s1763]
                  %1791 = vst [vmem:[%s1771 + $0x90] sm:%s1763] %v1790
                  %v1792 = vld [vmem:[%s1770 + $0xf0] sm:%s1763]
                  %1793 = vst [vmem:[%s1771 + $0xa0] sm:%s1763] %v1792
                  %v1794 = vld [vmem:[%s1770 + $0x108] sm:%s1763]
                  %1795 = vst [vmem:[%s1771 + $0xb0] sm:%s1763] %v1794
                  %v1796 = vld [vmem:[%s1770 + $0x120] sm:%s1763]
                  %1797 = vst [vmem:[%s1771 + $0xc0] sm:%s1763] %v1796
                  %v1798 = vld [vmem:[%s1770 + $0x138] sm:%s1763]
                  %1799 = vst [vmem:[%s1771 + $0xd0] sm:%s1763] %v1798
                  %v1800 = vld [vmem:[%s1770 + $0x150] sm:%s1763]
                  %1801 = vst [vmem:[%s1771 + $0xe0] sm:%s1763] %v1800
                  %v1802 = vld [vmem:[%s1770 + $0x168] sm:%s1763]
                  %1803 = vst [vmem:[%s1771 + $0xf0] sm:%s1763] %v1802
                  %v1804 = vld [vmem:[%s1770 + $0x180] sm:%s1763]
                  %1805 = vst [vmem:[%s1771 + $0x100] sm:%s1763] %v1804
                  %v1806 = vld [vmem:[%s1770 + $0x198] sm:%s1763]
                  %1807 = vst [vmem:[%s1771 + $0x110] sm:%s1763] %v1806
                  %v1808 = vld [vmem:[%s1770 + $0x1b0] sm:%s1763]
                  %1809 = vst [vmem:[%s1771 + $0x120] sm:%s1763] %v1808
                  %v1810 = vld [vmem:[%s1770 + $0x1c8] sm:%s1763]
                  %1811 = vst [vmem:[%s1771 + $0x130] sm:%s1763] %v1810
                  %v1812 = vld [vmem:[%s1770 + $0x1e0] sm:%s1763]
                  %1813 = vst [vmem:[%s1771 + $0x140] sm:%s1763] %v1812
                  %v1814 = vld [vmem:[%s1770 + $0x1f8] sm:%s1763]
                  %1815 = vst [vmem:[%s1771 + $0x150] sm:%s1763] %v1814
                  %v1816 = vld [vmem:[%s1770 + $0x210] sm:%s1763]
                  %1817 = vst [vmem:[%s1771 + $0x160] sm:%s1763] %v1816
                  %v1818 = vld [vmem:[%s1770 + $0x228] sm:%s1763]
                  %1819 = vst [vmem:[%s1771 + $0x170] sm:%s1763] %v1818
                  %v1820 = vld [vmem:[%s1770 + $0x240] sm:%s1763]
                  %1821 = vst [vmem:[%s1771 + $0x180] sm:%s1763] %v1820
                  %v1822 = vld [vmem:[%s1770 + $0x258] sm:%s1763]
                  %1823 = vst [vmem:[%s1771 + $0x190] sm:%s1763] %v1822
                  %v1824 = vld [vmem:[%s1770 + $0x270] sm:%s1763]
                  %1825 = vst [vmem:[%s1771 + $0x1a0] sm:%s1763] %v1824
                  %v1826 = vld [vmem:[%s1770 + $0x288] sm:%s1763]
                  %1827 = vst [vmem:[%s1771 + $0x1b0] sm:%s1763] %v1826
                  %v1828 = vld [vmem:[%s1770 + $0x2a0] sm:%s1763]
                  %1829 = vst [vmem:[%s1771 + $0x1c0] sm:%s1763] %v1828
                  %v1830 = vld [vmem:[%s1770 + $0x2b8] sm:%s1763]
                  %1831 = vst [vmem:[%s1771 + $0x1d0] sm:%s1763] %v1830
                  %v1832 = vld [vmem:[%s1770 + $0x2d0] sm:%s1763]
                  %1833 = vst [vmem:[%s1771 + $0x1e0] sm:%s1763] %v1832
                  %v1834 = vld [vmem:[%s1770 + $0x2e8] sm:%s1763]
                  %1835 = vst [vmem:[%s1771 + $0x1f0] sm:%s1763] %v1834
                  %v1836 = vld [vmem:[%s1770 + $0x300] sm:%s1763]
                  %1837 = vst [vmem:[%s1771 + $0x200] sm:%s1763] %v1836
                  %v1838 = vld [vmem:[%s1770 + $0x318] sm:%s1763]
                  %1839 = vst [vmem:[%s1771 + $0x210] sm:%s1763] %v1838
                  %v1840 = vld [vmem:[%s1770 + $0x330] sm:%s1763]
                  %1841 = vst [vmem:[%s1771 + $0x220] sm:%s1763] %v1840
                  %v1842 = vld [vmem:[%s1770 + $0x348] sm:%s1763]
                  %1843 = vst [vmem:[%s1771 + $0x230] sm:%s1763] %v1842
                  %v1844 = vld [vmem:[%s1770 + $0x360] sm:%s1763]
                  %1845 = vst [vmem:[%s1771 + $0x240] sm:%s1763] %v1844
                  %v1846 = vld [vmem:[%s1770 + $0x378] sm:%s1763]
                  %1847 = vst [vmem:[%s1771 + $0x250] sm:%s1763] %v1846
                  %v1848 = vld [vmem:[%s1770 + $0x390] sm:%s1763]
                  %1849 = vst [vmem:[%s1771 + $0x260] sm:%s1763] %v1848
                  %v1850 = vld [vmem:[%s1770 + $0x3a8] sm:%s1763]
                  %1851 = vst [vmem:[%s1771 + $0x270] sm:%s1763] %v1850
                  %v1852 = vld [vmem:[%s1770 + $0x3c0] sm:%s1763]
                  %1853 = vst [vmem:[%s1771 + $0x280] sm:%s1763] %v1852
                  %v1854 = vld [vmem:[%s1770 + $0x3d8] sm:%s1763]
                  %1855 = vst [vmem:[%s1771 + $0x290] sm:%s1763] %v1854
                  %v1856 = vld [vmem:[%s1770 + $0x3f0] sm:%s1763]
                  %1857 = vst [vmem:[%s1771 + $0x2a0] sm:%s1763] %v1856
                  %v1858 = vld [vmem:[%s1770 + $0x408] sm:%s1763]
                  %1859 = vst [vmem:[%s1771 + $0x2b0] sm:%s1763] %v1858
                  %v1860 = vld [vmem:[%s1770 + $0x420] sm:%s1763]
                  %1861 = vst [vmem:[%s1771 + $0x2c0] sm:%s1763] %v1860
                  %v1862 = vld [vmem:[%s1770 + $0x438] sm:%s1763]
                  %1863 = vst [vmem:[%s1771 + $0x2d0] sm:%s1763] %v1862
                  %v1864 = vld [vmem:[%s1770 + $0x450] sm:%s1763]
                  %1865 = vst [vmem:[%s1771 + $0x2e0] sm:%s1763] %v1864
                  %v1866 = vld [vmem:[%s1770 + $0x468] sm:%s1763]
                  %1867 = vst [vmem:[%s1771 + $0x2f0] sm:%s1763] %v1866
                  %v1868 = vld [vmem:[%s1770 + $0x480] sm:%s1763]
                  %1869 = vst [vmem:[%s1771 + $0x300] sm:%s1763] %v1868
                  %v1870 = vld [vmem:[%s1770 + $0x498] sm:%s1763]
                  %1871 = vst [vmem:[%s1771 + $0x310] sm:%s1763] %v1870
                  %v1872 = vld [vmem:[%s1770 + $0x4b0] sm:%s1763]
                  %1873 = vst [vmem:[%s1771 + $0x320] sm:%s1763] %v1872
                  %v1874 = vld [vmem:[%s1770 + $0x4c8] sm:%s1763]
                  %1875 = vst [vmem:[%s1771 + $0x330] sm:%s1763] %v1874
                  %v1876 = vld [vmem:[%s1770 + $0x4e0] sm:%s1763]
                  %1877 = vst [vmem:[%s1771 + $0x340] sm:%s1763] %v1876
                  %v1878 = vld [vmem:[%s1770 + $0x4f8] sm:%s1763]
                  %1879 = vst [vmem:[%s1771 + $0x350] sm:%s1763] %v1878
                  %v1880 = vld [vmem:[%s1770 + $0x510] sm:%s1763]
                  %1881 = vst [vmem:[%s1771 + $0x360] sm:%s1763] %v1880
                  %v1882 = vld [vmem:[%s1770 + $0x528] sm:%s1763]
                  %1883 = vst [vmem:[%s1771 + $0x370] sm:%s1763] %v1882
                  %v1884 = vld [vmem:[%s1770 + $0x540] sm:%s1763]
                  %1885 = vst [vmem:[%s1771 + $0x380] sm:%s1763] %v1884
                  %v1886 = vld [vmem:[%s1770 + $0x558] sm:%s1763]
                  %1887 = vst [vmem:[%s1771 + $0x390] sm:%s1763] %v1886
                  %v1888 = vld [vmem:[%s1770 + $0x570] sm:%s1763]
                  %1889 = vst [vmem:[%s1771 + $0x3a0] sm:%s1763] %v1888
                  %v1890 = vld [vmem:[%s1770 + $0x588] sm:%s1763]
                  %1891 = vst [vmem:[%s1771 + $0x3b0] sm:%s1763] %v1890
                  %v1892 = vld [vmem:[%s1770 + $0x5a0] sm:%s1763]
                  %1893 = vst [vmem:[%s1771 + $0x3c0] sm:%s1763] %v1892
                  %v1894 = vld [vmem:[%s1770 + $0x5b8] sm:%s1763]
                  %1895 = vst [vmem:[%s1771 + $0x3d0] sm:%s1763] %v1894
                  %v1896 = vld [vmem:[%s1770 + $0x5d0] sm:%s1763]
                  %1897 = vst [vmem:[%s1771 + $0x3e0] sm:%s1763] %v1896
                  %v1898 = vld [vmem:[%s1770 + $0x5e8] sm:%s1763]
                  %1899 = vst [vmem:[%s1771 + $0x3f0] sm:%s1763] %v1898
                  %v1900 = vld [vmem:[%s1770 + $0x600] sm:%s1763]
                  %1901 = vst [vmem:[%s1771 + $0x400] sm:%s1763] %v1900
                  %v1902 = vld [vmem:[%s1770 + $0x618] sm:%s1763]
                  %1903 = vst [vmem:[%s1771 + $0x410] sm:%s1763] %v1902
                  %v1904 = vld [vmem:[%s1770 + $0x630] sm:%s1763]
                  %1905 = vst [vmem:[%s1771 + $0x420] sm:%s1763] %v1904
                  %v1906 = vld [vmem:[%s1770 + $0x648] sm:%s1763]
                  %1907 = vst [vmem:[%s1771 + $0x430] sm:%s1763] %v1906
                  %v1908 = vld [vmem:[%s1770 + $0x660] sm:%s1763]
                  %1909 = vst [vmem:[%s1771 + $0x440] sm:%s1763] %v1908
                  %v1910 = vld [vmem:[%s1770 + $0x678] sm:%s1763]
                  %1911 = vst [vmem:[%s1771 + $0x450] sm:%s1763] %v1910
                  %v1912 = vld [vmem:[%s1770 + $0x690] sm:%s1763]
                  %1913 = vst [vmem:[%s1771 + $0x460] sm:%s1763] %v1912
                  %v1914 = vld [vmem:[%s1770 + $0x6a8] sm:%s1763]
                  %1915 = vst [vmem:[%s1771 + $0x470] sm:%s1763] %v1914
                  %v1916 = vld [vmem:[%s1770 + $0x6c0] sm:%s1763]
                  %1917 = vst [vmem:[%s1771 + $0x480] sm:%s1763] %v1916
                  %v1918 = vld [vmem:[%s1770 + $0x6d8] sm:%s1763]
                  %1919 = vst [vmem:[%s1771 + $0x490] sm:%s1763] %v1918
                  %v1920 = vld [vmem:[%s1770 + $0x6f0] sm:%s1763]
                  %1921 = vst [vmem:[%s1771 + $0x4a0] sm:%s1763] %v1920
                  %v1922 = vld [vmem:[%s1770 + $0x708] sm:%s1763]
                  %1923 = vst [vmem:[%s1771 + $0x4b0] sm:%s1763] %v1922
                  %v1924 = vld [vmem:[%s1770 + $0x720] sm:%s1763]
                  %1925 = vst [vmem:[%s1771 + $0x4c0] sm:%s1763] %v1924
                  %v1926 = vld [vmem:[%s1770 + $0x738] sm:%s1763]
                  %1927 = vst [vmem:[%s1771 + $0x4d0] sm:%s1763] %v1926
                  %v1928 = vld [vmem:[%s1770 + $0x750] sm:%s1763]
                  %1929 = vst [vmem:[%s1771 + $0x4e0] sm:%s1763] %v1928
                  %v1930 = vld [vmem:[%s1770 + $0x768] sm:%s1763]
                  %1931 = vst [vmem:[%s1771 + $0x4f0] sm:%s1763] %v1930
                  %v1932 = vld [vmem:[%s1770 + $0x780] sm:%s1763]
                  %1933 = vst [vmem:[%s1771 + $0x500] sm:%s1763] %v1932
                  %v1934 = vld [vmem:[%s1770 + $0x798] sm:%s1763]
                  %1935 = vst [vmem:[%s1771 + $0x510] sm:%s1763] %v1934
                  %v1936 = vld [vmem:[%s1770 + $0x7b0] sm:%s1763]
                  %1937 = vst [vmem:[%s1771 + $0x520] sm:%s1763] %v1936
                  %v1938 = vld [vmem:[%s1770 + $0x7c8] sm:%s1763]
                  %1939 = vst [vmem:[%s1771 + $0x530] sm:%s1763] %v1938
                  %v1940 = vld [vmem:[%s1770 + $0x7e0] sm:%s1763]
                  %1941 = vst [vmem:[%s1771 + $0x540] sm:%s1763] %v1940
                  %v1942 = vld [vmem:[%s1770 + $0x7f8] sm:%s1763]
                  %1943 = vst [vmem:[%s1771 + $0x550] sm:%s1763] %v1942
                  %v1944 = vld [vmem:[%s1770 + $0x810] sm:%s1763]
                  %1945 = vst [vmem:[%s1771 + $0x560] sm:%s1763] %v1944
                  %v1946 = vld [vmem:[%s1770 + $0x828] sm:%s1763]
                  %1947 = vst [vmem:[%s1771 + $0x570] sm:%s1763] %v1946
                  %v1948 = vld [vmem:[%s1770 + $0x840] sm:%s1763]
                  %1949 = vst [vmem:[%s1771 + $0x580] sm:%s1763] %v1948
                  %v1950 = vld [vmem:[%s1770 + $0x858] sm:%s1763]
                  %1951 = vst [vmem:[%s1771 + $0x590] sm:%s1763] %v1950
                  %v1952 = vld [vmem:[%s1770 + $0x870] sm:%s1763]
                  %1953 = vst [vmem:[%s1771 + $0x5a0] sm:%s1763] %v1952
                  %v1954 = vld [vmem:[%s1770 + $0x888] sm:%s1763]
                  %1955 = vst [vmem:[%s1771 + $0x5b0] sm:%s1763] %v1954
                  %v1956 = vld [vmem:[%s1770 + $0x8a0] sm:%s1763]
                  %1957 = vst [vmem:[%s1771 + $0x5c0] sm:%s1763] %v1956
                  %v1958 = vld [vmem:[%s1770 + $0x8b8] sm:%s1763]
                  %1959 = vst [vmem:[%s1771 + $0x5d0] sm:%s1763] %v1958
                  %v1960 = vld [vmem:[%s1770 + $0x8d0] sm:%s1763]
                  %1961 = vst [vmem:[%s1771 + $0x5e0] sm:%s1763] %v1960
                  %v1962 = vld [vmem:[%s1770 + $0x8e8] sm:%s1763]
                  %1963 = vst [vmem:[%s1771 + $0x5f0] sm:%s1763] %v1962
                  %v1964 = vld [vmem:[%s1770 + $0x900] sm:%s1763]
                  %1965 = vst [vmem:[%s1771 + $0x600] sm:%s1763] %v1964
                  %v1966 = vld [vmem:[%s1770 + $0x918] sm:%s1763]
                  %1967 = vst [vmem:[%s1771 + $0x610] sm:%s1763] %v1966
                  %v1968 = vld [vmem:[%s1770 + $0x930] sm:%s1763]
                  %1969 = vst [vmem:[%s1771 + $0x620] sm:%s1763] %v1968
                  %v1970 = vld [vmem:[%s1770 + $0x948] sm:%s1763]
                  %1971 = vst [vmem:[%s1771 + $0x630] sm:%s1763] %v1970
                  %v1972 = vld [vmem:[%s1770 + $0x960] sm:%s1763]
                  %1973 = vst [vmem:[%s1771 + $0x640] sm:%s1763] %v1972
                  %v1974 = vld [vmem:[%s1770 + $0x978] sm:%s1763]
                  %1975 = vst [vmem:[%s1771 + $0x650] sm:%s1763] %v1974
                  %v1976 = vld [vmem:[%s1770 + $0x990] sm:%s1763]
                  %1977 = vst [vmem:[%s1771 + $0x660] sm:%s1763] %v1976
                  %v1978 = vld [vmem:[%s1770 + $0x9a8] sm:%s1763]
                  %1979 = vst [vmem:[%s1771 + $0x670] sm:%s1763] %v1978
                  %v1980 = vld [vmem:[%s1770 + $0x9c0] sm:%s1763]
                  %1981 = vst [vmem:[%s1771 + $0x680] sm:%s1763] %v1980
                  %v1982 = vld [vmem:[%s1770 + $0x9d8] sm:%s1763]
                  %1983 = vst [vmem:[%s1771 + $0x690] sm:%s1763] %v1982
                  %v1984 = vld [vmem:[%s1770 + $0x9f0] sm:%s1763]
                  %1985 = vst [vmem:[%s1771 + $0x6a0] sm:%s1763] %v1984
                  %v1986 = vld [vmem:[%s1770 + $0xa08] sm:%s1763]
                  %1987 = vst [vmem:[%s1771 + $0x6b0] sm:%s1763] %v1986
                  %v1988 = vld [vmem:[%s1770 + $0xa20] sm:%s1763]
                  %1989 = vst [vmem:[%s1771 + $0x6c0] sm:%s1763] %v1988
                  %v1990 = vld [vmem:[%s1770 + $0xa38] sm:%s1763]
                  %1991 = vst [vmem:[%s1771 + $0x6d0] sm:%s1763] %v1990
                  %v1992 = vld [vmem:[%s1770 + $0xa50] sm:%s1763]
                  %1993 = vst [vmem:[%s1771 + $0x6e0] sm:%s1763] %v1992
                  %v1994 = vld [vmem:[%s1770 + $0xa68] sm:%s1763]
                  %1995 = vst [vmem:[%s1771 + $0x6f0] sm:%s1763] %v1994
                  %v1996 = vld [vmem:[%s1770 + $0xa80] sm:%s1763]
                  %1997 = vst [vmem:[%s1771 + $0x700] sm:%s1763] %v1996
                  %v1998 = vld [vmem:[%s1770 + $0xa98] sm:%s1763]
                  %1999 = vst [vmem:[%s1771 + $0x710] sm:%s1763] %v1998
                  %v2000 = vld [vmem:[%s1770 + $0xab0] sm:%s1763]
                  %2001 = vst [vmem:[%s1771 + $0x720] sm:%s1763] %v2000
                  %v2002 = vld [vmem:[%s1770 + $0xac8] sm:%s1763]
                  %2003 = vst [vmem:[%s1771 + $0x730] sm:%s1763] %v2002
                  %v2004 = vld [vmem:[%s1770 + $0xae0] sm:%s1763]
                  %2005 = vst [vmem:[%s1771 + $0x740] sm:%s1763] %v2004
                  %v2006 = vld [vmem:[%s1770 + $0xaf8] sm:%s1763]
                  %2007 = vst [vmem:[%s1771 + $0x750] sm:%s1763] %v2006
                  %v2008 = vld [vmem:[%s1770 + $0xb10] sm:%s1763]
                  %2009 = vst [vmem:[%s1771 + $0x760] sm:%s1763] %v2008
                  %v2010 = vld [vmem:[%s1770 + $0xb28] sm:%s1763]
                  %2011 = vst [vmem:[%s1771 + $0x770] sm:%s1763] %v2010
                  %v2012 = vld [vmem:[%s1770 + $0xb40] sm:%s1763]
                  %2013 = vst [vmem:[%s1771 + $0x780] sm:%s1763] %v2012
                  %v2014 = vld [vmem:[%s1770 + $0xb58] sm:%s1763]
                  %2015 = vst [vmem:[%s1771 + $0x790] sm:%s1763] %v2014
                  %v2016 = vld [vmem:[%s1770 + $0xb70] sm:%s1763]
                  %2017 = vst [vmem:[%s1771 + $0x7a0] sm:%s1763] %v2016
                  %v2018 = vld [vmem:[%s1770 + $0xb88] sm:%s1763]
                  %2019 = vst [vmem:[%s1771 + $0x7b0] sm:%s1763] %v2018
                  %v2020 = vld [vmem:[%s1770 + $0xba0] sm:%s1763]
                  %2021 = vst [vmem:[%s1771 + $0x7c0] sm:%s1763] %v2020
                  %v2022 = vld [vmem:[%s1770 + $0xbb8] sm:%s1763]
                  %2023 = vst [vmem:[%s1771 + $0x7d0] sm:%s1763] %v2022
                  %v2024 = vld [vmem:[%s1770 + $0xbd0] sm:%s1763]
                  %2025 = vst [vmem:[%s1771 + $0x7e0] sm:%s1763] %v2024
                  %v2026 = vld [vmem:[%s1770 + $0xbe8] sm:%s1763]
                  %2027 = vst [vmem:[%s1771 + $0x7f0] sm:%s1763] %v2026
                  %v2028 = vld [vmem:[%s1770 + $0xc00] sm:%s1763]
                  %2029 = vst [vmem:[%s1771 + $0x800] sm:%s1763] %v2028
                  %v2030 = vld [vmem:[%s1770 + $0xc18] sm:%s1763]
                  %2031 = vst [vmem:[%s1771 + $0x810] sm:%s1763] %v2030
                  %v2032 = vld [vmem:[%s1770 + $0xc30] sm:%s1763]
                  %2033 = vst [vmem:[%s1771 + $0x820] sm:%s1763] %v2032
                  %v2034 = vld [vmem:[%s1770 + $0xc48] sm:%s1763]
                  %2035 = vst [vmem:[%s1771 + $0x830] sm:%s1763] %v2034
                  %v2036 = vld [vmem:[%s1770 + $0xc60] sm:%s1763]
                  %2037 = vst [vmem:[%s1771 + $0x840] sm:%s1763] %v2036
                  %v2038 = vld [vmem:[%s1770 + $0xc78] sm:%s1763]
                  %2039 = vst [vmem:[%s1771 + $0x850] sm:%s1763] %v2038
                  %v2040 = vld [vmem:[%s1770 + $0xc90] sm:%s1763]
                  %2041 = vst [vmem:[%s1771 + $0x860] sm:%s1763] %v2040
                  %v2042 = vld [vmem:[%s1770 + $0xca8] sm:%s1763]
                  %2043 = vst [vmem:[%s1771 + $0x870] sm:%s1763] %v2042
                  %v2044 = vld [vmem:[%s1770 + $0xcc0] sm:%s1763]
                  %2045 = vst [vmem:[%s1771 + $0x880] sm:%s1763] %v2044
                  %v2046 = vld [vmem:[%s1770 + $0xcd8] sm:%s1763]
                  %2047 = vst [vmem:[%s1771 + $0x890] sm:%s1763] %v2046
                  %v2048 = vld [vmem:[%s1770 + $0xcf0] sm:%s1763]
                  %2049 = vst [vmem:[%s1771 + $0x8a0] sm:%s1763] %v2048
                  %v2050 = vld [vmem:[%s1770 + $0xd08] sm:%s1763]
                  %2051 = vst [vmem:[%s1771 + $0x8b0] sm:%s1763] %v2050
                  %v2052 = vld [vmem:[%s1770 + $0xd20] sm:%s1763]
                  %2053 = vst [vmem:[%s1771 + $0x8c0] sm:%s1763] %v2052
                  %v2054 = vld [vmem:[%s1770 + $0xd38] sm:%s1763]
                  %2055 = vst [vmem:[%s1771 + $0x8d0] sm:%s1763] %v2054
                  %v2056 = vld [vmem:[%s1770 + $0xd50] sm:%s1763]
                  %2057 = vst [vmem:[%s1771 + $0x8e0] sm:%s1763] %v2056
                  %v2058 = vld [vmem:[%s1770 + $0xd68] sm:%s1763]
                  %2059 = vst [vmem:[%s1771 + $0x8f0] sm:%s1763] %v2058
                  %v2060 = vld [vmem:[%s1770 + $0xd80] sm:%s1763]
                  %2061 = vst [vmem:[%s1771 + $0x900] sm:%s1763] %v2060
                  %v2062 = vld [vmem:[%s1770 + $0xd98] sm:%s1763]
                  %2063 = vst [vmem:[%s1771 + $0x910] sm:%s1763] %v2062
                  %v2064 = vld [vmem:[%s1770 + $0xdb0] sm:%s1763]
                  %2065 = vst [vmem:[%s1771 + $0x920] sm:%s1763] %v2064
                  %v2066 = vld [vmem:[%s1770 + $0xdc8] sm:%s1763]
                  %2067 = vst [vmem:[%s1771 + $0x930] sm:%s1763] %v2066
                  %v2068 = vld [vmem:[%s1770 + $0xde0] sm:%s1763]
                  %2069 = vst [vmem:[%s1771 + $0x940] sm:%s1763] %v2068
                  %v2070 = vld [vmem:[%s1770 + $0xdf8] sm:%s1763]
                  %2071 = vst [vmem:[%s1771 + $0x950] sm:%s1763] %v2070
                  %v2072 = vld [vmem:[%s1770 + $0xe10] sm:%s1763]
                  %2073 = vst [vmem:[%s1771 + $0x960] sm:%s1763] %v2072
                  %v2074 = vld [vmem:[%s1770 + $0xe28] sm:%s1763]
                  %2075 = vst [vmem:[%s1771 + $0x970] sm:%s1763] %v2074
                  %v2076 = vld [vmem:[%s1770 + $0xe40] sm:%s1763]
                  %2077 = vst [vmem:[%s1771 + $0x980] sm:%s1763] %v2076
                  %v2078 = vld [vmem:[%s1770 + $0xe58] sm:%s1763]
                  %2079 = vst [vmem:[%s1771 + $0x990] sm:%s1763] %v2078
                  %v2080 = vld [vmem:[%s1770 + $0xe70] sm:%s1763]
                  %2081 = vst [vmem:[%s1771 + $0x9a0] sm:%s1763] %v2080
                  %v2082 = vld [vmem:[%s1770 + $0xe88] sm:%s1763]
                  %2083 = vst [vmem:[%s1771 + $0x9b0] sm:%s1763] %v2082
                  %v2084 = vld [vmem:[%s1770 + $0xea0] sm:%s1763]
                  %2085 = vst [vmem:[%s1771 + $0x9c0] sm:%s1763] %v2084
                  %v2086 = vld [vmem:[%s1770 + $0xeb8] sm:%s1763]
                  %2087 = vst [vmem:[%s1771 + $0x9d0] sm:%s1763] %v2086
                  %v2088 = vld [vmem:[%s1770 + $0xed0] sm:%s1763]
                  %2089 = vst [vmem:[%s1771 + $0x9e0] sm:%s1763] %v2088
                  %v2090 = vld [vmem:[%s1770 + $0xee8] sm:%s1763]
                  %2091 = vst [vmem:[%s1771 + $0x9f0] sm:%s1763] %v2090
                  %v2092 = vld [vmem:[%s1770 + $0xf00] sm:%s1763]
                  %2093 = vst [vmem:[%s1771 + $0xa00] sm:%s1763] %v2092
                  %v2094 = vld [vmem:[%s1770 + $0xf18] sm:%s1763]
                  %2095 = vst [vmem:[%s1771 + $0xa10] sm:%s1763] %v2094
                  %v2096 = vld [vmem:[%s1770 + $0xf30] sm:%s1763]
                  %2097 = vst [vmem:[%s1771 + $0xa20] sm:%s1763] %v2096
                  %v2098 = vld [vmem:[%s1770 + $0xf48] sm:%s1763]
                  %2099 = vst [vmem:[%s1771 + $0xa30] sm:%s1763] %v2098
                  %v2100 = vld [vmem:[%s1770 + $0xf60] sm:%s1763]
                  %2101 = vst [vmem:[%s1771 + $0xa40] sm:%s1763] %v2100
                  %v2102 = vld [vmem:[%s1770 + $0xf78] sm:%s1763]
                  %2103 = vst [vmem:[%s1771 + $0xa50] sm:%s1763] %v2102
                  %v2104 = vld [vmem:[%s1770 + $0xf90] sm:%s1763]
                  %2105 = vst [vmem:[%s1771 + $0xa60] sm:%s1763] %v2104
                  %v2106 = vld [vmem:[%s1770 + $0xfa8] sm:%s1763]
                  %2107 = vst [vmem:[%s1771 + $0xa70] sm:%s1763] %v2106
                  %v2108 = vld [vmem:[%s1770 + $0xfc0] sm:%s1763]
                  %2109 = vst [vmem:[%s1771 + $0xa80] sm:%s1763] %v2108
                  %v2110 = vld [vmem:[%s1770 + $0xfd8] sm:%s1763]
                  %2111 = vst [vmem:[%s1771 + $0xa90] sm:%s1763] %v2110
                  %v2112 = vld [vmem:[%s1770 + $0xff0] sm:%s1763]
                  %2113 = vst [vmem:[%s1771 + $0xaa0] sm:%s1763] %v2112
                  %v2114 = vld [vmem:[%s1770 + $0x1008] sm:%s1763]
                  %2115 = vst [vmem:[%s1771 + $0xab0] sm:%s1763] %v2114
                  %v2116 = vld [vmem:[%s1770 + $0x1020] sm:%s1763]
                  %2117 = vst [vmem:[%s1771 + $0xac0] sm:%s1763] %v2116
                  %v2118 = vld [vmem:[%s1770 + $0x1038] sm:%s1763]
                  %2119 = vst [vmem:[%s1771 + $0xad0] sm:%s1763] %v2118
                  %v2120 = vld [vmem:[%s1770 + $0x1050] sm:%s1763]
                  %2121 = vst [vmem:[%s1771 + $0xae0] sm:%s1763] %v2120
                  %v2122 = vld [vmem:[%s1770 + $0x1068] sm:%s1763]
                  %2123 = vst [vmem:[%s1771 + $0xaf0] sm:%s1763] %v2122
                  %v2124 = vld [vmem:[%s1770 + $0x1080] sm:%s1763]
                  %2125 = vst [vmem:[%s1771 + $0xb00] sm:%s1763] %v2124
                  %v2126 = vld [vmem:[%s1770 + $0x1098] sm:%s1763]
                  %2127 = vst [vmem:[%s1771 + $0xb10] sm:%s1763] %v2126
                  %v2128 = vld [vmem:[%s1770 + $0x10b0] sm:%s1763]
                  %2129 = vst [vmem:[%s1771 + $0xb20] sm:%s1763] %v2128
                  %v2130 = vld [vmem:[%s1770 + $0x10c8] sm:%s1763]
                  %2131 = vst [vmem:[%s1771 + $0xb30] sm:%s1763] %v2130
                  %v2132 = vld [vmem:[%s1770 + $0x10e0] sm:%s1763]
                  %2133 = vst [vmem:[%s1771 + $0xb40] sm:%s1763] %v2132
                  %v2134 = vld [vmem:[%s1770 + $0x10f8] sm:%s1763]
                  %2135 = vst [vmem:[%s1771 + $0xb50] sm:%s1763] %v2134
                  %v2136 = vld [vmem:[%s1770 + $0x1110] sm:%s1763]
                  %2137 = vst [vmem:[%s1771 + $0xb60] sm:%s1763] %v2136
                  %v2138 = vld [vmem:[%s1770 + $0x1128] sm:%s1763]
                  %2139 = vst [vmem:[%s1771 + $0xb70] sm:%s1763] %v2138
                  %v2140 = vld [vmem:[%s1770 + $0x1140] sm:%s1763]
                  %2141 = vst [vmem:[%s1771 + $0xb80] sm:%s1763] %v2140
                  %v2142 = vld [vmem:[%s1770 + $0x1158] sm:%s1763]
                  %2143 = vst [vmem:[%s1771 + $0xb90] sm:%s1763] %v2142
                  %v2144 = vld [vmem:[%s1770 + $0x1170] sm:%s1763]
                  %2145 = vst [vmem:[%s1771 + $0xba0] sm:%s1763] %v2144
                  %v2146 = vld [vmem:[%s1770 + $0x1188] sm:%s1763]
                  %2147 = vst [vmem:[%s1771 + $0xbb0] sm:%s1763] %v2146
                  %v2148 = vld [vmem:[%s1770 + $0x11a0] sm:%s1763]
                  %2149 = vst [vmem:[%s1771 + $0xbc0] sm:%s1763] %v2148
                  %v2150 = vld [vmem:[%s1770 + $0x11b8] sm:%s1763]
                  %2151 = vst [vmem:[%s1771 + $0xbd0] sm:%s1763] %v2150
                  %v2152 = vld [vmem:[%s1770 + $0x11d0] sm:%s1763]
                  %2153 = vst [vmem:[%s1771 + $0xbe0] sm:%s1763] %v2152
                  %v2154 = vld [vmem:[%s1770 + $0x11e8] sm:%s1763]
                  %2155 = vst [vmem:[%s1771 + $0xbf0] sm:%s1763] %v2154
                  %v2156 = vld [vmem:[%s1770 + $0x1200] sm:%s1763]
                  %2157 = vst [vmem:[%s1771 + $0xc00] sm:%s1763] %v2156
                  %v2158 = vld [vmem:[%s1770 + $0x1218] sm:%s1763]
                  %2159 = vst [vmem:[%s1771 + $0xc10] sm:%s1763] %v2158
                  %v2160 = vld [vmem:[%s1770 + $0x1230] sm:%s1763]
                  %2161 = vst [vmem:[%s1771 + $0xc20] sm:%s1763] %v2160
                  %v2162 = vld [vmem:[%s1770 + $0x1248] sm:%s1763]
                  %2163 = vst [vmem:[%s1771 + $0xc30] sm:%s1763] %v2162
                  %v2164 = vld [vmem:[%s1770 + $0x1260] sm:%s1763]
                  %2165 = vst [vmem:[%s1771 + $0xc40] sm:%s1763] %v2164
                  %v2166 = vld [vmem:[%s1770 + $0x1278] sm:%s1763]
                  %2167 = vst [vmem:[%s1771 + $0xc50] sm:%s1763] %v2166
                  %v2168 = vld [vmem:[%s1770 + $0x1290] sm:%s1763]
                  %2169 = vst [vmem:[%s1771 + $0xc60] sm:%s1763] %v2168
                  %v2170 = vld [vmem:[%s1770 + $0x12a8] sm:%s1763]
                  %2171 = vst [vmem:[%s1771 + $0xc70] sm:%s1763] %v2170
                  %v2172 = vld [vmem:[%s1770 + $0x12c0] sm:%s1763]
                  %2173 = vst [vmem:[%s1771 + $0xc80] sm:%s1763] %v2172
                  %v2174 = vld [vmem:[%s1770 + $0x12d8] sm:%s1763]
                  %2175 = vst [vmem:[%s1771 + $0xc90] sm:%s1763] %v2174
                  %v2176 = vld [vmem:[%s1770 + $0x12f0] sm:%s1763]
                  %2177 = vst [vmem:[%s1771 + $0xca0] sm:%s1763] %v2176
                  %v2178 = vld [vmem:[%s1770 + $0x1308] sm:%s1763]
                  %2179 = vst [vmem:[%s1771 + $0xcb0] sm:%s1763] %v2178
                  %v2180 = vld [vmem:[%s1770 + $0x1320] sm:%s1763]
                  %2181 = vst [vmem:[%s1771 + $0xcc0] sm:%s1763] %v2180
                  %v2182 = vld [vmem:[%s1770 + $0x1338] sm:%s1763]
                  %2183 = vst [vmem:[%s1771 + $0xcd0] sm:%s1763] %v2182
                  %v2184 = vld [vmem:[%s1770 + $0x1350] sm:%s1763]
                  %2185 = vst [vmem:[%s1771 + $0xce0] sm:%s1763] %v2184
                  %v2186 = vld [vmem:[%s1770 + $0x1368] sm:%s1763]
                  %2187 = vst [vmem:[%s1771 + $0xcf0] sm:%s1763] %v2186
                  %v2188 = vld [vmem:[%s1770 + $0x1380] sm:%s1763]
                  %2189 = vst [vmem:[%s1771 + $0xd00] sm:%s1763] %v2188
                  %v2190 = vld [vmem:[%s1770 + $0x1398] sm:%s1763]
                  %2191 = vst [vmem:[%s1771 + $0xd10] sm:%s1763] %v2190
                  %v2192 = vld [vmem:[%s1770 + $0x13b0] sm:%s1763]
                  %2193 = vst [vmem:[%s1771 + $0xd20] sm:%s1763] %v2192
                  %v2194 = vld [vmem:[%s1770 + $0x13c8] sm:%s1763]
                  %2195 = vst [vmem:[%s1771 + $0xd30] sm:%s1763] %v2194
                  %v2196 = vld [vmem:[%s1770 + $0x13e0] sm:%s1763]
                  %2197 = vst [vmem:[%s1771 + $0xd40] sm:%s1763] %v2196
                  %v2198 = vld [vmem:[%s1770 + $0x13f8] sm:%s1763]
                  %2199 = vst [vmem:[%s1771 + $0xd50] sm:%s1763] %v2198
                  %v2200 = vld [vmem:[%s1770 + $0x1410] sm:%s1763]
                  %2201 = vst [vmem:[%s1771 + $0xd60] sm:%s1763] %v2200
                  %v2202 = vld [vmem:[%s1770 + $0x1428] sm:%s1763]
                  %2203 = vst [vmem:[%s1771 + $0xd70] sm:%s1763] %v2202
                  %v2204 = vld [vmem:[%s1770 + $0x1440] sm:%s1763]
                  %2205 = vst [vmem:[%s1771 + $0xd80] sm:%s1763] %v2204
                  %v2206 = vld [vmem:[%s1770 + $0x1458] sm:%s1763]
                  %2207 = vst [vmem:[%s1771 + $0xd90] sm:%s1763] %v2206
                  %v2208 = vld [vmem:[%s1770 + $0x1470] sm:%s1763]
                  %2209 = vst [vmem:[%s1771 + $0xda0] sm:%s1763] %v2208
                  %v2210 = vld [vmem:[%s1770 + $0x1488] sm:%s1763]
                  %2211 = vst [vmem:[%s1771 + $0xdb0] sm:%s1763] %v2210
                  %v2212 = vld [vmem:[%s1770 + $0x14a0] sm:%s1763]
                  %2213 = vst [vmem:[%s1771 + $0xdc0] sm:%s1763] %v2212
                  %v2214 = vld [vmem:[%s1770 + $0x14b8] sm:%s1763]
                  %2215 = vst [vmem:[%s1771 + $0xdd0] sm:%s1763] %v2214
                  %v2216 = vld [vmem:[%s1770 + $0x14d0] sm:%s1763]
                  %2217 = vst [vmem:[%s1771 + $0xde0] sm:%s1763] %v2216
                  %v2218 = vld [vmem:[%s1770 + $0x14e8] sm:%s1763]
                  %2219 = vst [vmem:[%s1771 + $0xdf0] sm:%s1763] %v2218
                  %v2220 = vld [vmem:[%s1770 + $0x1500] sm:%s1763]
                  %2221 = vst [vmem:[%s1771 + $0xe00] sm:%s1763] %v2220
                  %v2222 = vld [vmem:[%s1770 + $0x1518] sm:%s1763]
                  %2223 = vst [vmem:[%s1771 + $0xe10] sm:%s1763] %v2222
                  %v2224 = vld [vmem:[%s1770 + $0x1530] sm:%s1763]
                  %2225 = vst [vmem:[%s1771 + $0xe20] sm:%s1763] %v2224
                  %v2226 = vld [vmem:[%s1770 + $0x1548] sm:%s1763]
                  %2227 = vst [vmem:[%s1771 + $0xe30] sm:%s1763] %v2226
                  %v2228 = vld [vmem:[%s1770 + $0x1560] sm:%s1763]
                  %2229 = vst [vmem:[%s1771 + $0xe40] sm:%s1763] %v2228
                  %v2230 = vld [vmem:[%s1770 + $0x1578] sm:%s1763]
                  %2231 = vst [vmem:[%s1771 + $0xe50] sm:%s1763] %v2230
                  %v2232 = vld [vmem:[%s1770 + $0x1590] sm:%s1763]
                  %2233 = vst [vmem:[%s1771 + $0xe60] sm:%s1763] %v2232
                  %v2234 = vld [vmem:[%s1770 + $0x15a8] sm:%s1763]
                  %2235 = vst [vmem:[%s1771 + $0xe70] sm:%s1763] %v2234
                  %v2236 = vld [vmem:[%s1770 + $0x15c0] sm:%s1763]
                  %2237 = vst [vmem:[%s1771 + $0xe80] sm:%s1763] %v2236
                  %v2238 = vld [vmem:[%s1770 + $0x15d8] sm:%s1763]
                  %2239 = vst [vmem:[%s1771 + $0xe90] sm:%s1763] %v2238
                  %v2240 = vld [vmem:[%s1770 + $0x15f0] sm:%s1763]
                  %2241 = vst [vmem:[%s1771 + $0xea0] sm:%s1763] %v2240
                  %v2242 = vld [vmem:[%s1770 + $0x1608] sm:%s1763]
                  %2243 = vst [vmem:[%s1771 + $0xeb0] sm:%s1763] %v2242
                  %v2244 = vld [vmem:[%s1770 + $0x1620] sm:%s1763]
                  %2245 = vst [vmem:[%s1771 + $0xec0] sm:%s1763] %v2244
                  %v2246 = vld [vmem:[%s1770 + $0x1638] sm:%s1763]
                  %2247 = vst [vmem:[%s1771 + $0xed0] sm:%s1763] %v2246
                  %v2248 = vld [vmem:[%s1770 + $0x1650] sm:%s1763]
                  %2249 = vst [vmem:[%s1771 + $0xee0] sm:%s1763] %v2248
                  %v2250 = vld [vmem:[%s1770 + $0x1668] sm:%s1763]
                  %2251 = vst [vmem:[%s1771 + $0xef0] sm:%s1763] %v2250
                  %v2252 = vld [vmem:[%s1770 + $0x1680] sm:%s1763]
                  %2253 = vst [vmem:[%s1771 + $0xf00] sm:%s1763] %v2252
                  %v2254 = vld [vmem:[%s1770 + $0x1698] sm:%s1763]
                  %2255 = vst [vmem:[%s1771 + $0xf10] sm:%s1763] %v2254
                  %v2256 = vld [vmem:[%s1770 + $0x16b0] sm:%s1763]
                  %2257 = vst [vmem:[%s1771 + $0xf20] sm:%s1763] %v2256
                  %v2258 = vld [vmem:[%s1770 + $0x16c8] sm:%s1763]
                  %2259 = vst [vmem:[%s1771 + $0xf30] sm:%s1763] %v2258
                  %v2260 = vld [vmem:[%s1770 + $0x16e0] sm:%s1763]
                  %2261 = vst [vmem:[%s1771 + $0xf40] sm:%s1763] %v2260
                  %v2262 = vld [vmem:[%s1770 + $0x16f8] sm:%s1763]
                  %2263 = vst [vmem:[%s1771 + $0xf50] sm:%s1763] %v2262
                  %v2264 = vld [vmem:[%s1770 + $0x1710] sm:%s1763]
                  %2265 = vst [vmem:[%s1771 + $0xf60] sm:%s1763] %v2264
                  %v2266 = vld [vmem:[%s1770 + $0x1728] sm:%s1763]
                  %2267 = vst [vmem:[%s1771 + $0xf70] sm:%s1763] %v2266
                  %v2268 = vld [vmem:[%s1770 + $0x1740] sm:%s1763]
                  %2269 = vst [vmem:[%s1771 + $0xf80] sm:%s1763] %v2268
                  %v2270 = vld [vmem:[%s1770 + $0x1758] sm:%s1763]
                  %2271 = vst [vmem:[%s1771 + $0xf90] sm:%s1763] %v2270
                  %v2272 = vld [vmem:[%s1770 + $0x1770] sm:%s1763]
                  %2273 = vst [vmem:[%s1771 + $0xfa0] sm:%s1763] %v2272
                  %v2274 = vld [vmem:[%s1770 + $0x1788] sm:%s1763]
                  %2275 = vst [vmem:[%s1771 + $0xfb0] sm:%s1763] %v2274
                  %v2276 = vld [vmem:[%s1770 + $0x17a0] sm:%s1763]
                  %2277 = vst [vmem:[%s1771 + $0xfc0] sm:%s1763] %v2276
                  %v2278 = vld [vmem:[%s1770 + $0x17b8] sm:%s1763]
                  %2279 = vst [vmem:[%s1771 + $0xfd0] sm:%s1763] %v2278
                  %v2280 = vld [vmem:[%s1770 + $0x17d0] sm:%s1763]
                  %2281 = vst [vmem:[%s1771 + $0xfe0] sm:%s1763] %v2280
                  %v2282 = vld [vmem:[%s1770 + $0x17e8] sm:%s1763]
                  %2283 = vst [vmem:[%s1771 + $0xff0] sm:%s1763] %v2282
                  %v2284 = vld [vmem:[%s1770 + $0x1800] sm:%s1763]
                  %2285 = vst [vmem:[%s1771 + $0x1000] sm:%s1763] %v2284
                  %v2286 = vld [vmem:[%s1770 + $0x1818] sm:%s1763]
                  %2287 = vst [vmem:[%s1771 + $0x1010] sm:%s1763] %v2286
                $region74: #{tpu_custom_call.1} parent=61 // loop_footer
                  %s1769 = sadd.s32 1, %s1765
                $region75: #{tpu_custom_call.1} parent=61 // loop_footer_branch
                  %1764 = sbr.rel target = $region71
                $region76: #{tpu_custom_call.1} parent=61 // loop_exit
                  _
              $region62: #{tpu_custom_call.1} parent=35 // pred_fallthru
                _
            $region36: #{tpu_custom_call.1} parent=31 // pred_fallthru
              _
            // Predicated region
            $region37: #{tpu_custom_call.1} parent=31 // pred_check
              %p154 = pneg %p150
            $region38: #{tpu_custom_call.1} parent=31 // pred_check_branch
              %156 = sbr.rel (%p154) target = $region40
            $region39: #{tpu_custom_call.1} parent=31 // pred_region
              %s157 = sshll.u32 1, %s146
              %s158 = ssub.s32 %s157, 1
              loop: start=0, step=1, limit=1
              $region41: #{tpu_custom_call.1} parent=39 // loop_pre_header
                _
              $region42: #{tpu_custom_call.1} parent=39 // loop_header
                %s160 = sphi 0, %s164
                %p161 = scmp.ge.s32.totalorder %s160, 1
                %s165 = sphi %s145, %s145
                %s166 = sphi %s137, %s137
              $region43: #{tpu_custom_call.1} parent=39 // loop_header_branch
                %163 = sbr.rel (%p161) target = $region47
              $region44: #{tpu_custom_call.1} parent=39 // loop_body
                %v167 = vld [vmem:[%s165] sm:%s158]
                %168 = vst [vmem:[%s166] sm:%s158] %v167
                %v169 = vld [vmem:[%s165 + $0x18] sm:%s158]
                %170 = vst [vmem:[%s166 + $0x10] sm:%s158] %v169
                %v171 = vld [vmem:[%s165 + $0x30] sm:%s158]
                %172 = vst [vmem:[%s166 + $0x20] sm:%s158] %v171
                %v173 = vld [vmem:[%s165 + $0x48] sm:%s158]
                %174 = vst [vmem:[%s166 + $0x30] sm:%s158] %v173
                %v175 = vld [vmem:[%s165 + $0x60] sm:%s158]
                %176 = vst [vmem:[%s166 + $0x40] sm:%s158] %v175
                %v177 = vld [vmem:[%s165 + $0x78] sm:%s158]
                %178 = vst [vmem:[%s166 + $0x50] sm:%s158] %v177
                %v179 = vld [vmem:[%s165 + $0x90] sm:%s158]
                %180 = vst [vmem:[%s166 + $0x60] sm:%s158] %v179
                %v181 = vld [vmem:[%s165 + $0xa8] sm:%s158]
                %182 = vst [vmem:[%s166 + $0x70] sm:%s158] %v181
                %v183 = vld [vmem:[%s165 + $0xc0] sm:%s158]
                %184 = vst [vmem:[%s166 + $0x80] sm:%s158] %v183
                %v185 = vld [vmem:[%s165 + $0xd8] sm:%s158]
                %186 = vst [vmem:[%s166 + $0x90] sm:%s158] %v185
                %v187 = vld [vmem:[%s165 + $0xf0] sm:%s158]
                %188 = vst [vmem:[%s166 + $0xa0] sm:%s158] %v187
                %v189 = vld [vmem:[%s165 + $0x108] sm:%s158]
                %190 = vst [vmem:[%s166 + $0xb0] sm:%s158] %v189
                %v191 = vld [vmem:[%s165 + $0x120] sm:%s158]
                %192 = vst [vmem:[%s166 + $0xc0] sm:%s158] %v191
                %v193 = vld [vmem:[%s165 + $0x138] sm:%s158]
                %194 = vst [vmem:[%s166 + $0xd0] sm:%s158] %v193
                %v195 = vld [vmem:[%s165 + $0x150] sm:%s158]
                %196 = vst [vmem:[%s166 + $0xe0] sm:%s158] %v195
                %v197 = vld [vmem:[%s165 + $0x168] sm:%s158]
                %198 = vst [vmem:[%s166 + $0xf0] sm:%s158] %v197
                %v199 = vld [vmem:[%s165 + $0x180] sm:%s158]
                %200 = vst [vmem:[%s166 + $0x100] sm:%s158] %v199
                %v201 = vld [vmem:[%s165 + $0x198] sm:%s158]
                %202 = vst [vmem:[%s166 + $0x110] sm:%s158] %v201
                %v203 = vld [vmem:[%s165 + $0x1b0] sm:%s158]
                %204 = vst [vmem:[%s166 + $0x120] sm:%s158] %v203
                %v205 = vld [vmem:[%s165 + $0x1c8] sm:%s158]
                %206 = vst [vmem:[%s166 + $0x130] sm:%s158] %v205
                %v207 = vld [vmem:[%s165 + $0x1e0] sm:%s158]
                %208 = vst [vmem:[%s166 + $0x140] sm:%s158] %v207
                %v209 = vld [vmem:[%s165 + $0x1f8] sm:%s158]
                %210 = vst [vmem:[%s166 + $0x150] sm:%s158] %v209
                %v211 = vld [vmem:[%s165 + $0x210] sm:%s158]
                %212 = vst [vmem:[%s166 + $0x160] sm:%s158] %v211
                %v213 = vld [vmem:[%s165 + $0x228] sm:%s158]
                %214 = vst [vmem:[%s166 + $0x170] sm:%s158] %v213
                %v215 = vld [vmem:[%s165 + $0x240] sm:%s158]
                %216 = vst [vmem:[%s166 + $0x180] sm:%s158] %v215
                %v217 = vld [vmem:[%s165 + $0x258] sm:%s158]
                %218 = vst [vmem:[%s166 + $0x190] sm:%s158] %v217
                %v219 = vld [vmem:[%s165 + $0x270] sm:%s158]
                %220 = vst [vmem:[%s166 + $0x1a0] sm:%s158] %v219
                %v221 = vld [vmem:[%s165 + $0x288] sm:%s158]
                %222 = vst [vmem:[%s166 + $0x1b0] sm:%s158] %v221
                %v223 = vld [vmem:[%s165 + $0x2a0] sm:%s158]
                %224 = vst [vmem:[%s166 + $0x1c0] sm:%s158] %v223
                %v225 = vld [vmem:[%s165 + $0x2b8] sm:%s158]
                %226 = vst [vmem:[%s166 + $0x1d0] sm:%s158] %v225
                %v227 = vld [vmem:[%s165 + $0x2d0] sm:%s158]
                %228 = vst [vmem:[%s166 + $0x1e0] sm:%s158] %v227
                %v229 = vld [vmem:[%s165 + $0x2e8] sm:%s158]
                %230 = vst [vmem:[%s166 + $0x1f0] sm:%s158] %v229
                %v231 = vld [vmem:[%s165 + $0x300] sm:%s158]
                %232 = vst [vmem:[%s166 + $0x200] sm:%s158] %v231
                %v233 = vld [vmem:[%s165 + $0x318] sm:%s158]
                %234 = vst [vmem:[%s166 + $0x210] sm:%s158] %v233
                %v235 = vld [vmem:[%s165 + $0x330] sm:%s158]
                %236 = vst [vmem:[%s166 + $0x220] sm:%s158] %v235
                %v237 = vld [vmem:[%s165 + $0x348] sm:%s158]
                %238 = vst [vmem:[%s166 + $0x230] sm:%s158] %v237
                %v239 = vld [vmem:[%s165 + $0x360] sm:%s158]
                %240 = vst [vmem:[%s166 + $0x240] sm:%s158] %v239
                %v241 = vld [vmem:[%s165 + $0x378] sm:%s158]
                %242 = vst [vmem:[%s166 + $0x250] sm:%s158] %v241
                %v243 = vld [vmem:[%s165 + $0x390] sm:%s158]
                %244 = vst [vmem:[%s166 + $0x260] sm:%s158] %v243
                %v245 = vld [vmem:[%s165 + $0x3a8] sm:%s158]
                %246 = vst [vmem:[%s166 + $0x270] sm:%s158] %v245
                %v247 = vld [vmem:[%s165 + $0x3c0] sm:%s158]
                %248 = vst [vmem:[%s166 + $0x280] sm:%s158] %v247
                %v249 = vld [vmem:[%s165 + $0x3d8] sm:%s158]
                %250 = vst [vmem:[%s166 + $0x290] sm:%s158] %v249
                %v251 = vld [vmem:[%s165 + $0x3f0] sm:%s158]
                %252 = vst [vmem:[%s166 + $0x2a0] sm:%s158] %v251
                %v253 = vld [vmem:[%s165 + $0x408] sm:%s158]
                %254 = vst [vmem:[%s166 + $0x2b0] sm:%s158] %v253
                %v255 = vld [vmem:[%s165 + $0x420] sm:%s158]
                %256 = vst [vmem:[%s166 + $0x2c0] sm:%s158] %v255
                %v257 = vld [vmem:[%s165 + $0x438] sm:%s158]
                %258 = vst [vmem:[%s166 + $0x2d0] sm:%s158] %v257
                %v259 = vld [vmem:[%s165 + $0x450] sm:%s158]
                %260 = vst [vmem:[%s166 + $0x2e0] sm:%s158] %v259
                %v261 = vld [vmem:[%s165 + $0x468] sm:%s158]
                %262 = vst [vmem:[%s166 + $0x2f0] sm:%s158] %v261
                %v263 = vld [vmem:[%s165 + $0x480] sm:%s158]
                %264 = vst [vmem:[%s166 + $0x300] sm:%s158] %v263
                %v265 = vld [vmem:[%s165 + $0x498] sm:%s158]
                %266 = vst [vmem:[%s166 + $0x310] sm:%s158] %v265
                %v267 = vld [vmem:[%s165 + $0x4b0] sm:%s158]
                %268 = vst [vmem:[%s166 + $0x320] sm:%s158] %v267
                %v269 = vld [vmem:[%s165 + $0x4c8] sm:%s158]
                %270 = vst [vmem:[%s166 + $0x330] sm:%s158] %v269
                %v271 = vld [vmem:[%s165 + $0x4e0] sm:%s158]
                %272 = vst [vmem:[%s166 + $0x340] sm:%s158] %v271
                %v273 = vld [vmem:[%s165 + $0x4f8] sm:%s158]
                %274 = vst [vmem:[%s166 + $0x350] sm:%s158] %v273
                %v275 = vld [vmem:[%s165 + $0x510] sm:%s158]
                %276 = vst [vmem:[%s166 + $0x360] sm:%s158] %v275
                %v277 = vld [vmem:[%s165 + $0x528] sm:%s158]
                %278 = vst [vmem:[%s166 + $0x370] sm:%s158] %v277
                %v279 = vld [vmem:[%s165 + $0x540] sm:%s158]
                %280 = vst [vmem:[%s166 + $0x380] sm:%s158] %v279
                %v281 = vld [vmem:[%s165 + $0x558] sm:%s158]
                %282 = vst [vmem:[%s166 + $0x390] sm:%s158] %v281
                %v283 = vld [vmem:[%s165 + $0x570] sm:%s158]
                %284 = vst [vmem:[%s166 + $0x3a0] sm:%s158] %v283
                %v285 = vld [vmem:[%s165 + $0x588] sm:%s158]
                %286 = vst [vmem:[%s166 + $0x3b0] sm:%s158] %v285
                %v287 = vld [vmem:[%s165 + $0x5a0] sm:%s158]
                %288 = vst [vmem:[%s166 + $0x3c0] sm:%s158] %v287
                %v289 = vld [vmem:[%s165 + $0x5b8] sm:%s158]
                %290 = vst [vmem:[%s166 + $0x3d0] sm:%s158] %v289
                %v291 = vld [vmem:[%s165 + $0x5d0] sm:%s158]
                %292 = vst [vmem:[%s166 + $0x3e0] sm:%s158] %v291
                %v293 = vld [vmem:[%s165 + $0x5e8] sm:%s158]
                %294 = vst [vmem:[%s166 + $0x3f0] sm:%s158] %v293
                %v295 = vld [vmem:[%s165 + $0x600] sm:%s158]
                %296 = vst [vmem:[%s166 + $0x400] sm:%s158] %v295
                %v297 = vld [vmem:[%s165 + $0x618] sm:%s158]
                %298 = vst [vmem:[%s166 + $0x410] sm:%s158] %v297
                %v299 = vld [vmem:[%s165 + $0x630] sm:%s158]
                %300 = vst [vmem:[%s166 + $0x420] sm:%s158] %v299
                %v301 = vld [vmem:[%s165 + $0x648] sm:%s158]
                %302 = vst [vmem:[%s166 + $0x430] sm:%s158] %v301
                %v303 = vld [vmem:[%s165 + $0x660] sm:%s158]
                %304 = vst [vmem:[%s166 + $0x440] sm:%s158] %v303
                %v305 = vld [vmem:[%s165 + $0x678] sm:%s158]
                %306 = vst [vmem:[%s166 + $0x450] sm:%s158] %v305
                %v307 = vld [vmem:[%s165 + $0x690] sm:%s158]
                %308 = vst [vmem:[%s166 + $0x460] sm:%s158] %v307
                %v309 = vld [vmem:[%s165 + $0x6a8] sm:%s158]
                %310 = vst [vmem:[%s166 + $0x470] sm:%s158] %v309
                %v311 = vld [vmem:[%s165 + $0x6c0] sm:%s158]
                %312 = vst [vmem:[%s166 + $0x480] sm:%s158] %v311
                %v313 = vld [vmem:[%s165 + $0x6d8] sm:%s158]
                %314 = vst [vmem:[%s166 + $0x490] sm:%s158] %v313
                %v315 = vld [vmem:[%s165 + $0x6f0] sm:%s158]
                %316 = vst [vmem:[%s166 + $0x4a0] sm:%s158] %v315
                %v317 = vld [vmem:[%s165 + $0x708] sm:%s158]
                %318 = vst [vmem:[%s166 + $0x4b0] sm:%s158] %v317
                %v319 = vld [vmem:[%s165 + $0x720] sm:%s158]
                %320 = vst [vmem:[%s166 + $0x4c0] sm:%s158] %v319
                %v321 = vld [vmem:[%s165 + $0x738] sm:%s158]
                %322 = vst [vmem:[%s166 + $0x4d0] sm:%s158] %v321
                %v323 = vld [vmem:[%s165 + $0x750] sm:%s158]
                %324 = vst [vmem:[%s166 + $0x4e0] sm:%s158] %v323
                %v325 = vld [vmem:[%s165 + $0x768] sm:%s158]
                %326 = vst [vmem:[%s166 + $0x4f0] sm:%s158] %v325
                %v327 = vld [vmem:[%s165 + $0x780] sm:%s158]
                %328 = vst [vmem:[%s166 + $0x500] sm:%s158] %v327
                %v329 = vld [vmem:[%s165 + $0x798] sm:%s158]
                %330 = vst [vmem:[%s166 + $0x510] sm:%s158] %v329
                %v331 = vld [vmem:[%s165 + $0x7b0] sm:%s158]
                %332 = vst [vmem:[%s166 + $0x520] sm:%s158] %v331
                %v333 = vld [vmem:[%s165 + $0x7c8] sm:%s158]
                %334 = vst [vmem:[%s166 + $0x530] sm:%s158] %v333
                %v335 = vld [vmem:[%s165 + $0x7e0] sm:%s158]
                %336 = vst [vmem:[%s166 + $0x540] sm:%s158] %v335
                %v337 = vld [vmem:[%s165 + $0x7f8] sm:%s158]
                %338 = vst [vmem:[%s166 + $0x550] sm:%s158] %v337
                %v339 = vld [vmem:[%s165 + $0x810] sm:%s158]
                %340 = vst [vmem:[%s166 + $0x560] sm:%s158] %v339
                %v341 = vld [vmem:[%s165 + $0x828] sm:%s158]
                %342 = vst [vmem:[%s166 + $0x570] sm:%s158] %v341
                %v343 = vld [vmem:[%s165 + $0x840] sm:%s158]
                %344 = vst [vmem:[%s166 + $0x580] sm:%s158] %v343
                %v345 = vld [vmem:[%s165 + $0x858] sm:%s158]
                %346 = vst [vmem:[%s166 + $0x590] sm:%s158] %v345
                %v347 = vld [vmem:[%s165 + $0x870] sm:%s158]
                %348 = vst [vmem:[%s166 + $0x5a0] sm:%s158] %v347
                %v349 = vld [vmem:[%s165 + $0x888] sm:%s158]
                %350 = vst [vmem:[%s166 + $0x5b0] sm:%s158] %v349
                %v351 = vld [vmem:[%s165 + $0x8a0] sm:%s158]
                %352 = vst [vmem:[%s166 + $0x5c0] sm:%s158] %v351
                %v353 = vld [vmem:[%s165 + $0x8b8] sm:%s158]
                %354 = vst [vmem:[%s166 + $0x5d0] sm:%s158] %v353
                %v355 = vld [vmem:[%s165 + $0x8d0] sm:%s158]
                %356 = vst [vmem:[%s166 + $0x5e0] sm:%s158] %v355
                %v357 = vld [vmem:[%s165 + $0x8e8] sm:%s158]
                %358 = vst [vmem:[%s166 + $0x5f0] sm:%s158] %v357
                %v359 = vld [vmem:[%s165 + $0x900] sm:%s158]
                %360 = vst [vmem:[%s166 + $0x600] sm:%s158] %v359
                %v361 = vld [vmem:[%s165 + $0x918] sm:%s158]
                %362 = vst [vmem:[%s166 + $0x610] sm:%s158] %v361
                %v363 = vld [vmem:[%s165 + $0x930] sm:%s158]
                %364 = vst [vmem:[%s166 + $0x620] sm:%s158] %v363
                %v365 = vld [vmem:[%s165 + $0x948] sm:%s158]
                %366 = vst [vmem:[%s166 + $0x630] sm:%s158] %v365
                %v367 = vld [vmem:[%s165 + $0x960] sm:%s158]
                %368 = vst [vmem:[%s166 + $0x640] sm:%s158] %v367
                %v369 = vld [vmem:[%s165 + $0x978] sm:%s158]
                %370 = vst [vmem:[%s166 + $0x650] sm:%s158] %v369
                %v371 = vld [vmem:[%s165 + $0x990] sm:%s158]
                %372 = vst [vmem:[%s166 + $0x660] sm:%s158] %v371
                %v373 = vld [vmem:[%s165 + $0x9a8] sm:%s158]
                %374 = vst [vmem:[%s166 + $0x670] sm:%s158] %v373
                %v375 = vld [vmem:[%s165 + $0x9c0] sm:%s158]
                %376 = vst [vmem:[%s166 + $0x680] sm:%s158] %v375
                %v377 = vld [vmem:[%s165 + $0x9d8] sm:%s158]
                %378 = vst [vmem:[%s166 + $0x690] sm:%s158] %v377
                %v379 = vld [vmem:[%s165 + $0x9f0] sm:%s158]
                %380 = vst [vmem:[%s166 + $0x6a0] sm:%s158] %v379
                %v381 = vld [vmem:[%s165 + $0xa08] sm:%s158]
                %382 = vst [vmem:[%s166 + $0x6b0] sm:%s158] %v381
                %v383 = vld [vmem:[%s165 + $0xa20] sm:%s158]
                %384 = vst [vmem:[%s166 + $0x6c0] sm:%s158] %v383
                %v385 = vld [vmem:[%s165 + $0xa38] sm:%s158]
                %386 = vst [vmem:[%s166 + $0x6d0] sm:%s158] %v385
                %v387 = vld [vmem:[%s165 + $0xa50] sm:%s158]
                %388 = vst [vmem:[%s166 + $0x6e0] sm:%s158] %v387
                %v389 = vld [vmem:[%s165 + $0xa68] sm:%s158]
                %390 = vst [vmem:[%s166 + $0x6f0] sm:%s158] %v389
                %v391 = vld [vmem:[%s165 + $0xa80] sm:%s158]
                %392 = vst [vmem:[%s166 + $0x700] sm:%s158] %v391
                %v393 = vld [vmem:[%s165 + $0xa98] sm:%s158]
                %394 = vst [vmem:[%s166 + $0x710] sm:%s158] %v393
                %v395 = vld [vmem:[%s165 + $0xab0] sm:%s158]
                %396 = vst [vmem:[%s166 + $0x720] sm:%s158] %v395
                %v397 = vld [vmem:[%s165 + $0xac8] sm:%s158]
                %398 = vst [vmem:[%s166 + $0x730] sm:%s158] %v397
                %v399 = vld [vmem:[%s165 + $0xae0] sm:%s158]
                %400 = vst [vmem:[%s166 + $0x740] sm:%s158] %v399
                %v401 = vld [vmem:[%s165 + $0xaf8] sm:%s158]
                %402 = vst [vmem:[%s166 + $0x750] sm:%s158] %v401
                %v403 = vld [vmem:[%s165 + $0xb10] sm:%s158]
                %404 = vst [vmem:[%s166 + $0x760] sm:%s158] %v403
                %v405 = vld [vmem:[%s165 + $0xb28] sm:%s158]
                %406 = vst [vmem:[%s166 + $0x770] sm:%s158] %v405
                %v407 = vld [vmem:[%s165 + $0xb40] sm:%s158]
                %408 = vst [vmem:[%s166 + $0x780] sm:%s158] %v407
                %v409 = vld [vmem:[%s165 + $0xb58] sm:%s158]
                %410 = vst [vmem:[%s166 + $0x790] sm:%s158] %v409
                %v411 = vld [vmem:[%s165 + $0xb70] sm:%s158]
                %412 = vst [vmem:[%s166 + $0x7a0] sm:%s158] %v411
                %v413 = vld [vmem:[%s165 + $0xb88] sm:%s158]
                %414 = vst [vmem:[%s166 + $0x7b0] sm:%s158] %v413
                %v415 = vld [vmem:[%s165 + $0xba0] sm:%s158]
                %416 = vst [vmem:[%s166 + $0x7c0] sm:%s158] %v415
                %v417 = vld [vmem:[%s165 + $0xbb8] sm:%s158]
                %418 = vst [vmem:[%s166 + $0x7d0] sm:%s158] %v417
                %v419 = vld [vmem:[%s165 + $0xbd0] sm:%s158]
                %420 = vst [vmem:[%s166 + $0x7e0] sm:%s158] %v419
                %v421 = vld [vmem:[%s165 + $0xbe8] sm:%s158]
                %422 = vst [vmem:[%s166 + $0x7f0] sm:%s158] %v421
                %v423 = vld [vmem:[%s165 + $0xc00] sm:%s158]
                %424 = vst [vmem:[%s166 + $0x800] sm:%s158] %v423
                %v425 = vld [vmem:[%s165 + $0xc18] sm:%s158]
                %426 = vst [vmem:[%s166 + $0x810] sm:%s158] %v425
                %v427 = vld [vmem:[%s165 + $0xc30] sm:%s158]
                %428 = vst [vmem:[%s166 + $0x820] sm:%s158] %v427
                %v429 = vld [vmem:[%s165 + $0xc48] sm:%s158]
                %430 = vst [vmem:[%s166 + $0x830] sm:%s158] %v429
                %v431 = vld [vmem:[%s165 + $0xc60] sm:%s158]
                %432 = vst [vmem:[%s166 + $0x840] sm:%s158] %v431
                %v433 = vld [vmem:[%s165 + $0xc78] sm:%s158]
                %434 = vst [vmem:[%s166 + $0x850] sm:%s158] %v433
                %v435 = vld [vmem:[%s165 + $0xc90] sm:%s158]
                %436 = vst [vmem:[%s166 + $0x860] sm:%s158] %v435
                %v437 = vld [vmem:[%s165 + $0xca8] sm:%s158]
                %438 = vst [vmem:[%s166 + $0x870] sm:%s158] %v437
                %v439 = vld [vmem:[%s165 + $0xcc0] sm:%s158]
                %440 = vst [vmem:[%s166 + $0x880] sm:%s158] %v439
                %v441 = vld [vmem:[%s165 + $0xcd8] sm:%s158]
                %442 = vst [vmem:[%s166 + $0x890] sm:%s158] %v441
                %v443 = vld [vmem:[%s165 + $0xcf0] sm:%s158]
                %444 = vst [vmem:[%s166 + $0x8a0] sm:%s158] %v443
                %v445 = vld [vmem:[%s165 + $0xd08] sm:%s158]
                %446 = vst [vmem:[%s166 + $0x8b0] sm:%s158] %v445
                %v447 = vld [vmem:[%s165 + $0xd20] sm:%s158]
                %448 = vst [vmem:[%s166 + $0x8c0] sm:%s158] %v447
                %v449 = vld [vmem:[%s165 + $0xd38] sm:%s158]
                %450 = vst [vmem:[%s166 + $0x8d0] sm:%s158] %v449
                %v451 = vld [vmem:[%s165 + $0xd50] sm:%s158]
                %452 = vst [vmem:[%s166 + $0x8e0] sm:%s158] %v451
                %v453 = vld [vmem:[%s165 + $0xd68] sm:%s158]
                %454 = vst [vmem:[%s166 + $0x8f0] sm:%s158] %v453
                %v455 = vld [vmem:[%s165 + $0xd80] sm:%s158]
                %456 = vst [vmem:[%s166 + $0x900] sm:%s158] %v455
                %v457 = vld [vmem:[%s165 + $0xd98] sm:%s158]
                %458 = vst [vmem:[%s166 + $0x910] sm:%s158] %v457
                %v459 = vld [vmem:[%s165 + $0xdb0] sm:%s158]
                %460 = vst [vmem:[%s166 + $0x920] sm:%s158] %v459
                %v461 = vld [vmem:[%s165 + $0xdc8] sm:%s158]
                %462 = vst [vmem:[%s166 + $0x930] sm:%s158] %v461
                %v463 = vld [vmem:[%s165 + $0xde0] sm:%s158]
                %464 = vst [vmem:[%s166 + $0x940] sm:%s158] %v463
                %v465 = vld [vmem:[%s165 + $0xdf8] sm:%s158]
                %466 = vst [vmem:[%s166 + $0x950] sm:%s158] %v465
                %v467 = vld [vmem:[%s165 + $0xe10] sm:%s158]
                %468 = vst [vmem:[%s166 + $0x960] sm:%s158] %v467
                %v469 = vld [vmem:[%s165 + $0xe28] sm:%s158]
                %470 = vst [vmem:[%s166 + $0x970] sm:%s158] %v469
                %v471 = vld [vmem:[%s165 + $0xe40] sm:%s158]
                %472 = vst [vmem:[%s166 + $0x980] sm:%s158] %v471
                %v473 = vld [vmem:[%s165 + $0xe58] sm:%s158]
                %474 = vst [vmem:[%s166 + $0x990] sm:%s158] %v473
                %v475 = vld [vmem:[%s165 + $0xe70] sm:%s158]
                %476 = vst [vmem:[%s166 + $0x9a0] sm:%s158] %v475
                %v477 = vld [vmem:[%s165 + $0xe88] sm:%s158]
                %478 = vst [vmem:[%s166 + $0x9b0] sm:%s158] %v477
                %v479 = vld [vmem:[%s165 + $0xea0] sm:%s158]
                %480 = vst [vmem:[%s166 + $0x9c0] sm:%s158] %v479
                %v481 = vld [vmem:[%s165 + $0xeb8] sm:%s158]
                %482 = vst [vmem:[%s166 + $0x9d0] sm:%s158] %v481
                %v483 = vld [vmem:[%s165 + $0xed0] sm:%s158]
                %484 = vst [vmem:[%s166 + $0x9e0] sm:%s158] %v483
                %v485 = vld [vmem:[%s165 + $0xee8] sm:%s158]
                %486 = vst [vmem:[%s166 + $0x9f0] sm:%s158] %v485
                %v487 = vld [vmem:[%s165 + $0xf00] sm:%s158]
                %488 = vst [vmem:[%s166 + $0xa00] sm:%s158] %v487
                %v489 = vld [vmem:[%s165 + $0xf18] sm:%s158]
                %490 = vst [vmem:[%s166 + $0xa10] sm:%s158] %v489
                %v491 = vld [vmem:[%s165 + $0xf30] sm:%s158]
                %492 = vst [vmem:[%s166 + $0xa20] sm:%s158] %v491
                %v493 = vld [vmem:[%s165 + $0xf48] sm:%s158]
                %494 = vst [vmem:[%s166 + $0xa30] sm:%s158] %v493
                %v495 = vld [vmem:[%s165 + $0xf60] sm:%s158]
                %496 = vst [vmem:[%s166 + $0xa40] sm:%s158] %v495
                %v497 = vld [vmem:[%s165 + $0xf78] sm:%s158]
                %498 = vst [vmem:[%s166 + $0xa50] sm:%s158] %v497
                %v499 = vld [vmem:[%s165 + $0xf90] sm:%s158]
                %500 = vst [vmem:[%s166 + $0xa60] sm:%s158] %v499
                %v501 = vld [vmem:[%s165 + $0xfa8] sm:%s158]
                %502 = vst [vmem:[%s166 + $0xa70] sm:%s158] %v501
                %v503 = vld [vmem:[%s165 + $0xfc0] sm:%s158]
                %504 = vst [vmem:[%s166 + $0xa80] sm:%s158] %v503
                %v505 = vld [vmem:[%s165 + $0xfd8] sm:%s158]
                %506 = vst [vmem:[%s166 + $0xa90] sm:%s158] %v505
                %v507 = vld [vmem:[%s165 + $0xff0] sm:%s158]
                %508 = vst [vmem:[%s166 + $0xaa0] sm:%s158] %v507
                %v509 = vld [vmem:[%s165 + $0x1008] sm:%s158]
                %510 = vst [vmem:[%s166 + $0xab0] sm:%s158] %v509
                %v511 = vld [vmem:[%s165 + $0x1020] sm:%s158]
                %512 = vst [vmem:[%s166 + $0xac0] sm:%s158] %v511
                %v513 = vld [vmem:[%s165 + $0x1038] sm:%s158]
                %514 = vst [vmem:[%s166 + $0xad0] sm:%s158] %v513
                %v515 = vld [vmem:[%s165 + $0x1050] sm:%s158]
                %516 = vst [vmem:[%s166 + $0xae0] sm:%s158] %v515
                %v517 = vld [vmem:[%s165 + $0x1068] sm:%s158]
                %518 = vst [vmem:[%s166 + $0xaf0] sm:%s158] %v517
                %v519 = vld [vmem:[%s165 + $0x1080] sm:%s158]
                %520 = vst [vmem:[%s166 + $0xb00] sm:%s158] %v519
                %v521 = vld [vmem:[%s165 + $0x1098] sm:%s158]
                %522 = vst [vmem:[%s166 + $0xb10] sm:%s158] %v521
                %v523 = vld [vmem:[%s165 + $0x10b0] sm:%s158]
                %524 = vst [vmem:[%s166 + $0xb20] sm:%s158] %v523
                %v525 = vld [vmem:[%s165 + $0x10c8] sm:%s158]
                %526 = vst [vmem:[%s166 + $0xb30] sm:%s158] %v525
                %v527 = vld [vmem:[%s165 + $0x10e0] sm:%s158]
                %528 = vst [vmem:[%s166 + $0xb40] sm:%s158] %v527
                %v529 = vld [vmem:[%s165 + $0x10f8] sm:%s158]
                %530 = vst [vmem:[%s166 + $0xb50] sm:%s158] %v529
                %v531 = vld [vmem:[%s165 + $0x1110] sm:%s158]
                %532 = vst [vmem:[%s166 + $0xb60] sm:%s158] %v531
                %v533 = vld [vmem:[%s165 + $0x1128] sm:%s158]
                %534 = vst [vmem:[%s166 + $0xb70] sm:%s158] %v533
                %v535 = vld [vmem:[%s165 + $0x1140] sm:%s158]
                %536 = vst [vmem:[%s166 + $0xb80] sm:%s158] %v535
                %v537 = vld [vmem:[%s165 + $0x1158] sm:%s158]
                %538 = vst [vmem:[%s166 + $0xb90] sm:%s158] %v537
                %v539 = vld [vmem:[%s165 + $0x1170] sm:%s158]
                %540 = vst [vmem:[%s166 + $0xba0] sm:%s158] %v539
                %v541 = vld [vmem:[%s165 + $0x1188] sm:%s158]
                %542 = vst [vmem:[%s166 + $0xbb0] sm:%s158] %v541
                %v543 = vld [vmem:[%s165 + $0x11a0] sm:%s158]
                %544 = vst [vmem:[%s166 + $0xbc0] sm:%s158] %v543
                %v545 = vld [vmem:[%s165 + $0x11b8] sm:%s158]
                %546 = vst [vmem:[%s166 + $0xbd0] sm:%s158] %v545
                %v547 = vld [vmem:[%s165 + $0x11d0] sm:%s158]
                %548 = vst [vmem:[%s166 + $0xbe0] sm:%s158] %v547
                %v549 = vld [vmem:[%s165 + $0x11e8] sm:%s158]
                %550 = vst [vmem:[%s166 + $0xbf0] sm:%s158] %v549
                %v551 = vld [vmem:[%s165 + $0x1200] sm:%s158]
                %552 = vst [vmem:[%s166 + $0xc00] sm:%s158] %v551
                %v553 = vld [vmem:[%s165 + $0x1218] sm:%s158]
                %554 = vst [vmem:[%s166 + $0xc10] sm:%s158] %v553
                %v555 = vld [vmem:[%s165 + $0x1230] sm:%s158]
                %556 = vst [vmem:[%s166 + $0xc20] sm:%s158] %v555
                %v557 = vld [vmem:[%s165 + $0x1248] sm:%s158]
                %558 = vst [vmem:[%s166 + $0xc30] sm:%s158] %v557
                %v559 = vld [vmem:[%s165 + $0x1260] sm:%s158]
                %560 = vst [vmem:[%s166 + $0xc40] sm:%s158] %v559
                %v561 = vld [vmem:[%s165 + $0x1278] sm:%s158]
                %562 = vst [vmem:[%s166 + $0xc50] sm:%s158] %v561
                %v563 = vld [vmem:[%s165 + $0x1290] sm:%s158]
                %564 = vst [vmem:[%s166 + $0xc60] sm:%s158] %v563
                %v565 = vld [vmem:[%s165 + $0x12a8] sm:%s158]
                %566 = vst [vmem:[%s166 + $0xc70] sm:%s158] %v565
                %v567 = vld [vmem:[%s165 + $0x12c0] sm:%s158]
                %568 = vst [vmem:[%s166 + $0xc80] sm:%s158] %v567
                %v569 = vld [vmem:[%s165 + $0x12d8] sm:%s158]
                %570 = vst [vmem:[%s166 + $0xc90] sm:%s158] %v569
                %v571 = vld [vmem:[%s165 + $0x12f0] sm:%s158]
                %572 = vst [vmem:[%s166 + $0xca0] sm:%s158] %v571
                %v573 = vld [vmem:[%s165 + $0x1308] sm:%s158]
                %574 = vst [vmem:[%s166 + $0xcb0] sm:%s158] %v573
                %v575 = vld [vmem:[%s165 + $0x1320] sm:%s158]
                %576 = vst [vmem:[%s166 + $0xcc0] sm:%s158] %v575
                %v577 = vld [vmem:[%s165 + $0x1338] sm:%s158]
                %578 = vst [vmem:[%s166 + $0xcd0] sm:%s158] %v577
                %v579 = vld [vmem:[%s165 + $0x1350] sm:%s158]
                %580 = vst [vmem:[%s166 + $0xce0] sm:%s158] %v579
                %v581 = vld [vmem:[%s165 + $0x1368] sm:%s158]
                %582 = vst [vmem:[%s166 + $0xcf0] sm:%s158] %v581
                %v583 = vld [vmem:[%s165 + $0x1380] sm:%s158]
                %584 = vst [vmem:[%s166 + $0xd00] sm:%s158] %v583
                %v585 = vld [vmem:[%s165 + $0x1398] sm:%s158]
                %586 = vst [vmem:[%s166 + $0xd10] sm:%s158] %v585
                %v587 = vld [vmem:[%s165 + $0x13b0] sm:%s158]
                %588 = vst [vmem:[%s166 + $0xd20] sm:%s158] %v587
                %v589 = vld [vmem:[%s165 + $0x13c8] sm:%s158]
                %590 = vst [vmem:[%s166 + $0xd30] sm:%s158] %v589
                %v591 = vld [vmem:[%s165 + $0x13e0] sm:%s158]
                %592 = vst [vmem:[%s166 + $0xd40] sm:%s158] %v591
                %v593 = vld [vmem:[%s165 + $0x13f8] sm:%s158]
                %594 = vst [vmem:[%s166 + $0xd50] sm:%s158] %v593
                %v595 = vld [vmem:[%s165 + $0x1410] sm:%s158]
                %596 = vst [vmem:[%s166 + $0xd60] sm:%s158] %v595
                %v597 = vld [vmem:[%s165 + $0x1428] sm:%s158]
                %598 = vst [vmem:[%s166 + $0xd70] sm:%s158] %v597
                %v599 = vld [vmem:[%s165 + $0x1440] sm:%s158]
                %600 = vst [vmem:[%s166 + $0xd80] sm:%s158] %v599
                %v601 = vld [vmem:[%s165 + $0x1458] sm:%s158]
                %602 = vst [vmem:[%s166 + $0xd90] sm:%s158] %v601
                %v603 = vld [vmem:[%s165 + $0x1470] sm:%s158]
                %604 = vst [vmem:[%s166 + $0xda0] sm:%s158] %v603
                %v605 = vld [vmem:[%s165 + $0x1488] sm:%s158]
                %606 = vst [vmem:[%s166 + $0xdb0] sm:%s158] %v605
                %v607 = vld [vmem:[%s165 + $0x14a0] sm:%s158]
                %608 = vst [vmem:[%s166 + $0xdc0] sm:%s158] %v607
                %v609 = vld [vmem:[%s165 + $0x14b8] sm:%s158]
                %610 = vst [vmem:[%s166 + $0xdd0] sm:%s158] %v609
                %v611 = vld [vmem:[%s165 + $0x14d0] sm:%s158]
                %612 = vst [vmem:[%s166 + $0xde0] sm:%s158] %v611
                %v613 = vld [vmem:[%s165 + $0x14e8] sm:%s158]
                %614 = vst [vmem:[%s166 + $0xdf0] sm:%s158] %v613
                %v615 = vld [vmem:[%s165 + $0x1500] sm:%s158]
                %616 = vst [vmem:[%s166 + $0xe00] sm:%s158] %v615
                %v617 = vld [vmem:[%s165 + $0x1518] sm:%s158]
                %618 = vst [vmem:[%s166 + $0xe10] sm:%s158] %v617
                %v619 = vld [vmem:[%s165 + $0x1530] sm:%s158]
                %620 = vst [vmem:[%s166 + $0xe20] sm:%s158] %v619
                %v621 = vld [vmem:[%s165 + $0x1548] sm:%s158]
                %622 = vst [vmem:[%s166 + $0xe30] sm:%s158] %v621
                %v623 = vld [vmem:[%s165 + $0x1560] sm:%s158]
                %624 = vst [vmem:[%s166 + $0xe40] sm:%s158] %v623
                %v625 = vld [vmem:[%s165 + $0x1578] sm:%s158]
                %626 = vst [vmem:[%s166 + $0xe50] sm:%s158] %v625
                %v627 = vld [vmem:[%s165 + $0x1590] sm:%s158]
                %628 = vst [vmem:[%s166 + $0xe60] sm:%s158] %v627
                %v629 = vld [vmem:[%s165 + $0x15a8] sm:%s158]
                %630 = vst [vmem:[%s166 + $0xe70] sm:%s158] %v629
                %v631 = vld [vmem:[%s165 + $0x15c0] sm:%s158]
                %632 = vst [vmem:[%s166 + $0xe80] sm:%s158] %v631
                %v633 = vld [vmem:[%s165 + $0x15d8] sm:%s158]
                %634 = vst [vmem:[%s166 + $0xe90] sm:%s158] %v633
                %v635 = vld [vmem:[%s165 + $0x15f0] sm:%s158]
                %636 = vst [vmem:[%s166 + $0xea0] sm:%s158] %v635
                %v637 = vld [vmem:[%s165 + $0x1608] sm:%s158]
                %638 = vst [vmem:[%s166 + $0xeb0] sm:%s158] %v637
                %v639 = vld [vmem:[%s165 + $0x1620] sm:%s158]
                %640 = vst [vmem:[%s166 + $0xec0] sm:%s158] %v639
                %v641 = vld [vmem:[%s165 + $0x1638] sm:%s158]
                %642 = vst [vmem:[%s166 + $0xed0] sm:%s158] %v641
                %v643 = vld [vmem:[%s165 + $0x1650] sm:%s158]
                %644 = vst [vmem:[%s166 + $0xee0] sm:%s158] %v643
                %v645 = vld [vmem:[%s165 + $0x1668] sm:%s158]
                %646 = vst [vmem:[%s166 + $0xef0] sm:%s158] %v645
                %v647 = vld [vmem:[%s165 + $0x1680] sm:%s158]
                %648 = vst [vmem:[%s166 + $0xf00] sm:%s158] %v647
                %v649 = vld [vmem:[%s165 + $0x1698] sm:%s158]
                %650 = vst [vmem:[%s166 + $0xf10] sm:%s158] %v649
                %v651 = vld [vmem:[%s165 + $0x16b0] sm:%s158]
                %652 = vst [vmem:[%s166 + $0xf20] sm:%s158] %v651
                %v653 = vld [vmem:[%s165 + $0x16c8] sm:%s158]
                %654 = vst [vmem:[%s166 + $0xf30] sm:%s158] %v653
                %v655 = vld [vmem:[%s165 + $0x16e0] sm:%s158]
                %656 = vst [vmem:[%s166 + $0xf40] sm:%s158] %v655
                %v657 = vld [vmem:[%s165 + $0x16f8] sm:%s158]
                %658 = vst [vmem:[%s166 + $0xf50] sm:%s158] %v657
                %v659 = vld [vmem:[%s165 + $0x1710] sm:%s158]
                %660 = vst [vmem:[%s166 + $0xf60] sm:%s158] %v659
                %v661 = vld [vmem:[%s165 + $0x1728] sm:%s158]
                %662 = vst [vmem:[%s166 + $0xf70] sm:%s158] %v661
                %v663 = vld [vmem:[%s165 + $0x1740] sm:%s158]
                %664 = vst [vmem:[%s166 + $0xf80] sm:%s158] %v663
                %v665 = vld [vmem:[%s165 + $0x1758] sm:%s158]
                %666 = vst [vmem:[%s166 + $0xf90] sm:%s158] %v665
                %v667 = vld [vmem:[%s165 + $0x1770] sm:%s158]
                %668 = vst [vmem:[%s166 + $0xfa0] sm:%s158] %v667
                %v669 = vld [vmem:[%s165 + $0x1788] sm:%s158]
                %670 = vst [vmem:[%s166 + $0xfb0] sm:%s158] %v669
                %v671 = vld [vmem:[%s165 + $0x17a0] sm:%s158]
                %672 = vst [vmem:[%s166 + $0xfc0] sm:%s158] %v671
                %v673 = vld [vmem:[%s165 + $0x17b8] sm:%s158]
                %674 = vst [vmem:[%s166 + $0xfd0] sm:%s158] %v673
                %v675 = vld [vmem:[%s165 + $0x17d0] sm:%s158]
                %676 = vst [vmem:[%s166 + $0xfe0] sm:%s158] %v675
                %v677 = vld [vmem:[%s165 + $0x17e8] sm:%s158]
                %678 = vst [vmem:[%s166 + $0xff0] sm:%s158] %v677
                %v679 = vld [vmem:[%s165 + $0x1800] sm:%s158]
                %680 = vst [vmem:[%s166 + $0x1000] sm:%s158] %v679
                %v681 = vld [vmem:[%s165 + $0x1818] sm:%s158]
                %682 = vst [vmem:[%s166 + $0x1010] sm:%s158] %v681
              $region45: #{tpu_custom_call.1} parent=39 // loop_footer
                %s164 = sadd.s32 1, %s160
              $region46: #{tpu_custom_call.1} parent=39 // loop_footer_branch
                %159 = sbr.rel target = $region42
              $region47: #{tpu_custom_call.1} parent=39 // loop_exit
                _
            $region40: #{tpu_custom_call.1} parent=31 // pred_fallthru
              _
          $region32: #{tpu_custom_call.1} parent=27 // pred_fallthru
            _
          %2288 = vnop
        $region28: #{tpu_custom_call.1} parent=23 // pred_fallthru
          _
      $region24: #{tpu_custom_call.1} parent=5 // pred_fallthru
        _
      %p2289 = scmp.le.s32.totalorder 1, %s12
      %p2290 = scmp.lt.s32.totalorder %s12, 3
      %p2291 = pnand %p2289, %p2290
      %p2292 = pneg %p2291
      // Predicated region
      $region77: #{tpu_custom_call.1} parent=5 // pred_check
        _
      $region78: #{tpu_custom_call.1} parent=5 // pred_check_branch
        %2294 = sbr.rel (%p2291) target = $region80
      $region79: #{tpu_custom_call.1} parent=5 // pred_region
        %s2295 = ssub.s32 %s12, 1
        %s2296 = sand.u32 %s67, 1
        %s2297 = sand.u32 %s67, 1
        %s2298 = smul.addr %s2297, 4128
        %s2299 = scalar_lea.vmem [#allocation2], %s2298
        // Predicated region
        $region81: #{tpu_custom_call.1} parent=79 // pred_check
          %p2300 = pneg %p80
        $region82: #{tpu_custom_call.1} parent=79 // pred_check_branch
          %2302 = sbr.rel (%p2300) target = $region84
        $region83: #{tpu_custom_call.1} parent=79 // pred_region
          _
        $region84: #{tpu_custom_call.1} parent=79 // pred_fallthru
          _
        %p2303 = pneg %p33
        %p2304 = pneg %p30
        %p2305 = pneg %p54
        %p2306 = pneg %p51
        %s2307 = sand.u32 %s67, 1
        %s2308 = sand.u32 %s67, 1
        %s2309 = smul.addr %s2308, 4128
        %s2310 = scalar_lea.vmem [#allocation2], %s2309
        %p2311 = pneg %p80
        %p2312 = pneg %p77
        %p2313 = pneg %p106
        %p2314 = pneg %p103
        %s2315 = sand.u32 %s93, 1
        %s2316 = scalar_lea.sflag [#allocation4], %s2315
        %s2317 = sand.u32 %s93, 1
        %s2318 = smul.addr %s2317, 112
        %s2319 = scalar_lea.vmem [#allocation3], %s2318
        %s2320 = smul.u32 2, %s17
        %s2321 = ssub.s32 3, %s2320
        %p2322 = scmp.lt.s32.totalorder %s2321, 2
        %s2323 = scalar_select %p2322, %s2321, 2
        %s2324 = smul.u32 2064, %s2323
        %s2325 = smul.u32 2, %s17
        %s2326 = ssub.s32 3, %s2325
        %p2327 = scmp.lt.s32.totalorder %s2326, 2
        %s2328 = scalar_select %p2327, %s2326, 2
        %s2329 = smul.u32 56, %s2328
        %v2330 = vld [vmem:[%s0] sm:$0xff]
        %v2331 = vld [vmem:[%s0 + $0x8] sm:$0xff]
        %v2332 = vld [vmem:[%s0 + $0x10] sm:$0xff]
        %v2333 = vld [vmem:[%s0 + $0x18] sm:$0xff]
        %v2334 = vld [vmem:[%s0 + $0x20] sm:$0xff]
        %v2335 = vld [vmem:[%s0 + $0x28] sm:$0xff]
        %v2336 = vld [vmem:[%s0 + $0x30] sm:$0xff]
        %v2337 = vld [vmem:[%s0 + $0x38] sm:$0xff]
        %v2338 = vld [vmem:[%s0 + $0x40] sm:$0xff]
        %v2339 = vld [vmem:[%s0 + $0x48] sm:$0xff]
        %v2340 = vld [vmem:[%s0 + $0x50] sm:$0xff]
        %v2341 = vld [vmem:[%s0 + $0x58] sm:$0xff]
        %v2342 = vld [vmem:[%s0 + $0x60] sm:$0xff]
        %v2343 = vld [vmem:[%s0 + $0x68] sm:$0xff]
        %v2344 = vld [vmem:[%s0 + $0x70] sm:$0xff]
        %v2345 = vld [vmem:[%s0 + $0x78] sm:$0xff]
        %v2346 = vld [vmem:[%s0 + $0x80] sm:$0xff]
        %v2347 = vld [vmem:[%s0 + $0x88] sm:$0xff]
        %v2348 = vld [vmem:[%s0 + $0x90] sm:$0xff]
        %v2349 = vld [vmem:[%s0 + $0x98] sm:$0xff]
        %v2350 = vld [vmem:[%s0 + $0xa0] sm:$0xff]
        %v2351 = vld [vmem:[%s0 + $0xa8] sm:$0xff]
        %v2352 = vld [vmem:[%s0 + $0xb0] sm:$0xff]
        %v2353 = vld [vmem:[%s0 + $0xb8] sm:$0xff]
        %v2354 = vld [vmem:[%s0 + $0xc0] sm:$0xff]
        %v2355 = vld [vmem:[%s0 + $0xc8] sm:$0xff]
        %v2356 = vld [vmem:[%s0 + $0xd0] sm:$0xff]
        %v2357 = vld [vmem:[%s0 + $0xd8] sm:$0xff]
        %v2358 = vld [vmem:[%s0 + $0xe0] sm:$0xff]
        %v2359 = vld [vmem:[%s0 + $0xe8] sm:$0xff]
        %v2360 = vld [vmem:[%s0 + $0xf0] sm:$0xff]
        %v2361 = vld [vmem:[%s0 + $0xf8] sm:$0xff]
        %v2362 = vld [vmem:[%s0 + $0x100] sm:$0xff]
        %v2363 = vld [vmem:[%s0 + $0x108] sm:$0xff]
        %v2364 = vld [vmem:[%s0 + $0x110] sm:$0xff]
        %v2365 = vld [vmem:[%s0 + $0x118] sm:$0xff]
        %v2366 = vld [vmem:[%s0 + $0x120] sm:$0xff]
        %v2367 = vld [vmem:[%s0 + $0x128] sm:$0xff]
        %v2368 = vld [vmem:[%s0 + $0x130] sm:$0xff]
        %v2369 = vld [vmem:[%s0 + $0x138] sm:$0xff]
        %v2370 = vld [vmem:[%s0 + $0x140] sm:$0xff]
        %v2371 = vld [vmem:[%s0 + $0x148] sm:$0xff]
        %v2372 = vld [vmem:[%s0 + $0x150] sm:$0xff]
        %v2373 = vld [vmem:[%s0 + $0x158] sm:$0xff]
        %v2374 = vld [vmem:[%s0 + $0x160] sm:$0xff]
        %v2375 = vld [vmem:[%s0 + $0x168] sm:$0xff]
        %v2376 = vld [vmem:[%s0 + $0x170] sm:$0xff]
        %v2377 = vld [vmem:[%s0 + $0x178] sm:$0xff]
        %v2378 = vld [vmem:[%s0 + $0x180] sm:$0xff]
        %v2379 = vld [vmem:[%s0 + $0x188] sm:$0xff]
        %v2380 = vld [vmem:[%s0 + $0x190] sm:$0xff]
        %v2381 = vld [vmem:[%s0 + $0x198] sm:$0xff]
        %v2382 = vld [vmem:[%s0 + $0x1a0] sm:$0xff]
        %v2383 = vld [vmem:[%s0 + $0x1a8] sm:$0xff]
        %v2384 = vld [vmem:[%s0 + $0x1b0] sm:$0xff]
        %v2385 = vld [vmem:[%s0 + $0x1b8] sm:$0xff]
        %v2386 = vld [vmem:[%s0 + $0x1c0] sm:$0xff]
        %v2387 = vld [vmem:[%s0 + $0x1c8] sm:$0xff]
        %v2388 = vld [vmem:[%s0 + $0x1d0] sm:$0xff]
        %v2389 = vld [vmem:[%s0 + $0x1d8] sm:$0xff]
        %v2390 = vld [vmem:[%s0 + $0x1e0] sm:$0xff]
        %v2391 = vld [vmem:[%s0 + $0x1e8] sm:$0xff]
        %v2392 = vld [vmem:[%s0 + $0x1f0] sm:$0xff]
        %v2393 = vld [vmem:[%s0 + $0x1f8] sm:$0xff]
        %v2394 = vld [vmem:[%s0 + $0x200] sm:$0xff]
        %v2395 = vld [vmem:[%s0 + $0x208] sm:$0xff]
        %v2396 = vld [vmem:[%s0 + $0x210] sm:$0xff]
        %v2397 = vld [vmem:[%s0 + $0x218] sm:$0xff]
        %v2398 = vld [vmem:[%s0 + $0x220] sm:$0xff]
        %v2399 = vld [vmem:[%s0 + $0x228] sm:$0xff]
        %v2400 = vld [vmem:[%s0 + $0x230] sm:$0xff]
        %v2401 = vld [vmem:[%s0 + $0x238] sm:$0xff]
        %v2402 = vld [vmem:[%s0 + $0x240] sm:$0xff]
        %v2403 = vld [vmem:[%s0 + $0x248] sm:$0xff]
        %v2404 = vld [vmem:[%s0 + $0x250] sm:$0xff]
        %v2405 = vld [vmem:[%s0 + $0x258] sm:$0xff]
        %v2406 = vld [vmem:[%s0 + $0x260] sm:$0xff]
        %v2407 = vld [vmem:[%s0 + $0x268] sm:$0xff]
        %v2408 = vld [vmem:[%s0 + $0x270] sm:$0xff]
        %v2409 = vld [vmem:[%s0 + $0x278] sm:$0xff]
        %v2410 = vld [vmem:[%s0 + $0x280] sm:$0xff]
        %v2411 = vld [vmem:[%s0 + $0x288] sm:$0xff]
        %v2412 = vld [vmem:[%s0 + $0x290] sm:$0xff]
        %v2413 = vld [vmem:[%s0 + $0x298] sm:$0xff]
        %v2414 = vld [vmem:[%s0 + $0x2a0] sm:$0xff]
        %v2415 = vld [vmem:[%s0 + $0x2a8] sm:$0xff]
        %v2416 = vld [vmem:[%s0 + $0x2b0] sm:$0xff]
        %v2417 = vld [vmem:[%s0 + $0x2b8] sm:$0xff]
        %v2418 = vld [vmem:[%s0 + $0x2c0] sm:$0xff]
        %v2419 = vld [vmem:[%s0 + $0x2c8] sm:$0xff]
        %v2420 = vld [vmem:[%s0 + $0x2d0] sm:$0xff]
        %v2421 = vld [vmem:[%s0 + $0x2d8] sm:$0xff]
        %v2422 = vld [vmem:[%s0 + $0x2e0] sm:$0xff]
        %v2423 = vld [vmem:[%s0 + $0x2e8] sm:$0xff]
        %v2424 = vld [vmem:[%s0 + $0x2f0] sm:$0xff]
        %v2425 = vld [vmem:[%s0 + $0x2f8] sm:$0xff]
        %v2426 = vld [vmem:[%s0 + $0x300] sm:$0xff]
        %v2427 = vld [vmem:[%s0 + $0x308] sm:$0xff]
        %v2428 = vld [vmem:[%s0 + $0x310] sm:$0xff]
        %v2429 = vld [vmem:[%s0 + $0x318] sm:$0xff]
        %v2430 = vld [vmem:[%s0 + $0x320] sm:$0xff]
        %v2431 = vld [vmem:[%s0 + $0x328] sm:$0xff]
        %v2432 = vld [vmem:[%s0 + $0x330] sm:$0x1]
        %v2433 = vld [vmem:[%s0 + $0x338] sm:$0x1]
        %v2434 = vld [vmem:[%s0 + $0x340] sm:$0x1]
        %v2435 = vld [vmem:[%s0 + $0x348] sm:$0x1]
        %v2436 = vld [vmem:[%s0 + $0x350] sm:$0x1]
        %v2437 = vld [vmem:[%s0 + $0x358] sm:$0x1]
        %v2438 = vld [vmem:[%s0 + $0x360] sm:$0x1]
        %v2439 = vld [vmem:[%s0 + $0x368] sm:$0x1]
        %v2440 = vld [vmem:[%s0 + $0x370] sm:$0x1]
        %v2441 = vld [vmem:[%s0 + $0x378] sm:$0x1]
        %v2442 = vld [vmem:[%s0 + $0x380] sm:$0x1]
        %v2443 = vld [vmem:[%s0 + $0x388] sm:$0x1]
        %v2444 = vld [vmem:[%s0 + $0x390] sm:$0x1]
        %v2445 = vld [vmem:[%s0 + $0x398] sm:$0x1]
        %v2446 = vld [vmem:[%s0 + $0x3a0] sm:$0x1]
        %v2447 = vld [vmem:[%s0 + $0x3a8] sm:$0x1]
        %v2448 = vld [vmem:[%s0 + $0x3b0] sm:$0x1]
        %v2449 = vld [vmem:[%s1] sm:$0xff]
        %v2450 = vld [vmem:[%s1 + $0x8] sm:$0xff]
        %v2451 = vld [vmem:[%s1 + $0x10] sm:$0x1]
        %v2455 = vperm.slane %v2449, 0
        %v2456 = vperm.slane %v2449, 1
        %v2457 = vperm.slane %v2449, 2
        %v2458 = vperm.slane %v2449, 3
        %v2459 = vperm.slane %v2449, 4
        %v2460 = vperm.slane %v2449, 5
        %v2461 = vperm.slane %v2449, 6
        %v2462 = vperm.slane %v2449, 7
        %v2463 = vperm.slane %v2450, 0
        %v2464 = vperm.slane %v2450, 1
        %v2465 = vperm.slane %v2450, 2
        %v2466 = vperm.slane %v2450, 3
        %v2467 = vperm.slane %v2450, 4
        %v2468 = vperm.slane %v2450, 5
        %v2469 = vperm.slane %v2450, 6
        %v2470 = vperm.slane %v2450, 7
        %v2471 = vperm.slane %v2451, 0
        %v2489 = vmul.f32 %v2330, %v2455
        %v2490 = vmul.f32 %v2331, %v2456
        %v2491 = vmul.f32 %v2332, %v2457
        %v2492 = vmul.f32 %v2333, %v2458
        %v2493 = vmul.f32 %v2334, %v2459
        %v2494 = vmul.f32 %v2335, %v2460
        %v2495 = vmul.f32 %v2336, %v2461
        %v2496 = vmul.f32 %v2337, %v2462
        %v2497 = vmul.f32 %v2338, %v2463
        %v2498 = vmul.f32 %v2339, %v2464
        %v2499 = vmul.f32 %v2340, %v2465
        %v2500 = vmul.f32 %v2341, %v2466
        %v2501 = vmul.f32 %v2342, %v2467
        %v2502 = vmul.f32 %v2343, %v2468
        %v2503 = vmul.f32 %v2344, %v2469
        %v2504 = vmul.f32 %v2345, %v2470
        %v2505 = vmul.f32 %v2346, %v2471
        %v2506 = vmul.f32 %v2347, %v2455
        %v2507 = vmul.f32 %v2348, %v2456
        %v2508 = vmul.f32 %v2349, %v2457
        %v2509 = vmul.f32 %v2350, %v2458
        %v2510 = vmul.f32 %v2351, %v2459
        %v2511 = vmul.f32 %v2352, %v2460
        %v2512 = vmul.f32 %v2353, %v2461
        %v2513 = vmul.f32 %v2354, %v2462
        %v2514 = vmul.f32 %v2355, %v2463
        %v2515 = vmul.f32 %v2356, %v2464
        %v2516 = vmul.f32 %v2357, %v2465
        %v2517 = vmul.f32 %v2358, %v2466
        %v2518 = vmul.f32 %v2359, %v2467
        %v2519 = vmul.f32 %v2360, %v2468
        %v2520 = vmul.f32 %v2361, %v2469
        %v2521 = vmul.f32 %v2362, %v2470
        %v2522 = vmul.f32 %v2363, %v2471
        %v2523 = vmul.f32 %v2364, %v2455
        %v2524 = vmul.f32 %v2365, %v2456
        %v2525 = vmul.f32 %v2366, %v2457
        %v2526 = vmul.f32 %v2367, %v2458
        %v2527 = vmul.f32 %v2368, %v2459
        %v2528 = vmul.f32 %v2369, %v2460
        %v2529 = vmul.f32 %v2370, %v2461
        %v2530 = vmul.f32 %v2371, %v2462
        %v2531 = vmul.f32 %v2372, %v2463
        %v2532 = vmul.f32 %v2373, %v2464
        %v2533 = vmul.f32 %v2374, %v2465
        %v2534 = vmul.f32 %v2375, %v2466
        %v2535 = vmul.f32 %v2376, %v2467
        %v2536 = vmul.f32 %v2377, %v2468
        %v2537 = vmul.f32 %v2378, %v2469
        %v2538 = vmul.f32 %v2379, %v2470
        %v2539 = vmul.f32 %v2380, %v2471
        %v2540 = vmul.f32 %v2381, %v2455
        %v2541 = vmul.f32 %v2382, %v2456
        %v2542 = vmul.f32 %v2383, %v2457
        %v2543 = vmul.f32 %v2384, %v2458
        %v2544 = vmul.f32 %v2385, %v2459
        %v2545 = vmul.f32 %v2386, %v2460
        %v2546 = vmul.f32 %v2387, %v2461
        %v2547 = vmul.f32 %v2388, %v2462
        %v2548 = vmul.f32 %v2389, %v2463
        %v2549 = vmul.f32 %v2390, %v2464
        %v2550 = vmul.f32 %v2391, %v2465
        %v2551 = vmul.f32 %v2392, %v2466
        %v2552 = vmul.f32 %v2393, %v2467
        %v2553 = vmul.f32 %v2394, %v2468
        %v2554 = vmul.f32 %v2395, %v2469
        %v2555 = vmul.f32 %v2396, %v2470
        %v2556 = vmul.f32 %v2397, %v2471
        %v2557 = vmul.f32 %v2398, %v2455
        %v2558 = vmul.f32 %v2399, %v2456
        %v2559 = vmul.f32 %v2400, %v2457
        %v2560 = vmul.f32 %v2401, %v2458
        %v2561 = vmul.f32 %v2402, %v2459
        %v2562 = vmul.f32 %v2403, %v2460
        %v2563 = vmul.f32 %v2404, %v2461
        %v2564 = vmul.f32 %v2405, %v2462
        %v2565 = vmul.f32 %v2406, %v2463
        %v2566 = vmul.f32 %v2407, %v2464
        %v2567 = vmul.f32 %v2408, %v2465
        %v2568 = vmul.f32 %v2409, %v2466
        %v2569 = vmul.f32 %v2410, %v2467
        %v2570 = vmul.f32 %v2411, %v2468
        %v2571 = vmul.f32 %v2412, %v2469
        %v2572 = vmul.f32 %v2413, %v2470
        %v2573 = vmul.f32 %v2414, %v2471
        %v2574 = vmul.f32 %v2415, %v2455
        %v2575 = vmul.f32 %v2416, %v2456
        %v2576 = vmul.f32 %v2417, %v2457
        %v2577 = vmul.f32 %v2418, %v2458
        %v2578 = vmul.f32 %v2419, %v2459
        %v2579 = vmul.f32 %v2420, %v2460
        %v2580 = vmul.f32 %v2421, %v2461
        %v2581 = vmul.f32 %v2422, %v2462
        %v2582 = vmul.f32 %v2423, %v2463
        %v2583 = vmul.f32 %v2424, %v2464
        %v2584 = vmul.f32 %v2425, %v2465
        %v2585 = vmul.f32 %v2426, %v2466
        %v2586 = vmul.f32 %v2427, %v2467
        %v2587 = vmul.f32 %v2428, %v2468
        %v2588 = vmul.f32 %v2429, %v2469
        %v2589 = vmul.f32 %v2430, %v2470
        %v2590 = vmul.f32 %v2431, %v2471
        %v2591 = vmul.f32 %v2432, %v2455
        %v2592 = vmul.f32 %v2433, %v2456
        %v2593 = vmul.f32 %v2434, %v2457
        %v2594 = vmul.f32 %v2435, %v2458
        %v2595 = vmul.f32 %v2436, %v2459
        %v2596 = vmul.f32 %v2437, %v2460
        %v2597 = vmul.f32 %v2438, %v2461
        %v2598 = vmul.f32 %v2439, %v2462
        %v2599 = vmul.f32 %v2440, %v2463
        %v2600 = vmul.f32 %v2441, %v2464
        %v2601 = vmul.f32 %v2442, %v2465
        %v2602 = vmul.f32 %v2443, %v2466
        %v2603 = vmul.f32 %v2444, %v2467
        %v2604 = vmul.f32 %v2445, %v2468
        %v2605 = vmul.f32 %v2446, %v2469
        %v2606 = vmul.f32 %v2447, %v2470
        %v2607 = vmul.f32 %v2448, %v2471
        %v2608 = vld [vmem:[%s2299] sm:$0xff]
        %v2609 = vld [vmem:[%s2299 + $0x8] sm:$0xff]
        %v2610 = vld [vmem:[%s2299 + $0x10] sm:$0xff]
        %v2611 = vld [vmem:[%s2299 + $0x18] sm:$0xff]
        %v2612 = vld [vmem:[%s2299 + $0x20] sm:$0xff]
        %v2613 = vld [vmem:[%s2299 + $0x28] sm:$0xff]
        %v2614 = vld [vmem:[%s2299 + $0x30] sm:$0xff]
        %v2615 = vld [vmem:[%s2299 + $0x38] sm:$0xff]
        %v2616 = vld [vmem:[%s2299 + $0x40] sm:$0xff]
        %v2617 = vld [vmem:[%s2299 + $0x48] sm:$0xff]
        %v2618 = vld [vmem:[%s2299 + $0x50] sm:$0xff]
        %v2619 = vld [vmem:[%s2299 + $0x58] sm:$0xff]
        %v2620 = vld [vmem:[%s2299 + $0x60] sm:$0xff]
        %v2621 = vld [vmem:[%s2299 + $0x68] sm:$0xff]
        %v2622 = vld [vmem:[%s2299 + $0x70] sm:$0xff]
        %v2623 = vld [vmem:[%s2299 + $0x78] sm:$0xff]
        %v2624 = vld [vmem:[%s2299 + $0x80] sm:$0xff]
        %v2625 = vld [vmem:[%s2299 + $0x88] sm:$0xff]
        %v2626 = vld [vmem:[%s2299 + $0x90] sm:$0xff]
        %v2627 = vld [vmem:[%s2299 + $0x98] sm:$0xff]
        %v2628 = vld [vmem:[%s2299 + $0xa0] sm:$0xff]
        %v2629 = vld [vmem:[%s2299 + $0xa8] sm:$0xff]
        %v2630 = vld [vmem:[%s2299 + $0xb0] sm:$0xff]
        %v2631 = vld [vmem:[%s2299 + $0xb8] sm:$0xff]
        %v2632 = vld [vmem:[%s2299 + $0xc0] sm:$0xff]
        %v2633 = vld [vmem:[%s2299 + $0xc8] sm:$0xff]
        %v2634 = vld [vmem:[%s2299 + $0xd0] sm:$0xff]
        %v2635 = vld [vmem:[%s2299 + $0xd8] sm:$0xff]
        %v2636 = vld [vmem:[%s2299 + $0xe0] sm:$0xff]
        %v2637 = vld [vmem:[%s2299 + $0xe8] sm:$0xff]
        %v2638 = vld [vmem:[%s2299 + $0xf0] sm:$0xff]
        %v2639 = vld [vmem:[%s2299 + $0xf8] sm:$0xff]
        %v2640 = vld [vmem:[%s2299 + $0x100] sm:$0xff]
        %v2641 = vld [vmem:[%s2299 + $0x108] sm:$0xff]
        %v2642 = vld [vmem:[%s2299 + $0x110] sm:$0xff]
        %v2643 = vld [vmem:[%s2299 + $0x118] sm:$0xff]
        %v2644 = vld [vmem:[%s2299 + $0x120] sm:$0xff]
        %v2645 = vld [vmem:[%s2299 + $0x128] sm:$0xff]
        %v2646 = vld [vmem:[%s2299 + $0x130] sm:$0xff]
        %v2647 = vld [vmem:[%s2299 + $0x138] sm:$0xff]
        %v2648 = vld [vmem:[%s2299 + $0x140] sm:$0xff]
        %v2649 = vld [vmem:[%s2299 + $0x148] sm:$0xff]
        %v2650 = vld [vmem:[%s2299 + $0x150] sm:$0xff]
        %v2651 = vld [vmem:[%s2299 + $0x158] sm:$0xff]
        %v2652 = vld [vmem:[%s2299 + $0x160] sm:$0xff]
        %v2653 = vld [vmem:[%s2299 + $0x168] sm:$0xff]
        %v2654 = vld [vmem:[%s2299 + $0x170] sm:$0xff]
        %v2655 = vld [vmem:[%s2299 + $0x178] sm:$0xff]
        %v2656 = vld [vmem:[%s2299 + $0x180] sm:$0xff]
        %v2657 = vld [vmem:[%s2299 + $0x188] sm:$0xff]
        %v2658 = vld [vmem:[%s2299 + $0x190] sm:$0xff]
        %v2659 = vld [vmem:[%s2299 + $0x198] sm:$0xff]
        %v2660 = vld [vmem:[%s2299 + $0x1a0] sm:$0xff]
        %v2661 = vld [vmem:[%s2299 + $0x1a8] sm:$0xff]
        %v2662 = vld [vmem:[%s2299 + $0x1b0] sm:$0xff]
        %v2663 = vld [vmem:[%s2299 + $0x1b8] sm:$0xff]
        %v2664 = vld [vmem:[%s2299 + $0x1c0] sm:$0xff]
        %v2665 = vld [vmem:[%s2299 + $0x1c8] sm:$0xff]
        %v2666 = vld [vmem:[%s2299 + $0x1d0] sm:$0xff]
        %v2667 = vld [vmem:[%s2299 + $0x1d8] sm:$0xff]
        %v2668 = vld [vmem:[%s2299 + $0x1e0] sm:$0xff]
        %v2669 = vld [vmem:[%s2299 + $0x1e8] sm:$0xff]
        %v2670 = vld [vmem:[%s2299 + $0x1f0] sm:$0xff]
        %v2671 = vld [vmem:[%s2299 + $0x1f8] sm:$0xff]
        %v2672 = vld [vmem:[%s2299 + $0x200] sm:$0xff]
        %v2673 = vld [vmem:[%s2299 + $0x208] sm:$0xff]
        %v2674 = vld [vmem:[%s2299 + $0x210] sm:$0xff]
        %v2675 = vld [vmem:[%s2299 + $0x218] sm:$0xff]
        %v2676 = vld [vmem:[%s2299 + $0x220] sm:$0xff]
        %v2677 = vld [vmem:[%s2299 + $0x228] sm:$0xff]
        %v2678 = vld [vmem:[%s2299 + $0x230] sm:$0xff]
        %v2679 = vld [vmem:[%s2299 + $0x238] sm:$0xff]
        %v2680 = vld [vmem:[%s2299 + $0x240] sm:$0xff]
        %v2681 = vld [vmem:[%s2299 + $0x248] sm:$0xff]
        %v2682 = vld [vmem:[%s2299 + $0x250] sm:$0xff]
        %v2683 = vld [vmem:[%s2299 + $0x258] sm:$0xff]
        %v2684 = vld [vmem:[%s2299 + $0x260] sm:$0xff]
        %v2685 = vld [vmem:[%s2299 + $0x268] sm:$0xff]
        %v2686 = vld [vmem:[%s2299 + $0x270] sm:$0xff]
        %v2687 = vld [vmem:[%s2299 + $0x278] sm:$0xff]
        %v2688 = vld [vmem:[%s2299 + $0x280] sm:$0xff]
        %v2689 = vld [vmem:[%s2299 + $0x288] sm:$0xff]
        %v2690 = vld [vmem:[%s2299 + $0x290] sm:$0xff]
        %v2691 = vld [vmem:[%s2299 + $0x298] sm:$0xff]
        %v2692 = vld [vmem:[%s2299 + $0x2a0] sm:$0xff]
        %v2693 = vld [vmem:[%s2299 + $0x2a8] sm:$0xff]
        %v2694 = vld [vmem:[%s2299 + $0x2b0] sm:$0xff]
        %v2695 = vld [vmem:[%s2299 + $0x2b8] sm:$0xff]
        %v2696 = vld [vmem:[%s2299 + $0x2c0] sm:$0xff]
        %v2697 = vld [vmem:[%s2299 + $0x2c8] sm:$0xff]
        %v2698 = vld [vmem:[%s2299 + $0x2d0] sm:$0xff]
        %v2699 = vld [vmem:[%s2299 + $0x2d8] sm:$0xff]
        %v2700 = vld [vmem:[%s2299 + $0x2e0] sm:$0xff]
        %v2701 = vld [vmem:[%s2299 + $0x2e8] sm:$0xff]
        %v2702 = vld [vmem:[%s2299 + $0x2f0] sm:$0xff]
        %v2703 = vld [vmem:[%s2299 + $0x2f8] sm:$0xff]
        %v2704 = vld [vmem:[%s2299 + $0x300] sm:$0xff]
        %v2705 = vld [vmem:[%s2299 + $0x308] sm:$0xff]
        %v2706 = vld [vmem:[%s2299 + $0x310] sm:$0xff]
        %v2707 = vld [vmem:[%s2299 + $0x318] sm:$0xff]
        %v2708 = vld [vmem:[%s2299 + $0x320] sm:$0xff]
        %v2709 = vld [vmem:[%s2299 + $0x328] sm:$0xff]
        %v2710 = vld [vmem:[%s2299 + $0x330] sm:$0xff]
        %v2711 = vld [vmem:[%s2299 + $0x338] sm:$0xff]
        %v2712 = vld [vmem:[%s2299 + $0x340] sm:$0xff]
        %v2713 = vld [vmem:[%s2299 + $0x348] sm:$0xff]
        %v2714 = vld [vmem:[%s2299 + $0x350] sm:$0xff]
        %v2715 = vld [vmem:[%s2299 + $0x358] sm:$0xff]
        %v2716 = vld [vmem:[%s2299 + $0x360] sm:$0xff]
        %v2717 = vld [vmem:[%s2299 + $0x368] sm:$0xff]
        %v2718 = vld [vmem:[%s2299 + $0x370] sm:$0xff]
        %v2719 = vld [vmem:[%s2299 + $0x378] sm:$0xff]
        %v2720 = vld [vmem:[%s2299 + $0x380] sm:$0xff]
        %v2721 = vld [vmem:[%s2299 + $0x388] sm:$0xff]
        %v2722 = vld [vmem:[%s2299 + $0x390] sm:$0xff]
        %v2723 = vld [vmem:[%s2299 + $0x398] sm:$0xff]
        %v2724 = vld [vmem:[%s2299 + $0x3a0] sm:$0xff]
        %v2725 = vld [vmem:[%s2299 + $0x3a8] sm:$0xff]
        %v2726 = vld [vmem:[%s2299 + $0x3b0] sm:$0xff]
        %v2727 = vld [vmem:[%s2299 + $0x3b8] sm:$0xff]
        %v2728 = vld [vmem:[%s2299 + $0x3c0] sm:$0xff]
        %v2729 = vld [vmem:[%s2299 + $0x3c8] sm:$0xff]
        %v2730 = vld [vmem:[%s2299 + $0x3d0] sm:$0xff]
        %v2731 = vld [vmem:[%s2299 + $0x3d8] sm:$0xff]
        %v2732 = vld [vmem:[%s2299 + $0x3e0] sm:$0xff]
        %v2733 = vld [vmem:[%s2299 + $0x3e8] sm:$0xff]
        %v2734 = vld [vmem:[%s2299 + $0x3f0] sm:$0xff]
        %v2735 = vld [vmem:[%s2299 + $0x3f8] sm:$0xff]
        %v2736 = vld [vmem:[%s2299 + $0x400] sm:$0xff]
        %v2737 = vld [vmem:[%s2299 + $0x408] sm:$0xff]
        %v2738 = vld [vmem:[%s2299 + $0x410] sm:$0xff]
        %v2739 = vld [vmem:[%s2299 + $0x418] sm:$0xff]
        %v2740 = vld [vmem:[%s2299 + $0x420] sm:$0xff]
        %v2741 = vld [vmem:[%s2299 + $0x428] sm:$0xff]
        %v2742 = vld [vmem:[%s2299 + $0x430] sm:$0xff]
        %v2743 = vld [vmem:[%s2299 + $0x438] sm:$0xff]
        %v2744 = vld [vmem:[%s2299 + $0x440] sm:$0xff]
        %v2745 = vld [vmem:[%s2299 + $0x448] sm:$0xff]
        %v2746 = vld [vmem:[%s2299 + $0x450] sm:$0xff]
        %v2747 = vld [vmem:[%s2299 + $0x458] sm:$0xff]
        %v2748 = vld [vmem:[%s2299 + $0x460] sm:$0xff]
        %v2749 = vld [vmem:[%s2299 + $0x468] sm:$0xff]
        %v2750 = vld [vmem:[%s2299 + $0x470] sm:$0xff]
        %v2751 = vld [vmem:[%s2299 + $0x478] sm:$0xff]
        %v2752 = vld [vmem:[%s2299 + $0x480] sm:$0xff]
        %v2753 = vld [vmem:[%s2299 + $0x488] sm:$0xff]
        %v2754 = vld [vmem:[%s2299 + $0x490] sm:$0xff]
        %v2755 = vld [vmem:[%s2299 + $0x498] sm:$0xff]
        %v2756 = vld [vmem:[%s2299 + $0x4a0] sm:$0xff]
        %v2757 = vld [vmem:[%s2299 + $0x4a8] sm:$0xff]
        %v2758 = vld [vmem:[%s2299 + $0x4b0] sm:$0xff]
        %v2759 = vld [vmem:[%s2299 + $0x4b8] sm:$0xff]
        %v2760 = vld [vmem:[%s2299 + $0x4c0] sm:$0xff]
        %v2761 = vld [vmem:[%s2299 + $0x4c8] sm:$0xff]
        %v2762 = vld [vmem:[%s2299 + $0x4d0] sm:$0xff]
        %v2763 = vld [vmem:[%s2299 + $0x4d8] sm:$0xff]
        %v2764 = vld [vmem:[%s2299 + $0x4e0] sm:$0xff]
        %v2765 = vld [vmem:[%s2299 + $0x4e8] sm:$0xff]
        %v2766 = vld [vmem:[%s2299 + $0x4f0] sm:$0xff]
        %v2767 = vld [vmem:[%s2299 + $0x4f8] sm:$0xff]
        %v2768 = vld [vmem:[%s2299 + $0x500] sm:$0xff]
        %v2769 = vld [vmem:[%s2299 + $0x508] sm:$0xff]
        %v2770 = vld [vmem:[%s2299 + $0x510] sm:$0xff]
        %v2771 = vld [vmem:[%s2299 + $0x518] sm:$0xff]
        %v2772 = vld [vmem:[%s2299 + $0x520] sm:$0xff]
        %v2773 = vld [vmem:[%s2299 + $0x528] sm:$0xff]
        %v2774 = vld [vmem:[%s2299 + $0x530] sm:$0xff]
        %v2775 = vld [vmem:[%s2299 + $0x538] sm:$0xff]
        %v2776 = vld [vmem:[%s2299 + $0x540] sm:$0xff]
        %v2777 = vld [vmem:[%s2299 + $0x548] sm:$0xff]
        %v2778 = vld [vmem:[%s2299 + $0x550] sm:$0xff]
        %v2779 = vld [vmem:[%s2299 + $0x558] sm:$0xff]
        %v2780 = vld [vmem:[%s2299 + $0x560] sm:$0xff]
        %v2781 = vld [vmem:[%s2299 + $0x568] sm:$0xff]
        %v2782 = vld [vmem:[%s2299 + $0x570] sm:$0xff]
        %v2783 = vld [vmem:[%s2299 + $0x578] sm:$0xff]
        %v2784 = vld [vmem:[%s2299 + $0x580] sm:$0xff]
        %v2785 = vld [vmem:[%s2299 + $0x588] sm:$0xff]
        %v2786 = vld [vmem:[%s2299 + $0x590] sm:$0xff]
        %v2787 = vld [vmem:[%s2299 + $0x598] sm:$0xff]
        %v2788 = vld [vmem:[%s2299 + $0x5a0] sm:$0xff]
        %v2789 = vld [vmem:[%s2299 + $0x5a8] sm:$0xff]
        %v2790 = vld [vmem:[%s2299 + $0x5b0] sm:$0xff]
        %v2791 = vld [vmem:[%s2299 + $0x5b8] sm:$0xff]
        %v2792 = vld [vmem:[%s2299 + $0x5c0] sm:$0xff]
        %v2793 = vld [vmem:[%s2299 + $0x5c8] sm:$0xff]
        %v2794 = vld [vmem:[%s2299 + $0x5d0] sm:$0xff]
        %v2795 = vld [vmem:[%s2299 + $0x5d8] sm:$0xff]
        %v2796 = vld [vmem:[%s2299 + $0x5e0] sm:$0xff]
        %v2797 = vld [vmem:[%s2299 + $0x5e8] sm:$0xff]
        %v2798 = vld [vmem:[%s2299 + $0x5f0] sm:$0xff]
        %v2799 = vld [vmem:[%s2299 + $0x5f8] sm:$0xff]
        %v2800 = vld [vmem:[%s2299 + $0x600] sm:$0xff]
        %v2801 = vld [vmem:[%s2299 + $0x608] sm:$0xff]
        %v2802 = vld [vmem:[%s2299 + $0x610] sm:$0xff]
        %v2803 = vld [vmem:[%s2299 + $0x618] sm:$0xff]
        %v2804 = vld [vmem:[%s2299 + $0x620] sm:$0xff]
        %v2805 = vld [vmem:[%s2299 + $0x628] sm:$0xff]
        %v2806 = vld [vmem:[%s2299 + $0x630] sm:$0xff]
        %v2807 = vld [vmem:[%s2299 + $0x638] sm:$0xff]
        %v2808 = vld [vmem:[%s2299 + $0x640] sm:$0xff]
        %v2809 = vld [vmem:[%s2299 + $0x648] sm:$0xff]
        %v2810 = vld [vmem:[%s2299 + $0x650] sm:$0xff]
        %v2811 = vld [vmem:[%s2299 + $0x658] sm:$0xff]
        %v2812 = vld [vmem:[%s2299 + $0x660] sm:$0xff]
        %v2813 = vld [vmem:[%s2299 + $0x668] sm:$0xff]
        %v2814 = vld [vmem:[%s2299 + $0x670] sm:$0xff]
        %v2815 = vld [vmem:[%s2299 + $0x678] sm:$0xff]
        %v2816 = vld [vmem:[%s2299 + $0x680] sm:$0xff]
        %v2817 = vld [vmem:[%s2299 + $0x688] sm:$0xff]
        %v2818 = vld [vmem:[%s2299 + $0x690] sm:$0xff]
        %v2819 = vld [vmem:[%s2299 + $0x698] sm:$0xff]
        %v2820 = vld [vmem:[%s2299 + $0x6a0] sm:$0xff]
        %v2821 = vld [vmem:[%s2299 + $0x6a8] sm:$0xff]
        %v2822 = vld [vmem:[%s2299 + $0x6b0] sm:$0xff]
        %v2823 = vld [vmem:[%s2299 + $0x6b8] sm:$0xff]
        %v2824 = vld [vmem:[%s2299 + $0x6c0] sm:$0xff]
        %v2825 = vld [vmem:[%s2299 + $0x6c8] sm:$0xff]
        %v2826 = vld [vmem:[%s2299 + $0x6d0] sm:$0xff]
        %v2827 = vld [vmem:[%s2299 + $0x6d8] sm:$0xff]
        %v2828 = vld [vmem:[%s2299 + $0x6e0] sm:$0xff]
        %v2829 = vld [vmem:[%s2299 + $0x6e8] sm:$0xff]
        %v2830 = vld [vmem:[%s2299 + $0x6f0] sm:$0xff]
        %v2831 = vld [vmem:[%s2299 + $0x6f8] sm:$0xff]
        %v2832 = vld [vmem:[%s2299 + $0x700] sm:$0xff]
        %v2833 = vld [vmem:[%s2299 + $0x708] sm:$0xff]
        %v2834 = vld [vmem:[%s2299 + $0x710] sm:$0xff]
        %v2835 = vld [vmem:[%s2299 + $0x718] sm:$0xff]
        %v2836 = vld [vmem:[%s2299 + $0x720] sm:$0xff]
        %v2837 = vld [vmem:[%s2299 + $0x728] sm:$0xff]
        %v2838 = vld [vmem:[%s2299 + $0x730] sm:$0xff]
        %v2839 = vld [vmem:[%s2299 + $0x738] sm:$0xff]
        %v2840 = vld [vmem:[%s2299 + $0x740] sm:$0xff]
        %v2841 = vld [vmem:[%s2299 + $0x748] sm:$0xff]
        %v2842 = vld [vmem:[%s2299 + $0x750] sm:$0xff]
        %v2843 = vld [vmem:[%s2299 + $0x758] sm:$0xff]
        %v2844 = vld [vmem:[%s2299 + $0x760] sm:$0xff]
        %v2845 = vld [vmem:[%s2299 + $0x768] sm:$0xff]
        %v2846 = vld [vmem:[%s2299 + $0x770] sm:$0xff]
        %v2847 = vld [vmem:[%s2299 + $0x778] sm:$0xff]
        %v2848 = vld [vmem:[%s2299 + $0x780] sm:$0xff]
        %v2849 = vld [vmem:[%s2299 + $0x788] sm:$0xff]
        %v2850 = vld [vmem:[%s2299 + $0x790] sm:$0xff]
        %v2851 = vld [vmem:[%s2299 + $0x798] sm:$0xff]
        %v2852 = vld [vmem:[%s2299 + $0x7a0] sm:$0xff]
        %v2853 = vld [vmem:[%s2299 + $0x7a8] sm:$0xff]
        %v2854 = vld [vmem:[%s2299 + $0x7b0] sm:$0xff]
        %v2855 = vld [vmem:[%s2299 + $0x7b8] sm:$0xff]
        %v2856 = vld [vmem:[%s2299 + $0x7c0] sm:$0xff]
        %v2857 = vld [vmem:[%s2299 + $0x7c8] sm:$0xff]
        %v2858 = vld [vmem:[%s2299 + $0x7d0] sm:$0xff]
        %v2859 = vld [vmem:[%s2299 + $0x7d8] sm:$0xff]
        %v2860 = vld [vmem:[%s2299 + $0x7e0] sm:$0xff]
        %v2861 = vld [vmem:[%s2299 + $0x7e8] sm:$0xff]
        %v2862 = vld [vmem:[%s2299 + $0x7f0] sm:$0xff]
        %v2863 = vld [vmem:[%s2299 + $0x7f8] sm:$0xff]
        %v2864 = vld [vmem:[%s2299 + $0x800] sm:$0xff]
        %v2865 = vld [vmem:[%s2299 + $0x808] sm:$0xff]
        %v2866 = vld [vmem:[%s2299 + $0x810] sm:$0xff]
        %v2867 = vld [vmem:[%s2299 + $0x818] sm:$0xff]
        %v2868 = vld [vmem:[%s2299 + $0x820] sm:$0xff]
        %v2869 = vld [vmem:[%s2299 + $0x828] sm:$0xff]
        %v2870 = vld [vmem:[%s2299 + $0x830] sm:$0xff]
        %v2871 = vld [vmem:[%s2299 + $0x838] sm:$0xff]
        %v2872 = vld [vmem:[%s2299 + $0x840] sm:$0xff]
        %v2873 = vld [vmem:[%s2299 + $0x848] sm:$0xff]
        %v2874 = vld [vmem:[%s2299 + $0x850] sm:$0xff]
        %v2875 = vld [vmem:[%s2299 + $0x858] sm:$0xff]
        %v2876 = vld [vmem:[%s2299 + $0x860] sm:$0xff]
        %v2877 = vld [vmem:[%s2299 + $0x868] sm:$0xff]
        %v2878 = vld [vmem:[%s2299 + $0x870] sm:$0xff]
        %v2879 = vld [vmem:[%s2299 + $0x878] sm:$0xff]
        %v2880 = vld [vmem:[%s2299 + $0x880] sm:$0xff]
        %v2881 = vld [vmem:[%s2299 + $0x888] sm:$0xff]
        %v2882 = vld [vmem:[%s2299 + $0x890] sm:$0xff]
        %v2883 = vld [vmem:[%s2299 + $0x898] sm:$0xff]
        %v2884 = vld [vmem:[%s2299 + $0x8a0] sm:$0xff]
        %v2885 = vld [vmem:[%s2299 + $0x8a8] sm:$0xff]
        %v2886 = vld [vmem:[%s2299 + $0x8b0] sm:$0xff]
        %v2887 = vld [vmem:[%s2299 + $0x8b8] sm:$0xff]
        %v2888 = vld [vmem:[%s2299 + $0x8c0] sm:$0xff]
        %v2889 = vld [vmem:[%s2299 + $0x8c8] sm:$0xff]
        %v2890 = vld [vmem:[%s2299 + $0x8d0] sm:$0xff]
        %v2891 = vld [vmem:[%s2299 + $0x8d8] sm:$0xff]
        %v2892 = vld [vmem:[%s2299 + $0x8e0] sm:$0xff]
        %v2893 = vld [vmem:[%s2299 + $0x8e8] sm:$0xff]
        %v2894 = vld [vmem:[%s2299 + $0x8f0] sm:$0xff]
        %v2895 = vld [vmem:[%s2299 + $0x8f8] sm:$0xff]
        %v2896 = vld [vmem:[%s2299 + $0x900] sm:$0xff]
        %v2897 = vld [vmem:[%s2299 + $0x908] sm:$0xff]
        %v2898 = vld [vmem:[%s2299 + $0x910] sm:$0xff]
        %v2899 = vld [vmem:[%s2299 + $0x918] sm:$0xff]
        %v2900 = vld [vmem:[%s2299 + $0x920] sm:$0xff]
        %v2901 = vld [vmem:[%s2299 + $0x928] sm:$0xff]
        %v2902 = vld [vmem:[%s2299 + $0x930] sm:$0xff]
        %v2903 = vld [vmem:[%s2299 + $0x938] sm:$0xff]
        %v2904 = vld [vmem:[%s2299 + $0x940] sm:$0xff]
        %v2905 = vld [vmem:[%s2299 + $0x948] sm:$0xff]
        %v2906 = vld [vmem:[%s2299 + $0x950] sm:$0xff]
        %v2907 = vld [vmem:[%s2299 + $0x958] sm:$0xff]
        %v2908 = vld [vmem:[%s2299 + $0x960] sm:$0xff]
        %v2909 = vld [vmem:[%s2299 + $0x968] sm:$0xff]
        %v2910 = vld [vmem:[%s2299 + $0x970] sm:$0xff]
        %v2911 = vld [vmem:[%s2299 + $0x978] sm:$0xff]
        %v2912 = vld [vmem:[%s2299 + $0x980] sm:$0xff]
        %v2913 = vld [vmem:[%s2299 + $0x988] sm:$0xff]
        %v2914 = vld [vmem:[%s2299 + $0x990] sm:$0xff]
        %v2915 = vld [vmem:[%s2299 + $0x998] sm:$0xff]
        %v2916 = vld [vmem:[%s2299 + $0x9a0] sm:$0xff]
        %v2917 = vld [vmem:[%s2299 + $0x9a8] sm:$0xff]
        %v2918 = vld [vmem:[%s2299 + $0x9b0] sm:$0xff]
        %v2919 = vld [vmem:[%s2299 + $0x9b8] sm:$0xff]
        %v2920 = vld [vmem:[%s2299 + $0x9c0] sm:$0xff]
        %v2921 = vld [vmem:[%s2299 + $0x9c8] sm:$0xff]
        %v2922 = vld [vmem:[%s2299 + $0x9d0] sm:$0xff]
        %v2923 = vld [vmem:[%s2299 + $0x9d8] sm:$0xff]
        %v2924 = vld [vmem:[%s2299 + $0x9e0] sm:$0xff]
        %v2925 = vld [vmem:[%s2299 + $0x9e8] sm:$0xff]
        %v2926 = vld [vmem:[%s2299 + $0x9f0] sm:$0xff]
        %v2927 = vld [vmem:[%s2299 + $0x9f8] sm:$0xff]
        %v2928 = vld [vmem:[%s2299 + $0xa00] sm:$0xff]
        %v2929 = vld [vmem:[%s2299 + $0xa08] sm:$0xff]
        %v2930 = vld [vmem:[%s2299 + $0xa10] sm:$0xff]
        %v2931 = vld [vmem:[%s2299 + $0xa18] sm:$0xff]
        %v2932 = vld [vmem:[%s2299 + $0xa20] sm:$0xff]
        %v2933 = vld [vmem:[%s2299 + $0xa28] sm:$0xff]
        %v2934 = vld [vmem:[%s2299 + $0xa30] sm:$0xff]
        %v2935 = vld [vmem:[%s2299 + $0xa38] sm:$0xff]
        %v2936 = vld [vmem:[%s2299 + $0xa40] sm:$0xff]
        %v2937 = vld [vmem:[%s2299 + $0xa48] sm:$0xff]
        %v2938 = vld [vmem:[%s2299 + $0xa50] sm:$0xff]
        %v2939 = vld [vmem:[%s2299 + $0xa58] sm:$0xff]
        %v2940 = vld [vmem:[%s2299 + $0xa60] sm:$0xff]
        %v2941 = vld [vmem:[%s2299 + $0xa68] sm:$0xff]
        %v2942 = vld [vmem:[%s2299 + $0xa70] sm:$0xff]
        %v2943 = vld [vmem:[%s2299 + $0xa78] sm:$0xff]
        %v2944 = vld [vmem:[%s2299 + $0xa80] sm:$0xff]
        %v2945 = vld [vmem:[%s2299 + $0xa88] sm:$0xff]
        %v2946 = vld [vmem:[%s2299 + $0xa90] sm:$0xff]
        %v2947 = vld [vmem:[%s2299 + $0xa98] sm:$0xff]
        %v2948 = vld [vmem:[%s2299 + $0xaa0] sm:$0xff]
        %v2949 = vld [vmem:[%s2299 + $0xaa8] sm:$0xff]
        %v2950 = vld [vmem:[%s2299 + $0xab0] sm:$0xff]
        %v2951 = vld [vmem:[%s2299 + $0xab8] sm:$0xff]
        %v2952 = vld [vmem:[%s2299 + $0xac0] sm:$0xff]
        %v2953 = vld [vmem:[%s2299 + $0xac8] sm:$0xff]
        %v2954 = vld [vmem:[%s2299 + $0xad0] sm:$0xff]
        %v2955 = vld [vmem:[%s2299 + $0xad8] sm:$0xff]
        %v2956 = vld [vmem:[%s2299 + $0xae0] sm:$0xff]
        %v2957 = vld [vmem:[%s2299 + $0xae8] sm:$0xff]
        %v2958 = vld [vmem:[%s2299 + $0xaf0] sm:$0xff]
        %v2959 = vld [vmem:[%s2299 + $0xaf8] sm:$0xff]
        %v2960 = vld [vmem:[%s2299 + $0xb00] sm:$0xff]
        %v2961 = vld [vmem:[%s2299 + $0xb08] sm:$0xff]
        %v2962 = vld [vmem:[%s2299 + $0xb10] sm:$0xff]
        %v2963 = vld [vmem:[%s2299 + $0xb18] sm:$0xff]
        %v2964 = vld [vmem:[%s2299 + $0xb20] sm:$0xff]
        %v2965 = vld [vmem:[%s2299 + $0xb28] sm:$0xff]
        %v2966 = vld [vmem:[%s2299 + $0xb30] sm:$0xff]
        %v2967 = vld [vmem:[%s2299 + $0xb38] sm:$0xff]
        %v2968 = vld [vmem:[%s2299 + $0xb40] sm:$0xff]
        %v2969 = vld [vmem:[%s2299 + $0xb48] sm:$0xff]
        %v2970 = vld [vmem:[%s2299 + $0xb50] sm:$0xff]
        %v2971 = vld [vmem:[%s2299 + $0xb58] sm:$0xff]
        %v2972 = vld [vmem:[%s2299 + $0xb60] sm:$0xff]
        %v2973 = vld [vmem:[%s2299 + $0xb68] sm:$0xff]
        %v2974 = vld [vmem:[%s2299 + $0xb70] sm:$0xff]
        %v2975 = vld [vmem:[%s2299 + $0xb78] sm:$0xff]
        %v2976 = vld [vmem:[%s2299 + $0xb80] sm:$0xff]
        %v2977 = vld [vmem:[%s2299 + $0xb88] sm:$0xff]
        %v2978 = vld [vmem:[%s2299 + $0xb90] sm:$0xff]
        %v2979 = vld [vmem:[%s2299 + $0xb98] sm:$0xff]
        %v2980 = vld [vmem:[%s2299 + $0xba0] sm:$0xff]
        %v2981 = vld [vmem:[%s2299 + $0xba8] sm:$0xff]
        %v2982 = vld [vmem:[%s2299 + $0xbb0] sm:$0xff]
        %v2983 = vld [vmem:[%s2299 + $0xbb8] sm:$0xff]
        %v2984 = vld [vmem:[%s2299 + $0xbc0] sm:$0xff]
        %v2985 = vld [vmem:[%s2299 + $0xbc8] sm:$0xff]
        %v2986 = vld [vmem:[%s2299 + $0xbd0] sm:$0xff]
        %v2987 = vld [vmem:[%s2299 + $0xbd8] sm:$0xff]
        %v2988 = vld [vmem:[%s2299 + $0xbe0] sm:$0xff]
        %v2989 = vld [vmem:[%s2299 + $0xbe8] sm:$0xff]
        %v2990 = vld [vmem:[%s2299 + $0xbf0] sm:$0xff]
        %v2991 = vld [vmem:[%s2299 + $0xbf8] sm:$0xff]
        %v2992 = vld [vmem:[%s2299 + $0xc00] sm:$0xff]
        %v2993 = vld [vmem:[%s2299 + $0xc08] sm:$0xff]
        %v2994 = vld [vmem:[%s2299 + $0xc10] sm:$0xff]
        %v2995 = vld [vmem:[%s2299 + $0xc18] sm:$0xff]
        %v2996 = vld [vmem:[%s2299 + $0xc20] sm:$0xff]
        %v2997 = vld [vmem:[%s2299 + $0xc28] sm:$0xff]
        %v2998 = vld [vmem:[%s2299 + $0xc30] sm:$0xff]
        %v2999 = vld [vmem:[%s2299 + $0xc38] sm:$0xff]
        %v3000 = vld [vmem:[%s2299 + $0xc40] sm:$0xff]
        %v3001 = vld [vmem:[%s2299 + $0xc48] sm:$0xff]
        %v3002 = vld [vmem:[%s2299 + $0xc50] sm:$0xff]
        %v3003 = vld [vmem:[%s2299 + $0xc58] sm:$0xff]
        %v3004 = vld [vmem:[%s2299 + $0xc60] sm:$0xff]
        %v3005 = vld [vmem:[%s2299 + $0xc68] sm:$0xff]
        %v3006 = vld [vmem:[%s2299 + $0xc70] sm:$0xff]
        %v3007 = vld [vmem:[%s2299 + $0xc78] sm:$0xff]
        %v3008 = vld [vmem:[%s2299 + $0xc80] sm:$0xff]
        %v3009 = vld [vmem:[%s2299 + $0xc88] sm:$0xff]
        %v3010 = vld [vmem:[%s2299 + $0xc90] sm:$0xff]
        %v3011 = vld [vmem:[%s2299 + $0xc98] sm:$0xff]
        %v3012 = vld [vmem:[%s2299 + $0xca0] sm:$0xff]
        %v3013 = vld [vmem:[%s2299 + $0xca8] sm:$0xff]
        %v3014 = vld [vmem:[%s2299 + $0xcb0] sm:$0xff]
        %v3015 = vld [vmem:[%s2299 + $0xcb8] sm:$0xff]
        %v3016 = vld [vmem:[%s2299 + $0xcc0] sm:$0xff]
        %v3017 = vld [vmem:[%s2299 + $0xcc8] sm:$0xff]
        %v3018 = vld [vmem:[%s2299 + $0xcd0] sm:$0xff]
        %v3019 = vld [vmem:[%s2299 + $0xcd8] sm:$0xff]
        %v3020 = vld [vmem:[%s2299 + $0xce0] sm:$0xff]
        %v3021 = vld [vmem:[%s2299 + $0xce8] sm:$0xff]
        %v3022 = vld [vmem:[%s2299 + $0xcf0] sm:$0xff]
        %v3023 = vld [vmem:[%s2299 + $0xcf8] sm:$0xff]
        %v3024 = vld [vmem:[%s2299 + $0xd00] sm:$0xff]
        %v3025 = vld [vmem:[%s2299 + $0xd08] sm:$0xff]
        %v3026 = vld [vmem:[%s2299 + $0xd10] sm:$0xff]
        %v3027 = vld [vmem:[%s2299 + $0xd18] sm:$0xff]
        %v3028 = vld [vmem:[%s2299 + $0xd20] sm:$0xff]
        %v3029 = vld [vmem:[%s2299 + $0xd28] sm:$0xff]
        %v3030 = vld [vmem:[%s2299 + $0xd30] sm:$0xff]
        %v3031 = vld [vmem:[%s2299 + $0xd38] sm:$0xff]
        %v3032 = vld [vmem:[%s2299 + $0xd40] sm:$0xff]
        %v3033 = vld [vmem:[%s2299 + $0xd48] sm:$0xff]
        %v3034 = vld [vmem:[%s2299 + $0xd50] sm:$0xff]
        %v3035 = vld [vmem:[%s2299 + $0xd58] sm:$0xff]
        %v3036 = vld [vmem:[%s2299 + $0xd60] sm:$0xff]
        %v3037 = vld [vmem:[%s2299 + $0xd68] sm:$0xff]
        %v3038 = vld [vmem:[%s2299 + $0xd70] sm:$0xff]
        %v3039 = vld [vmem:[%s2299 + $0xd78] sm:$0xff]
        %v3040 = vld [vmem:[%s2299 + $0xd80] sm:$0xff]
        %v3041 = vld [vmem:[%s2299 + $0xd88] sm:$0xff]
        %v3042 = vld [vmem:[%s2299 + $0xd90] sm:$0xff]
        %v3043 = vld [vmem:[%s2299 + $0xd98] sm:$0xff]
        %v3044 = vld [vmem:[%s2299 + $0xda0] sm:$0xff]
        %v3045 = vld [vmem:[%s2299 + $0xda8] sm:$0xff]
        %v3046 = vld [vmem:[%s2299 + $0xdb0] sm:$0xff]
        %v3047 = vld [vmem:[%s2299 + $0xdb8] sm:$0xff]
        %v3048 = vld [vmem:[%s2299 + $0xdc0] sm:$0xff]
        %v3049 = vld [vmem:[%s2299 + $0xdc8] sm:$0xff]
        %v3050 = vld [vmem:[%s2299 + $0xdd0] sm:$0xff]
        %v3051 = vld [vmem:[%s2299 + $0xdd8] sm:$0xff]
        %v3052 = vld [vmem:[%s2299 + $0xde0] sm:$0xff]
        %v3053 = vld [vmem:[%s2299 + $0xde8] sm:$0xff]
        %v3054 = vld [vmem:[%s2299 + $0xdf0] sm:$0xff]
        %v3055 = vld [vmem:[%s2299 + $0xdf8] sm:$0xff]
        %v3056 = vld [vmem:[%s2299 + $0xe00] sm:$0xff]
        %v3057 = vld [vmem:[%s2299 + $0xe08] sm:$0xff]
        %v3058 = vld [vmem:[%s2299 + $0xe10] sm:$0xff]
        %v3059 = vld [vmem:[%s2299 + $0xe18] sm:$0xff]
        %v3060 = vld [vmem:[%s2299 + $0xe20] sm:$0xff]
        %v3061 = vld [vmem:[%s2299 + $0xe28] sm:$0xff]
        %v3062 = vld [vmem:[%s2299 + $0xe30] sm:$0xff]
        %v3063 = vld [vmem:[%s2299 + $0xe38] sm:$0xff]
        %v3064 = vld [vmem:[%s2299 + $0xe40] sm:$0xff]
        %v3065 = vld [vmem:[%s2299 + $0xe48] sm:$0xff]
        %v3066 = vld [vmem:[%s2299 + $0xe50] sm:$0xff]
        %v3067 = vld [vmem:[%s2299 + $0xe58] sm:$0xff]
        %v3068 = vld [vmem:[%s2299 + $0xe60] sm:$0xff]
        %v3069 = vld [vmem:[%s2299 + $0xe68] sm:$0xff]
        %v3070 = vld [vmem:[%s2299 + $0xe70] sm:$0xff]
        %v3071 = vld [vmem:[%s2299 + $0xe78] sm:$0xff]
        %v3072 = vld [vmem:[%s2299 + $0xe80] sm:$0xff]
        %v3073 = vld [vmem:[%s2299 + $0xe88] sm:$0xff]
        %v3074 = vld [vmem:[%s2299 + $0xe90] sm:$0xff]
        %v3075 = vld [vmem:[%s2299 + $0xe98] sm:$0xff]
        %v3076 = vld [vmem:[%s2299 + $0xea0] sm:$0xff]
        %v3077 = vld [vmem:[%s2299 + $0xea8] sm:$0xff]
        %v3078 = vld [vmem:[%s2299 + $0xeb0] sm:$0xff]
        %v3079 = vld [vmem:[%s2299 + $0xeb8] sm:$0xff]
        %v3080 = vld [vmem:[%s2299 + $0xec0] sm:$0xff]
        %v3081 = vld [vmem:[%s2299 + $0xec8] sm:$0xff]
        %v3082 = vld [vmem:[%s2299 + $0xed0] sm:$0xff]
        %v3083 = vld [vmem:[%s2299 + $0xed8] sm:$0xff]
        %v3084 = vld [vmem:[%s2299 + $0xee0] sm:$0xff]
        %v3085 = vld [vmem:[%s2299 + $0xee8] sm:$0xff]
        %v3086 = vld [vmem:[%s2299 + $0xef0] sm:$0xff]
        %v3087 = vld [vmem:[%s2299 + $0xef8] sm:$0xff]
        %v3088 = vld [vmem:[%s2299 + $0xf00] sm:$0xff]
        %v3089 = vld [vmem:[%s2299 + $0xf08] sm:$0xff]
        %v3090 = vld [vmem:[%s2299 + $0xf10] sm:$0xff]
        %v3091 = vld [vmem:[%s2299 + $0xf18] sm:$0xff]
        %v3092 = vld [vmem:[%s2299 + $0xf20] sm:$0xff]
        %v3093 = vld [vmem:[%s2299 + $0xf28] sm:$0xff]
        %v3094 = vld [vmem:[%s2299 + $0xf30] sm:$0xff]
        %v3095 = vld [vmem:[%s2299 + $0xf38] sm:$0xff]
        %v3096 = vld [vmem:[%s2299 + $0xf40] sm:$0xff]
        %v3097 = vld [vmem:[%s2299 + $0xf48] sm:$0xff]
        %v3098 = vld [vmem:[%s2299 + $0xf50] sm:$0xff]
        %v3099 = vld [vmem:[%s2299 + $0xf58] sm:$0xff]
        %v3100 = vld [vmem:[%s2299 + $0xf60] sm:$0xff]
        %v3101 = vld [vmem:[%s2299 + $0xf68] sm:$0xff]
        %v3102 = vld [vmem:[%s2299 + $0xf70] sm:$0xff]
        %v3103 = vld [vmem:[%s2299 + $0xf78] sm:$0xff]
        %v3104 = vld [vmem:[%s2299 + $0xf80] sm:$0xff]
        %v3105 = vld [vmem:[%s2299 + $0xf88] sm:$0xff]
        %v3106 = vld [vmem:[%s2299 + $0xf90] sm:$0xff]
        %v3107 = vld [vmem:[%s2299 + $0xf98] sm:$0xff]
        %v3108 = vld [vmem:[%s2299 + $0xfa0] sm:$0xff]
        %v3109 = vld [vmem:[%s2299 + $0xfa8] sm:$0xff]
        %v3110 = vld [vmem:[%s2299 + $0xfb0] sm:$0xff]
        %v3111 = vld [vmem:[%s2299 + $0xfb8] sm:$0xff]
        %v3112 = vld [vmem:[%s2299 + $0xfc0] sm:$0xff]
        %v3113 = vld [vmem:[%s2299 + $0xfc8] sm:$0xff]
        %v3114 = vld [vmem:[%s2299 + $0xfd0] sm:$0xff]
        %v3115 = vld [vmem:[%s2299 + $0xfd8] sm:$0xff]
        %v3116 = vld [vmem:[%s2299 + $0xfe0] sm:$0xff]
        %v3117 = vld [vmem:[%s2299 + $0xfe8] sm:$0xff]
        %v3118 = vld [vmem:[%s2299 + $0xff0] sm:$0xff]
        %v3119 = vld [vmem:[%s2299 + $0xff8] sm:$0xff]
        %v3120 = vld [vmem:[%s2299 + $0x1000] sm:$0xff]
        %v3121 = vld [vmem:[%s2299 + $0x1008] sm:$0xff]
        %v3122 = vld [vmem:[%s2299 + $0x1010] sm:$0xff]
        %v3123 = vld [vmem:[%s2299 + $0x1018] sm:$0xff]
        %vm3124 = vcmask 130048
        %v3126 = vsel %vm3124, %v2505, 0
        %v3129 = vsel %vm3124, %v2522, 0
        %v3132 = vsel %vm3124, %v2539, 0
        %v3135 = vsel %vm3124, %v2556, 0
        %v3138 = vsel %vm3124, %v2573, 0
        %v3141 = vsel %vm3124, %v2590, 0
        %v3144 = vsel %vm3124, %v2607, 0
        %3146 = vmatpush.msra.mxu0 %v2638
        %3147 = vmatpush.msra.mxu0 %v2636
        %3148 = vmatpush.msra.mxu0 %v2634
        %3149 = vmatpush.msra.mxu0 %v2632
        %3150 = vmatpush.msra.mxu0 %v2630
        %3151 = vmatpush.msra.mxu0 %v2628
        %3152 = vmatpush.msra.mxu0 %v2626
        %3153 = vmatpush.msra.mxu0 %v2624
        %3154 = vmatpush.msra.mxu0 %v2622
        %3155 = vmatpush.msra.mxu0 %v2620
        %3156 = vmatpush.msra.mxu0 %v2618
        %3157 = vmatpush.msra.mxu0 %v2616
        %3158 = vmatpush.msra.mxu0 %v2614
        %3159 = vmatpush.msra.mxu0 %v2612
        %3160 = vmatpush.msra.mxu0 %v2610
        %3161 = vmatpush.msra.mxu0 %v2608
        %3162 = vmatmul.f32.gmra.mxu0 %v2489
        %v3163 = vpop.f32.mrf.mxu0
        %v3164 = vadd.f32 0.0, %v3163
        %3165 = vmatmul.f32.gmra.mxu0 %v2506
        %v3166 = vpop.f32.mrf.mxu0
        %v3167 = vadd.f32 0.0, %v3166
        %3168 = vmatmul.f32.gmra.mxu0 %v2523
        %v3169 = vpop.f32.mrf.mxu0
        %v3170 = vadd.f32 0.0, %v3169
        %3171 = vmatmul.f32.gmra.mxu0 %v2540
        %v3172 = vpop.f32.mrf.mxu0
        %v3173 = vadd.f32 0.0, %v3172
        %3174 = vmatmul.f32.gmra.mxu0 %v2557
        %v3175 = vpop.f32.mrf.mxu0
        %v3176 = vadd.f32 0.0, %v3175
        %3177 = vmatmul.f32.gmra.mxu0 %v2574
        %v3178 = vpop.f32.mrf.mxu0
        %v3179 = vadd.f32 0.0, %v3178
        %3180 = vmatmul.f32.gmra.mxu0 %v2591
        %v3181 = vpop.f32.mrf.mxu0
        %v3182 = vadd.f32 0.0, %v3181
        %3183 = vdwg.mxu0
        %3184 = vmatpush.msra.mxu0 %v2670
        %3185 = vmatpush.msra.mxu0 %v2668
        %3186 = vmatpush.msra.mxu0 %v2666
        %3187 = vmatpush.msra.mxu0 %v2664
        %3188 = vmatpush.msra.mxu0 %v2662
        %3189 = vmatpush.msra.mxu0 %v2660
        %3190 = vmatpush.msra.mxu0 %v2658
        %3191 = vmatpush.msra.mxu0 %v2656
        %3192 = vmatpush.msra.mxu0 %v2654
        %3193 = vmatpush.msra.mxu0 %v2652
        %3194 = vmatpush.msra.mxu0 %v2650
        %3195 = vmatpush.msra.mxu0 %v2648
        %3196 = vmatpush.msra.mxu0 %v2646
        %3197 = vmatpush.msra.mxu0 %v2644
        %3198 = vmatpush.msra.mxu0 %v2642
        %3199 = vmatpush.msra.mxu0 %v2640
        %3200 = vmatmul.f32.gmra.mxu0 %v2490
        %v3201 = vpop.f32.mrf.mxu0
        %v3202 = vadd.f32 %v3164, %v3201
        %3203 = vmatmul.f32.gmra.mxu0 %v2507
        %v3204 = vpop.f32.mrf.mxu0
        %v3205 = vadd.f32 %v3167, %v3204
        %3206 = vmatmul.f32.gmra.mxu0 %v2524
        %v3207 = vpop.f32.mrf.mxu0
        %v3208 = vadd.f32 %v3170, %v3207
        %3209 = vmatmul.f32.gmra.mxu0 %v2541
        %v3210 = vpop.f32.mrf.mxu0
        %v3211 = vadd.f32 %v3173, %v3210
        %3212 = vmatmul.f32.gmra.mxu0 %v2558
        %v3213 = vpop.f32.mrf.mxu0
        %v3214 = vadd.f32 %v3176, %v3213
        %3215 = vmatmul.f32.gmra.mxu0 %v2575
        %v3216 = vpop.f32.mrf.mxu0
        %v3217 = vadd.f32 %v3179, %v3216
        %3218 = vmatmul.f32.gmra.mxu0 %v2592
        %v3219 = vpop.f32.mrf.mxu0
        %v3220 = vadd.f32 %v3182, %v3219
        %3221 = vdwg.mxu0
        %3222 = vmatpush.msra.mxu0 %v2702
        %3223 = vmatpush.msra.mxu0 %v2700
        %3224 = vmatpush.msra.mxu0 %v2698
        %3225 = vmatpush.msra.mxu0 %v2696
        %3226 = vmatpush.msra.mxu0 %v2694
        %3227 = vmatpush.msra.mxu0 %v2692
        %3228 = vmatpush.msra.mxu0 %v2690
        %3229 = vmatpush.msra.mxu0 %v2688
        %3230 = vmatpush.msra.mxu0 %v2686
        %3231 = vmatpush.msra.mxu0 %v2684
        %3232 = vmatpush.msra.mxu0 %v2682
        %3233 = vmatpush.msra.mxu0 %v2680
        %3234 = vmatpush.msra.mxu0 %v2678
        %3235 = vmatpush.msra.mxu0 %v2676
        %3236 = vmatpush.msra.mxu0 %v2674
        %3237 = vmatpush.msra.mxu0 %v2672
        %3238 = vmatmul.f32.gmra.mxu0 %v2491
        %v3239 = vpop.f32.mrf.mxu0
        %v3240 = vadd.f32 %v3202, %v3239
        %3241 = vmatmul.f32.gmra.mxu0 %v2508
        %v3242 = vpop.f32.mrf.mxu0
        %v3243 = vadd.f32 %v3205, %v3242
        %3244 = vmatmul.f32.gmra.mxu0 %v2525
        %v3245 = vpop.f32.mrf.mxu0
        %v3246 = vadd.f32 %v3208, %v3245
        %3247 = vmatmul.f32.gmra.mxu0 %v2542
        %v3248 = vpop.f32.mrf.mxu0
        %v3249 = vadd.f32 %v3211, %v3248
        %3250 = vmatmul.f32.gmra.mxu0 %v2559
        %v3251 = vpop.f32.mrf.mxu0
        %v3252 = vadd.f32 %v3214, %v3251
        %3253 = vmatmul.f32.gmra.mxu0 %v2576
        %v3254 = vpop.f32.mrf.mxu0
        %v3255 = vadd.f32 %v3217, %v3254
        %3256 = vmatmul.f32.gmra.mxu0 %v2593
        %v3257 = vpop.f32.mrf.mxu0
        %v3258 = vadd.f32 %v3220, %v3257
        %3259 = vdwg.mxu0
        %3260 = vmatpush.msra.mxu0 %v2734
        %3261 = vmatpush.msra.mxu0 %v2732
        %3262 = vmatpush.msra.mxu0 %v2730
        %3263 = vmatpush.msra.mxu0 %v2728
        %3264 = vmatpush.msra.mxu0 %v2726
        %3265 = vmatpush.msra.mxu0 %v2724
        %3266 = vmatpush.msra.mxu0 %v2722
        %3267 = vmatpush.msra.mxu0 %v2720
        %3268 = vmatpush.msra.mxu0 %v2718
        %3269 = vmatpush.msra.mxu0 %v2716
        %3270 = vmatpush.msra.mxu0 %v2714
        %3271 = vmatpush.msra.mxu0 %v2712
        %3272 = vmatpush.msra.mxu0 %v2710
        %3273 = vmatpush.msra.mxu0 %v2708
        %3274 = vmatpush.msra.mxu0 %v2706
        %3275 = vmatpush.msra.mxu0 %v2704
        %3276 = vmatmul.f32.gmra.mxu0 %v2492
        %v3277 = vpop.f32.mrf.mxu0
        %v3278 = vadd.f32 %v3240, %v3277
        %3279 = vmatmul.f32.gmra.mxu0 %v2509
        %v3280 = vpop.f32.mrf.mxu0
        %v3281 = vadd.f32 %v3243, %v3280
        %3282 = vmatmul.f32.gmra.mxu0 %v2526
        %v3283 = vpop.f32.mrf.mxu0
        %v3284 = vadd.f32 %v3246, %v3283
        %3285 = vmatmul.f32.gmra.mxu0 %v2543
        %v3286 = vpop.f32.mrf.mxu0
        %v3287 = vadd.f32 %v3249, %v3286
        %3288 = vmatmul.f32.gmra.mxu0 %v2560
        %v3289 = vpop.f32.mrf.mxu0
        %v3290 = vadd.f32 %v3252, %v3289
        %3291 = vmatmul.f32.gmra.mxu0 %v2577
        %v3292 = vpop.f32.mrf.mxu0
        %v3293 = vadd.f32 %v3255, %v3292
        %3294 = vmatmul.f32.gmra.mxu0 %v2594
        %v3295 = vpop.f32.mrf.mxu0
        %v3296 = vadd.f32 %v3258, %v3295
        %3297 = vdwg.mxu0
        %3298 = vmatpush.msra.mxu0 %v2766
        %3299 = vmatpush.msra.mxu0 %v2764
        %3300 = vmatpush.msra.mxu0 %v2762
        %3301 = vmatpush.msra.mxu0 %v2760
        %3302 = vmatpush.msra.mxu0 %v2758
        %3303 = vmatpush.msra.mxu0 %v2756
        %3304 = vmatpush.msra.mxu0 %v2754
        %3305 = vmatpush.msra.mxu0 %v2752
        %3306 = vmatpush.msra.mxu0 %v2750
        %3307 = vmatpush.msra.mxu0 %v2748
        %3308 = vmatpush.msra.mxu0 %v2746
        %3309 = vmatpush.msra.mxu0 %v2744
        %3310 = vmatpush.msra.mxu0 %v2742
        %3311 = vmatpush.msra.mxu0 %v2740
        %3312 = vmatpush.msra.mxu0 %v2738
        %3313 = vmatpush.msra.mxu0 %v2736
        %3314 = vmatmul.f32.gmra.mxu0 %v2493
        %v3315 = vpop.f32.mrf.mxu0
        %v3316 = vadd.f32 %v3278, %v3315
        %3317 = vmatmul.f32.gmra.mxu0 %v2510
        %v3318 = vpop.f32.mrf.mxu0
        %v3319 = vadd.f32 %v3281, %v3318
        %3320 = vmatmul.f32.gmra.mxu0 %v2527
        %v3321 = vpop.f32.mrf.mxu0
        %v3322 = vadd.f32 %v3284, %v3321
        %3323 = vmatmul.f32.gmra.mxu0 %v2544
        %v3324 = vpop.f32.mrf.mxu0
        %v3325 = vadd.f32 %v3287, %v3324
        %3326 = vmatmul.f32.gmra.mxu0 %v2561
        %v3327 = vpop.f32.mrf.mxu0
        %v3328 = vadd.f32 %v3290, %v3327
        %3329 = vmatmul.f32.gmra.mxu0 %v2578
        %v3330 = vpop.f32.mrf.mxu0
        %v3331 = vadd.f32 %v3293, %v3330
        %3332 = vmatmul.f32.gmra.mxu0 %v2595
        %v3333 = vpop.f32.mrf.mxu0
        %v3334 = vadd.f32 %v3296, %v3333
        %3335 = vdwg.mxu0
        %3336 = vmatpush.msra.mxu0 %v2798
        %3337 = vmatpush.msra.mxu0 %v2796
        %3338 = vmatpush.msra.mxu0 %v2794
        %3339 = vmatpush.msra.mxu0 %v2792
        %3340 = vmatpush.msra.mxu0 %v2790
        %3341 = vmatpush.msra.mxu0 %v2788
        %3342 = vmatpush.msra.mxu0 %v2786
        %3343 = vmatpush.msra.mxu0 %v2784
        %3344 = vmatpush.msra.mxu0 %v2782
        %3345 = vmatpush.msra.mxu0 %v2780
        %3346 = vmatpush.msra.mxu0 %v2778
        %3347 = vmatpush.msra.mxu0 %v2776
        %3348 = vmatpush.msra.mxu0 %v2774
        %3349 = vmatpush.msra.mxu0 %v2772
        %3350 = vmatpush.msra.mxu0 %v2770
        %3351 = vmatpush.msra.mxu0 %v2768
        %3352 = vmatmul.f32.gmra.mxu0 %v2494
        %v3353 = vpop.f32.mrf.mxu0
        %v3354 = vadd.f32 %v3316, %v3353
        %3355 = vmatmul.f32.gmra.mxu0 %v2511
        %v3356 = vpop.f32.mrf.mxu0
        %v3357 = vadd.f32 %v3319, %v3356
        %3358 = vmatmul.f32.gmra.mxu0 %v2528
        %v3359 = vpop.f32.mrf.mxu0
        %v3360 = vadd.f32 %v3322, %v3359
        %3361 = vmatmul.f32.gmra.mxu0 %v2545
        %v3362 = vpop.f32.mrf.mxu0
        %v3363 = vadd.f32 %v3325, %v3362
        %3364 = vmatmul.f32.gmra.mxu0 %v2562
        %v3365 = vpop.f32.mrf.mxu0
        %v3366 = vadd.f32 %v3328, %v3365
        %3367 = vmatmul.f32.gmra.mxu0 %v2579
        %v3368 = vpop.f32.mrf.mxu0
        %v3369 = vadd.f32 %v3331, %v3368
        %3370 = vmatmul.f32.gmra.mxu0 %v2596
        %v3371 = vpop.f32.mrf.mxu0
        %v3372 = vadd.f32 %v3334, %v3371
        %3373 = vdwg.mxu0
        %3374 = vmatpush.msra.mxu0 %v2830
        %3375 = vmatpush.msra.mxu0 %v2828
        %3376 = vmatpush.msra.mxu0 %v2826
        %3377 = vmatpush.msra.mxu0 %v2824
        %3378 = vmatpush.msra.mxu0 %v2822
        %3379 = vmatpush.msra.mxu0 %v2820
        %3380 = vmatpush.msra.mxu0 %v2818
        %3381 = vmatpush.msra.mxu0 %v2816
        %3382 = vmatpush.msra.mxu0 %v2814
        %3383 = vmatpush.msra.mxu0 %v2812
        %3384 = vmatpush.msra.mxu0 %v2810
        %3385 = vmatpush.msra.mxu0 %v2808
        %3386 = vmatpush.msra.mxu0 %v2806
        %3387 = vmatpush.msra.mxu0 %v2804
        %3388 = vmatpush.msra.mxu0 %v2802
        %3389 = vmatpush.msra.mxu0 %v2800
        %3390 = vmatmul.f32.gmra.mxu0 %v2495
        %v3391 = vpop.f32.mrf.mxu0
        %v3392 = vadd.f32 %v3354, %v3391
        %3393 = vmatmul.f32.gmra.mxu0 %v2512
        %v3394 = vpop.f32.mrf.mxu0
        %v3395 = vadd.f32 %v3357, %v3394
        %3396 = vmatmul.f32.gmra.mxu0 %v2529
        %v3397 = vpop.f32.mrf.mxu0
        %v3398 = vadd.f32 %v3360, %v3397
        %3399 = vmatmul.f32.gmra.mxu0 %v2546
        %v3400 = vpop.f32.mrf.mxu0
        %v3401 = vadd.f32 %v3363, %v3400
        %3402 = vmatmul.f32.gmra.mxu0 %v2563
        %v3403 = vpop.f32.mrf.mxu0
        %v3404 = vadd.f32 %v3366, %v3403
        %3405 = vmatmul.f32.gmra.mxu0 %v2580
        %v3406 = vpop.f32.mrf.mxu0
        %v3407 = vadd.f32 %v3369, %v3406
        %3408 = vmatmul.f32.gmra.mxu0 %v2597
        %v3409 = vpop.f32.mrf.mxu0
        %v3410 = vadd.f32 %v3372, %v3409
        %3411 = vdwg.mxu0
        %3412 = vmatpush.msra.mxu0 %v2862
        %3413 = vmatpush.msra.mxu0 %v2860
        %3414 = vmatpush.msra.mxu0 %v2858
        %3415 = vmatpush.msra.mxu0 %v2856
        %3416 = vmatpush.msra.mxu0 %v2854
        %3417 = vmatpush.msra.mxu0 %v2852
        %3418 = vmatpush.msra.mxu0 %v2850
        %3419 = vmatpush.msra.mxu0 %v2848
        %3420 = vmatpush.msra.mxu0 %v2846
        %3421 = vmatpush.msra.mxu0 %v2844
        %3422 = vmatpush.msra.mxu0 %v2842
        %3423 = vmatpush.msra.mxu0 %v2840
        %3424 = vmatpush.msra.mxu0 %v2838
        %3425 = vmatpush.msra.mxu0 %v2836
        %3426 = vmatpush.msra.mxu0 %v2834
        %3427 = vmatpush.msra.mxu0 %v2832
        %3428 = vmatmul.f32.gmra.mxu0 %v2496
        %v3429 = vpop.f32.mrf.mxu0
        %v3430 = vadd.f32 %v3392, %v3429
        %3431 = vmatmul.f32.gmra.mxu0 %v2513
        %v3432 = vpop.f32.mrf.mxu0
        %v3433 = vadd.f32 %v3395, %v3432
        %3434 = vmatmul.f32.gmra.mxu0 %v2530
        %v3435 = vpop.f32.mrf.mxu0
        %v3436 = vadd.f32 %v3398, %v3435
        %3437 = vmatmul.f32.gmra.mxu0 %v2547
        %v3438 = vpop.f32.mrf.mxu0
        %v3439 = vadd.f32 %v3401, %v3438
        %3440 = vmatmul.f32.gmra.mxu0 %v2564
        %v3441 = vpop.f32.mrf.mxu0
        %v3442 = vadd.f32 %v3404, %v3441
        %3443 = vmatmul.f32.gmra.mxu0 %v2581
        %v3444 = vpop.f32.mrf.mxu0
        %v3445 = vadd.f32 %v3407, %v3444
        %3446 = vmatmul.f32.gmra.mxu0 %v2598
        %v3447 = vpop.f32.mrf.mxu0
        %v3448 = vadd.f32 %v3410, %v3447
        %3449 = vdwg.mxu0
        %3450 = vmatpush.msra.mxu0 %v2894
        %3451 = vmatpush.msra.mxu0 %v2892
        %3452 = vmatpush.msra.mxu0 %v2890
        %3453 = vmatpush.msra.mxu0 %v2888
        %3454 = vmatpush.msra.mxu0 %v2886
        %3455 = vmatpush.msra.mxu0 %v2884
        %3456 = vmatpush.msra.mxu0 %v2882
        %3457 = vmatpush.msra.mxu0 %v2880
        %3458 = vmatpush.msra.mxu0 %v2878
        %3459 = vmatpush.msra.mxu0 %v2876
        %3460 = vmatpush.msra.mxu0 %v2874
        %3461 = vmatpush.msra.mxu0 %v2872
        %3462 = vmatpush.msra.mxu0 %v2870
        %3463 = vmatpush.msra.mxu0 %v2868
        %3464 = vmatpush.msra.mxu0 %v2866
        %3465 = vmatpush.msra.mxu0 %v2864
        %3466 = vmatmul.f32.gmra.mxu0 %v2497
        %v3467 = vpop.f32.mrf.mxu0
        %v3468 = vadd.f32 %v3430, %v3467
        %3469 = vmatmul.f32.gmra.mxu0 %v2514
        %v3470 = vpop.f32.mrf.mxu0
        %v3471 = vadd.f32 %v3433, %v3470
        %3472 = vmatmul.f32.gmra.mxu0 %v2531
        %v3473 = vpop.f32.mrf.mxu0
        %v3474 = vadd.f32 %v3436, %v3473
        %3475 = vmatmul.f32.gmra.mxu0 %v2548
        %v3476 = vpop.f32.mrf.mxu0
        %v3477 = vadd.f32 %v3439, %v3476
        %3478 = vmatmul.f32.gmra.mxu0 %v2565
        %v3479 = vpop.f32.mrf.mxu0
        %v3480 = vadd.f32 %v3442, %v3479
        %3481 = vmatmul.f32.gmra.mxu0 %v2582
        %v3482 = vpop.f32.mrf.mxu0
        %v3483 = vadd.f32 %v3445, %v3482
        %3484 = vmatmul.f32.gmra.mxu0 %v2599
        %v3485 = vpop.f32.mrf.mxu0
        %v3486 = vadd.f32 %v3448, %v3485
        %3487 = vdwg.mxu0
        %3488 = vmatpush.msra.mxu0 %v2926
        %3489 = vmatpush.msra.mxu0 %v2924
        %3490 = vmatpush.msra.mxu0 %v2922
        %3491 = vmatpush.msra.mxu0 %v2920
        %3492 = vmatpush.msra.mxu0 %v2918
        %3493 = vmatpush.msra.mxu0 %v2916
        %3494 = vmatpush.msra.mxu0 %v2914
        %3495 = vmatpush.msra.mxu0 %v2912
        %3496 = vmatpush.msra.mxu0 %v2910
        %3497 = vmatpush.msra.mxu0 %v2908
        %3498 = vmatpush.msra.mxu0 %v2906
        %3499 = vmatpush.msra.mxu0 %v2904
        %3500 = vmatpush.msra.mxu0 %v2902
        %3501 = vmatpush.msra.mxu0 %v2900
        %3502 = vmatpush.msra.mxu0 %v2898
        %3503 = vmatpush.msra.mxu0 %v2896
        %3504 = vmatmul.f32.gmra.mxu0 %v2498
        %v3505 = vpop.f32.mrf.mxu0
        %v3506 = vadd.f32 %v3468, %v3505
        %3507 = vmatmul.f32.gmra.mxu0 %v2515
        %v3508 = vpop.f32.mrf.mxu0
        %v3509 = vadd.f32 %v3471, %v3508
        %3510 = vmatmul.f32.gmra.mxu0 %v2532
        %v3511 = vpop.f32.mrf.mxu0
        %v3512 = vadd.f32 %v3474, %v3511
        %3513 = vmatmul.f32.gmra.mxu0 %v2549
        %v3514 = vpop.f32.mrf.mxu0
        %v3515 = vadd.f32 %v3477, %v3514
        %3516 = vmatmul.f32.gmra.mxu0 %v2566
        %v3517 = vpop.f32.mrf.mxu0
        %v3518 = vadd.f32 %v3480, %v3517
        %3519 = vmatmul.f32.gmra.mxu0 %v2583
        %v3520 = vpop.f32.mrf.mxu0
        %v3521 = vadd.f32 %v3483, %v3520
        %3522 = vmatmul.f32.gmra.mxu0 %v2600
        %v3523 = vpop.f32.mrf.mxu0
        %v3524 = vadd.f32 %v3486, %v3523
        %3525 = vdwg.mxu0
        %3526 = vmatpush.msra.mxu0 %v2958
        %3527 = vmatpush.msra.mxu0 %v2956
        %3528 = vmatpush.msra.mxu0 %v2954
        %3529 = vmatpush.msra.mxu0 %v2952
        %3530 = vmatpush.msra.mxu0 %v2950
        %3531 = vmatpush.msra.mxu0 %v2948
        %3532 = vmatpush.msra.mxu0 %v2946
        %3533 = vmatpush.msra.mxu0 %v2944
        %3534 = vmatpush.msra.mxu0 %v2942
        %3535 = vmatpush.msra.mxu0 %v2940
        %3536 = vmatpush.msra.mxu0 %v2938
        %3537 = vmatpush.msra.mxu0 %v2936
        %3538 = vmatpush.msra.mxu0 %v2934
        %3539 = vmatpush.msra.mxu0 %v2932
        %3540 = vmatpush.msra.mxu0 %v2930
        %3541 = vmatpush.msra.mxu0 %v2928
        %3542 = vmatmul.f32.gmra.mxu0 %v2499
        %v3543 = vpop.f32.mrf.mxu0
        %v3544 = vadd.f32 %v3506, %v3543
        %3545 = vmatmul.f32.gmra.mxu0 %v2516
        %v3546 = vpop.f32.mrf.mxu0
        %v3547 = vadd.f32 %v3509, %v3546
        %3548 = vmatmul.f32.gmra.mxu0 %v2533
        %v3549 = vpop.f32.mrf.mxu0
        %v3550 = vadd.f32 %v3512, %v3549
        %3551 = vmatmul.f32.gmra.mxu0 %v2550
        %v3552 = vpop.f32.mrf.mxu0
        %v3553 = vadd.f32 %v3515, %v3552
        %3554 = vmatmul.f32.gmra.mxu0 %v2567
        %v3555 = vpop.f32.mrf.mxu0
        %v3556 = vadd.f32 %v3518, %v3555
        %3557 = vmatmul.f32.gmra.mxu0 %v2584
        %v3558 = vpop.f32.mrf.mxu0
        %v3559 = vadd.f32 %v3521, %v3558
        %3560 = vmatmul.f32.gmra.mxu0 %v2601
        %v3561 = vpop.f32.mrf.mxu0
        %v3562 = vadd.f32 %v3524, %v3561
        %3563 = vdwg.mxu0
        %3564 = vmatpush.msra.mxu0 %v2990
        %3565 = vmatpush.msra.mxu0 %v2988
        %3566 = vmatpush.msra.mxu0 %v2986
        %3567 = vmatpush.msra.mxu0 %v2984
        %3568 = vmatpush.msra.mxu0 %v2982
        %3569 = vmatpush.msra.mxu0 %v2980
        %3570 = vmatpush.msra.mxu0 %v2978
        %3571 = vmatpush.msra.mxu0 %v2976
        %3572 = vmatpush.msra.mxu0 %v2974
        %3573 = vmatpush.msra.mxu0 %v2972
        %3574 = vmatpush.msra.mxu0 %v2970
        %3575 = vmatpush.msra.mxu0 %v2968
        %3576 = vmatpush.msra.mxu0 %v2966
        %3577 = vmatpush.msra.mxu0 %v2964
        %3578 = vmatpush.msra.mxu0 %v2962
        %3579 = vmatpush.msra.mxu0 %v2960
        %3580 = vmatmul.f32.gmra.mxu0 %v2500
        %v3581 = vpop.f32.mrf.mxu0
        %v3582 = vadd.f32 %v3544, %v3581
        %3583 = vmatmul.f32.gmra.mxu0 %v2517
        %v3584 = vpop.f32.mrf.mxu0
        %v3585 = vadd.f32 %v3547, %v3584
        %3586 = vmatmul.f32.gmra.mxu0 %v2534
        %v3587 = vpop.f32.mrf.mxu0
        %v3588 = vadd.f32 %v3550, %v3587
        %3589 = vmatmul.f32.gmra.mxu0 %v2551
        %v3590 = vpop.f32.mrf.mxu0
        %v3591 = vadd.f32 %v3553, %v3590
        %3592 = vmatmul.f32.gmra.mxu0 %v2568
        %v3593 = vpop.f32.mrf.mxu0
        %v3594 = vadd.f32 %v3556, %v3593
        %3595 = vmatmul.f32.gmra.mxu0 %v2585
        %v3596 = vpop.f32.mrf.mxu0
        %v3597 = vadd.f32 %v3559, %v3596
        %3598 = vmatmul.f32.gmra.mxu0 %v2602
        %v3599 = vpop.f32.mrf.mxu0
        %v3600 = vadd.f32 %v3562, %v3599
        %3601 = vdwg.mxu0
        %3602 = vmatpush.msra.mxu0 %v3022
        %3603 = vmatpush.msra.mxu0 %v3020
        %3604 = vmatpush.msra.mxu0 %v3018
        %3605 = vmatpush.msra.mxu0 %v3016
        %3606 = vmatpush.msra.mxu0 %v3014
        %3607 = vmatpush.msra.mxu0 %v3012
        %3608 = vmatpush.msra.mxu0 %v3010
        %3609 = vmatpush.msra.mxu0 %v3008
        %3610 = vmatpush.msra.mxu0 %v3006
        %3611 = vmatpush.msra.mxu0 %v3004
        %3612 = vmatpush.msra.mxu0 %v3002
        %3613 = vmatpush.msra.mxu0 %v3000
        %3614 = vmatpush.msra.mxu0 %v2998
        %3615 = vmatpush.msra.mxu0 %v2996
        %3616 = vmatpush.msra.mxu0 %v2994
        %3617 = vmatpush.msra.mxu0 %v2992
        %3618 = vmatmul.f32.gmra.mxu0 %v2501
        %v3619 = vpop.f32.mrf.mxu0
        %v3620 = vadd.f32 %v3582, %v3619
        %3621 = vmatmul.f32.gmra.mxu0 %v2518
        %v3622 = vpop.f32.mrf.mxu0
        %v3623 = vadd.f32 %v3585, %v3622
        %3624 = vmatmul.f32.gmra.mxu0 %v2535
        %v3625 = vpop.f32.mrf.mxu0
        %v3626 = vadd.f32 %v3588, %v3625
        %3627 = vmatmul.f32.gmra.mxu0 %v2552
        %v3628 = vpop.f32.mrf.mxu0
        %v3629 = vadd.f32 %v3591, %v3628
        %3630 = vmatmul.f32.gmra.mxu0 %v2569
        %v3631 = vpop.f32.mrf.mxu0
        %v3632 = vadd.f32 %v3594, %v3631
        %3633 = vmatmul.f32.gmra.mxu0 %v2586
        %v3634 = vpop.f32.mrf.mxu0
        %v3635 = vadd.f32 %v3597, %v3634
        %3636 = vmatmul.f32.gmra.mxu0 %v2603
        %v3637 = vpop.f32.mrf.mxu0
        %v3638 = vadd.f32 %v3600, %v3637
        %3639 = vdwg.mxu0
        %3640 = vmatpush.msra.mxu0 %v3054
        %3641 = vmatpush.msra.mxu0 %v3052
        %3642 = vmatpush.msra.mxu0 %v3050
        %3643 = vmatpush.msra.mxu0 %v3048
        %3644 = vmatpush.msra.mxu0 %v3046
        %3645 = vmatpush.msra.mxu0 %v3044
        %3646 = vmatpush.msra.mxu0 %v3042
        %3647 = vmatpush.msra.mxu0 %v3040
        %3648 = vmatpush.msra.mxu0 %v3038
        %3649 = vmatpush.msra.mxu0 %v3036
        %3650 = vmatpush.msra.mxu0 %v3034
        %3651 = vmatpush.msra.mxu0 %v3032
        %3652 = vmatpush.msra.mxu0 %v3030
        %3653 = vmatpush.msra.mxu0 %v3028
        %3654 = vmatpush.msra.mxu0 %v3026
        %3655 = vmatpush.msra.mxu0 %v3024
        %3656 = vmatmul.f32.gmra.mxu0 %v2502
        %v3657 = vpop.f32.mrf.mxu0
        %v3658 = vadd.f32 %v3620, %v3657
        %3659 = vmatmul.f32.gmra.mxu0 %v2519
        %v3660 = vpop.f32.mrf.mxu0
        %v3661 = vadd.f32 %v3623, %v3660
        %3662 = vmatmul.f32.gmra.mxu0 %v2536
        %v3663 = vpop.f32.mrf.mxu0
        %v3664 = vadd.f32 %v3626, %v3663
        %3665 = vmatmul.f32.gmra.mxu0 %v2553
        %v3666 = vpop.f32.mrf.mxu0
        %v3667 = vadd.f32 %v3629, %v3666
        %3668 = vmatmul.f32.gmra.mxu0 %v2570
        %v3669 = vpop.f32.mrf.mxu0
        %v3670 = vadd.f32 %v3632, %v3669
        %3671 = vmatmul.f32.gmra.mxu0 %v2587
        %v3672 = vpop.f32.mrf.mxu0
        %v3673 = vadd.f32 %v3635, %v3672
        %3674 = vmatmul.f32.gmra.mxu0 %v2604
        %v3675 = vpop.f32.mrf.mxu0
        %v3676 = vadd.f32 %v3638, %v3675
        %3677 = vdwg.mxu0
        %3678 = vmatpush.msra.mxu0 %v3086
        %3679 = vmatpush.msra.mxu0 %v3084
        %3680 = vmatpush.msra.mxu0 %v3082
        %3681 = vmatpush.msra.mxu0 %v3080
        %3682 = vmatpush.msra.mxu0 %v3078
        %3683 = vmatpush.msra.mxu0 %v3076
        %3684 = vmatpush.msra.mxu0 %v3074
        %3685 = vmatpush.msra.mxu0 %v3072
        %3686 = vmatpush.msra.mxu0 %v3070
        %3687 = vmatpush.msra.mxu0 %v3068
        %3688 = vmatpush.msra.mxu0 %v3066
        %3689 = vmatpush.msra.mxu0 %v3064
        %3690 = vmatpush.msra.mxu0 %v3062
        %3691 = vmatpush.msra.mxu0 %v3060
        %3692 = vmatpush.msra.mxu0 %v3058
        %3693 = vmatpush.msra.mxu0 %v3056
        %3694 = vmatmul.f32.gmra.mxu0 %v2503
        %v3695 = vpop.f32.mrf.mxu0
        %v3696 = vadd.f32 %v3658, %v3695
        %3697 = vmatmul.f32.gmra.mxu0 %v2520
        %v3698 = vpop.f32.mrf.mxu0
        %v3699 = vadd.f32 %v3661, %v3698
        %3700 = vmatmul.f32.gmra.mxu0 %v2537
        %v3701 = vpop.f32.mrf.mxu0
        %v3702 = vadd.f32 %v3664, %v3701
        %3703 = vmatmul.f32.gmra.mxu0 %v2554
        %v3704 = vpop.f32.mrf.mxu0
        %v3705 = vadd.f32 %v3667, %v3704
        %3706 = vmatmul.f32.gmra.mxu0 %v2571
        %v3707 = vpop.f32.mrf.mxu0
        %v3708 = vadd.f32 %v3670, %v3707
        %3709 = vmatmul.f32.gmra.mxu0 %v2588
        %v3710 = vpop.f32.mrf.mxu0
        %v3711 = vadd.f32 %v3673, %v3710
        %3712 = vmatmul.f32.gmra.mxu0 %v2605
        %v3713 = vpop.f32.mrf.mxu0
        %v3714 = vadd.f32 %v3676, %v3713
        %3715 = vdwg.mxu0
        %3716 = vmatpush.msra.mxu0 %v3118
        %3717 = vmatpush.msra.mxu0 %v3116
        %3718 = vmatpush.msra.mxu0 %v3114
        %3719 = vmatpush.msra.mxu0 %v3112
        %3720 = vmatpush.msra.mxu0 %v3110
        %3721 = vmatpush.msra.mxu0 %v3108
        %3722 = vmatpush.msra.mxu0 %v3106
        %3723 = vmatpush.msra.mxu0 %v3104
        %3724 = vmatpush.msra.mxu0 %v3102
        %3725 = vmatpush.msra.mxu0 %v3100
        %3726 = vmatpush.msra.mxu0 %v3098
        %3727 = vmatpush.msra.mxu0 %v3096
        %3728 = vmatpush.msra.mxu0 %v3094
        %3729 = vmatpush.msra.mxu0 %v3092
        %3730 = vmatpush.msra.mxu0 %v3090
        %3731 = vmatpush.msra.mxu0 %v3088
        %3732 = vmatmul.f32.gmra.mxu0 %v2504
        %v3733 = vpop.f32.mrf.mxu0
        %v3734 = vadd.f32 %v3696, %v3733
        %3735 = vmatmul.f32.gmra.mxu0 %v2521
        %v3736 = vpop.f32.mrf.mxu0
        %v3737 = vadd.f32 %v3699, %v3736
        %3738 = vmatmul.f32.gmra.mxu0 %v2538
        %v3739 = vpop.f32.mrf.mxu0
        %v3740 = vadd.f32 %v3702, %v3739
        %3741 = vmatmul.f32.gmra.mxu0 %v2555
        %v3742 = vpop.f32.mrf.mxu0
        %v3743 = vadd.f32 %v3705, %v3742
        %3744 = vmatmul.f32.gmra.mxu0 %v2572
        %v3745 = vpop.f32.mrf.mxu0
        %v3746 = vadd.f32 %v3708, %v3745
        %3747 = vmatmul.f32.gmra.mxu0 %v2589
        %v3748 = vpop.f32.mrf.mxu0
        %v3749 = vadd.f32 %v3711, %v3748
        %3750 = vmatmul.f32.gmra.mxu0 %v2606
        %v3751 = vpop.f32.mrf.mxu0
        %v3752 = vadd.f32 %v3714, %v3751
        %3753 = vdwg.mxu0
        %3754 = vmatpush.msra.mxu0 0.0
        %3755 = vmatpush.msra.mxu0 0.0
        %3756 = vmatpush.msra.mxu0 0.0
        %3757 = vmatpush.msra.mxu0 0.0
        %3758 = vmatpush.msra.mxu0 0.0
        %3759 = vmatpush.msra.mxu0 0.0
        %3760 = vmatpush.msra.mxu0 0.0
        %3761 = vmatpush.msra.mxu0 0.0
        %3762 = vmatpush.msra.mxu0 0.0
        %3763 = vmatpush.msra.mxu0 0.0
        %3764 = vmatpush.msra.mxu0 0.0
        %3765 = vmatpush.msra.mxu0 0.0
        %3766 = vmatpush.msra.mxu0 0.0
        %3767 = vmatpush.msra.mxu0 0.0
        %3768 = vmatpush.msra.mxu0 %v3122
        %3769 = vmatpush.msra.mxu0 %v3120
        %3770 = vmatmul.f32.gmra.mxu0 %v3126
        %v3771 = vpop.f32.mrf.mxu0
        %v3772 = vadd.f32 %v3734, %v3771
        %3773 = vmatmul.f32.gmra.mxu0 %v3129
        %v3774 = vpop.f32.mrf.mxu0
        %v3775 = vadd.f32 %v3737, %v3774
        %3776 = vmatmul.f32.gmra.mxu0 %v3132
        %v3777 = vpop.f32.mrf.mxu0
        %v3778 = vadd.f32 %v3740, %v3777
        %3779 = vmatmul.f32.gmra.mxu0 %v3135
        %v3780 = vpop.f32.mrf.mxu0
        %v3781 = vadd.f32 %v3743, %v3780
        %3782 = vmatmul.f32.gmra.mxu0 %v3138
        %v3783 = vpop.f32.mrf.mxu0
        %v3784 = vadd.f32 %v3746, %v3783
        %3785 = vmatmul.f32.gmra.mxu0 %v3141
        %v3786 = vpop.f32.mrf.mxu0
        %v3787 = vadd.f32 %v3749, %v3786
        %3788 = vmatmul.f32.gmra.mxu0 %v3144
        %v3789 = vpop.f32.mrf.mxu0
        %v3790 = vadd.f32 %v3752, %v3789
        %3791 = vdwg.mxu0
        %3792 = vmatpush.msra.mxu0 %v2639
        %3793 = vmatpush.msra.mxu0 %v2637
        %3794 = vmatpush.msra.mxu0 %v2635
        %3795 = vmatpush.msra.mxu0 %v2633
        %3796 = vmatpush.msra.mxu0 %v2631
        %3797 = vmatpush.msra.mxu0 %v2629
        %3798 = vmatpush.msra.mxu0 %v2627
        %3799 = vmatpush.msra.mxu0 %v2625
        %3800 = vmatpush.msra.mxu0 %v2623
        %3801 = vmatpush.msra.mxu0 %v2621
        %3802 = vmatpush.msra.mxu0 %v2619
        %3803 = vmatpush.msra.mxu0 %v2617
        %3804 = vmatpush.msra.mxu0 %v2615
        %3805 = vmatpush.msra.mxu0 %v2613
        %3806 = vmatpush.msra.mxu0 %v2611
        %3807 = vmatpush.msra.mxu0 %v2609
        %3808 = vmatmul.f32.gmra.mxu0 %v2489
        %v3809 = vpop.f32.mrf.mxu0
        %v3810 = vadd.f32 0.0, %v3809
        %3811 = vmatmul.f32.gmra.mxu0 %v2506
        %v3812 = vpop.f32.mrf.mxu0
        %v3813 = vadd.f32 0.0, %v3812
        %3814 = vmatmul.f32.gmra.mxu0 %v2523
        %v3815 = vpop.f32.mrf.mxu0
        %v3816 = vadd.f32 0.0, %v3815
        %3817 = vmatmul.f32.gmra.mxu0 %v2540
        %v3818 = vpop.f32.mrf.mxu0
        %v3819 = vadd.f32 0.0, %v3818
        %3820 = vmatmul.f32.gmra.mxu0 %v2557
        %v3821 = vpop.f32.mrf.mxu0
        %v3822 = vadd.f32 0.0, %v3821
        %3823 = vmatmul.f32.gmra.mxu0 %v2574
        %v3824 = vpop.f32.mrf.mxu0
        %v3825 = vadd.f32 0.0, %v3824
        %3826 = vmatmul.f32.gmra.mxu0 %v2591
        %v3827 = vpop.f32.mrf.mxu0
        %v3828 = vadd.f32 0.0, %v3827
        %3829 = vdwg.mxu0
        %3830 = vmatpush.msra.mxu0 %v2671
        %3831 = vmatpush.msra.mxu0 %v2669
        %3832 = vmatpush.msra.mxu0 %v2667
        %3833 = vmatpush.msra.mxu0 %v2665
        %3834 = vmatpush.msra.mxu0 %v2663
        %3835 = vmatpush.msra.mxu0 %v2661
        %3836 = vmatpush.msra.mxu0 %v2659
        %3837 = vmatpush.msra.mxu0 %v2657
        %3838 = vmatpush.msra.mxu0 %v2655
        %3839 = vmatpush.msra.mxu0 %v2653
        %3840 = vmatpush.msra.mxu0 %v2651
        %3841 = vmatpush.msra.mxu0 %v2649
        %3842 = vmatpush.msra.mxu0 %v2647
        %3843 = vmatpush.msra.mxu0 %v2645
        %3844 = vmatpush.msra.mxu0 %v2643
        %3845 = vmatpush.msra.mxu0 %v2641
        %3846 = vmatmul.f32.gmra.mxu0 %v2490
        %v3847 = vpop.f32.mrf.mxu0
        %v3848 = vadd.f32 %v3810, %v3847
        %3849 = vmatmul.f32.gmra.mxu0 %v2507
        %v3850 = vpop.f32.mrf.mxu0
        %v3851 = vadd.f32 %v3813, %v3850
        %3852 = vmatmul.f32.gmra.mxu0 %v2524
        %v3853 = vpop.f32.mrf.mxu0
        %v3854 = vadd.f32 %v3816, %v3853
        %3855 = vmatmul.f32.gmra.mxu0 %v2541
        %v3856 = vpop.f32.mrf.mxu0
        %v3857 = vadd.f32 %v3819, %v3856
        %3858 = vmatmul.f32.gmra.mxu0 %v2558
        %v3859 = vpop.f32.mrf.mxu0
        %v3860 = vadd.f32 %v3822, %v3859
        %3861 = vmatmul.f32.gmra.mxu0 %v2575
        %v3862 = vpop.f32.mrf.mxu0
        %v3863 = vadd.f32 %v3825, %v3862
        %3864 = vmatmul.f32.gmra.mxu0 %v2592
        %v3865 = vpop.f32.mrf.mxu0
        %v3866 = vadd.f32 %v3828, %v3865
        %3867 = vdwg.mxu0
        %3868 = vmatpush.msra.mxu0 %v2703
        %3869 = vmatpush.msra.mxu0 %v2701
        %3870 = vmatpush.msra.mxu0 %v2699
        %3871 = vmatpush.msra.mxu0 %v2697
        %3872 = vmatpush.msra.mxu0 %v2695
        %3873 = vmatpush.msra.mxu0 %v2693
        %3874 = vmatpush.msra.mxu0 %v2691
        %3875 = vmatpush.msra.mxu0 %v2689
        %3876 = vmatpush.msra.mxu0 %v2687
        %3877 = vmatpush.msra.mxu0 %v2685
        %3878 = vmatpush.msra.mxu0 %v2683
        %3879 = vmatpush.msra.mxu0 %v2681
        %3880 = vmatpush.msra.mxu0 %v2679
        %3881 = vmatpush.msra.mxu0 %v2677
        %3882 = vmatpush.msra.mxu0 %v2675
        %3883 = vmatpush.msra.mxu0 %v2673
        %3884 = vmatmul.f32.gmra.mxu0 %v2491
        %v3885 = vpop.f32.mrf.mxu0
        %v3886 = vadd.f32 %v3848, %v3885
        %3887 = vmatmul.f32.gmra.mxu0 %v2508
        %v3888 = vpop.f32.mrf.mxu0
        %v3889 = vadd.f32 %v3851, %v3888
        %3890 = vmatmul.f32.gmra.mxu0 %v2525
        %v3891 = vpop.f32.mrf.mxu0
        %v3892 = vadd.f32 %v3854, %v3891
        %3893 = vmatmul.f32.gmra.mxu0 %v2542
        %v3894 = vpop.f32.mrf.mxu0
        %v3895 = vadd.f32 %v3857, %v3894
        %3896 = vmatmul.f32.gmra.mxu0 %v2559
        %v3897 = vpop.f32.mrf.mxu0
        %v3898 = vadd.f32 %v3860, %v3897
        %3899 = vmatmul.f32.gmra.mxu0 %v2576
        %v3900 = vpop.f32.mrf.mxu0
        %v3901 = vadd.f32 %v3863, %v3900
        %3902 = vmatmul.f32.gmra.mxu0 %v2593
        %v3903 = vpop.f32.mrf.mxu0
        %v3904 = vadd.f32 %v3866, %v3903
        %3905 = vdwg.mxu0
        %3906 = vmatpush.msra.mxu0 %v2735
        %3907 = vmatpush.msra.mxu0 %v2733
        %3908 = vmatpush.msra.mxu0 %v2731
        %3909 = vmatpush.msra.mxu0 %v2729
        %3910 = vmatpush.msra.mxu0 %v2727
        %3911 = vmatpush.msra.mxu0 %v2725
        %3912 = vmatpush.msra.mxu0 %v2723
        %3913 = vmatpush.msra.mxu0 %v2721
        %3914 = vmatpush.msra.mxu0 %v2719
        %3915 = vmatpush.msra.mxu0 %v2717
        %3916 = vmatpush.msra.mxu0 %v2715
        %3917 = vmatpush.msra.mxu0 %v2713
        %3918 = vmatpush.msra.mxu0 %v2711
        %3919 = vmatpush.msra.mxu0 %v2709
        %3920 = vmatpush.msra.mxu0 %v2707
        %3921 = vmatpush.msra.mxu0 %v2705
        %3922 = vmatmul.f32.gmra.mxu0 %v2492
        %v3923 = vpop.f32.mrf.mxu0
        %v3924 = vadd.f32 %v3886, %v3923
        %3925 = vmatmul.f32.gmra.mxu0 %v2509
        %v3926 = vpop.f32.mrf.mxu0
        %v3927 = vadd.f32 %v3889, %v3926
        %3928 = vmatmul.f32.gmra.mxu0 %v2526
        %v3929 = vpop.f32.mrf.mxu0
        %v3930 = vadd.f32 %v3892, %v3929
        %3931 = vmatmul.f32.gmra.mxu0 %v2543
        %v3932 = vpop.f32.mrf.mxu0
        %v3933 = vadd.f32 %v3895, %v3932
        %3934 = vmatmul.f32.gmra.mxu0 %v2560
        %v3935 = vpop.f32.mrf.mxu0
        %v3936 = vadd.f32 %v3898, %v3935
        %3937 = vmatmul.f32.gmra.mxu0 %v2577
        %v3938 = vpop.f32.mrf.mxu0
        %v3939 = vadd.f32 %v3901, %v3938
        %3940 = vmatmul.f32.gmra.mxu0 %v2594
        %v3941 = vpop.f32.mrf.mxu0
        %v3942 = vadd.f32 %v3904, %v3941
        %3943 = vdwg.mxu0
        %3944 = vmatpush.msra.mxu0 %v2767
        %3945 = vmatpush.msra.mxu0 %v2765
        %3946 = vmatpush.msra.mxu0 %v2763
        %3947 = vmatpush.msra.mxu0 %v2761
        %3948 = vmatpush.msra.mxu0 %v2759
        %3949 = vmatpush.msra.mxu0 %v2757
        %3950 = vmatpush.msra.mxu0 %v2755
        %3951 = vmatpush.msra.mxu0 %v2753
        %3952 = vmatpush.msra.mxu0 %v2751
        %3953 = vmatpush.msra.mxu0 %v2749
        %3954 = vmatpush.msra.mxu0 %v2747
        %3955 = vmatpush.msra.mxu0 %v2745
        %3956 = vmatpush.msra.mxu0 %v2743
        %3957 = vmatpush.msra.mxu0 %v2741
        %3958 = vmatpush.msra.mxu0 %v2739
        %3959 = vmatpush.msra.mxu0 %v2737
        %3960 = vmatmul.f32.gmra.mxu0 %v2493
        %v3961 = vpop.f32.mrf.mxu0
        %v3962 = vadd.f32 %v3924, %v3961
        %3963 = vmatmul.f32.gmra.mxu0 %v2510
        %v3964 = vpop.f32.mrf.mxu0
        %v3965 = vadd.f32 %v3927, %v3964
        %3966 = vmatmul.f32.gmra.mxu0 %v2527
        %v3967 = vpop.f32.mrf.mxu0
        %v3968 = vadd.f32 %v3930, %v3967
        %3969 = vmatmul.f32.gmra.mxu0 %v2544
        %v3970 = vpop.f32.mrf.mxu0
        %v3971 = vadd.f32 %v3933, %v3970
        %3972 = vmatmul.f32.gmra.mxu0 %v2561
        %v3973 = vpop.f32.mrf.mxu0
        %v3974 = vadd.f32 %v3936, %v3973
        %3975 = vmatmul.f32.gmra.mxu0 %v2578
        %v3976 = vpop.f32.mrf.mxu0
        %v3977 = vadd.f32 %v3939, %v3976
        %3978 = vmatmul.f32.gmra.mxu0 %v2595
        %v3979 = vpop.f32.mrf.mxu0
        %v3980 = vadd.f32 %v3942, %v3979
        %3981 = vdwg.mxu0
        %3982 = vmatpush.msra.mxu0 %v2799
        %3983 = vmatpush.msra.mxu0 %v2797
        %3984 = vmatpush.msra.mxu0 %v2795
        %3985 = vmatpush.msra.mxu0 %v2793
        %3986 = vmatpush.msra.mxu0 %v2791
        %3987 = vmatpush.msra.mxu0 %v2789
        %3988 = vmatpush.msra.mxu0 %v2787
        %3989 = vmatpush.msra.mxu0 %v2785
        %3990 = vmatpush.msra.mxu0 %v2783
        %3991 = vmatpush.msra.mxu0 %v2781
        %3992 = vmatpush.msra.mxu0 %v2779
        %3993 = vmatpush.msra.mxu0 %v2777
        %3994 = vmatpush.msra.mxu0 %v2775
        %3995 = vmatpush.msra.mxu0 %v2773
        %3996 = vmatpush.msra.mxu0 %v2771
        %3997 = vmatpush.msra.mxu0 %v2769
        %3998 = vmatmul.f32.gmra.mxu0 %v2494
        %v3999 = vpop.f32.mrf.mxu0
        %v4000 = vadd.f32 %v3962, %v3999
        %4001 = vmatmul.f32.gmra.mxu0 %v2511
        %v4002 = vpop.f32.mrf.mxu0
        %v4003 = vadd.f32 %v3965, %v4002
        %4004 = vmatmul.f32.gmra.mxu0 %v2528
        %v4005 = vpop.f32.mrf.mxu0
        %v4006 = vadd.f32 %v3968, %v4005
        %4007 = vmatmul.f32.gmra.mxu0 %v2545
        %v4008 = vpop.f32.mrf.mxu0
        %v4009 = vadd.f32 %v3971, %v4008
        %4010 = vmatmul.f32.gmra.mxu0 %v2562
        %v4011 = vpop.f32.mrf.mxu0
        %v4012 = vadd.f32 %v3974, %v4011
        %4013 = vmatmul.f32.gmra.mxu0 %v2579
        %v4014 = vpop.f32.mrf.mxu0
        %v4015 = vadd.f32 %v3977, %v4014
        %4016 = vmatmul.f32.gmra.mxu0 %v2596
        %v4017 = vpop.f32.mrf.mxu0
        %v4018 = vadd.f32 %v3980, %v4017
        %4019 = vdwg.mxu0
        %4020 = vmatpush.msra.mxu0 %v2831
        %4021 = vmatpush.msra.mxu0 %v2829
        %4022 = vmatpush.msra.mxu0 %v2827
        %4023 = vmatpush.msra.mxu0 %v2825
        %4024 = vmatpush.msra.mxu0 %v2823
        %4025 = vmatpush.msra.mxu0 %v2821
        %4026 = vmatpush.msra.mxu0 %v2819
        %4027 = vmatpush.msra.mxu0 %v2817
        %4028 = vmatpush.msra.mxu0 %v2815
        %4029 = vmatpush.msra.mxu0 %v2813
        %4030 = vmatpush.msra.mxu0 %v2811
        %4031 = vmatpush.msra.mxu0 %v2809
        %4032 = vmatpush.msra.mxu0 %v2807
        %4033 = vmatpush.msra.mxu0 %v2805
        %4034 = vmatpush.msra.mxu0 %v2803
        %4035 = vmatpush.msra.mxu0 %v2801
        %4036 = vmatmul.f32.gmra.mxu0 %v2495
        %v4037 = vpop.f32.mrf.mxu0
        %v4038 = vadd.f32 %v4000, %v4037
        %4039 = vmatmul.f32.gmra.mxu0 %v2512
        %v4040 = vpop.f32.mrf.mxu0
        %v4041 = vadd.f32 %v4003, %v4040
        %4042 = vmatmul.f32.gmra.mxu0 %v2529
        %v4043 = vpop.f32.mrf.mxu0
        %v4044 = vadd.f32 %v4006, %v4043
        %4045 = vmatmul.f32.gmra.mxu0 %v2546
        %v4046 = vpop.f32.mrf.mxu0
        %v4047 = vadd.f32 %v4009, %v4046
        %4048 = vmatmul.f32.gmra.mxu0 %v2563
        %v4049 = vpop.f32.mrf.mxu0
        %v4050 = vadd.f32 %v4012, %v4049
        %4051 = vmatmul.f32.gmra.mxu0 %v2580
        %v4052 = vpop.f32.mrf.mxu0
        %v4053 = vadd.f32 %v4015, %v4052
        %4054 = vmatmul.f32.gmra.mxu0 %v2597
        %v4055 = vpop.f32.mrf.mxu0
        %v4056 = vadd.f32 %v4018, %v4055
        %4057 = vdwg.mxu0
        %4058 = vmatpush.msra.mxu0 %v2863
        %4059 = vmatpush.msra.mxu0 %v2861
        %4060 = vmatpush.msra.mxu0 %v2859
        %4061 = vmatpush.msra.mxu0 %v2857
        %4062 = vmatpush.msra.mxu0 %v2855
        %4063 = vmatpush.msra.mxu0 %v2853
        %4064 = vmatpush.msra.mxu0 %v2851
        %4065 = vmatpush.msra.mxu0 %v2849
        %4066 = vmatpush.msra.mxu0 %v2847
        %4067 = vmatpush.msra.mxu0 %v2845
        %4068 = vmatpush.msra.mxu0 %v2843
        %4069 = vmatpush.msra.mxu0 %v2841
        %4070 = vmatpush.msra.mxu0 %v2839
        %4071 = vmatpush.msra.mxu0 %v2837
        %4072 = vmatpush.msra.mxu0 %v2835
        %4073 = vmatpush.msra.mxu0 %v2833
        %4074 = vmatmul.f32.gmra.mxu0 %v2496
        %v4075 = vpop.f32.mrf.mxu0
        %v4076 = vadd.f32 %v4038, %v4075
        %4077 = vmatmul.f32.gmra.mxu0 %v2513
        %v4078 = vpop.f32.mrf.mxu0
        %v4079 = vadd.f32 %v4041, %v4078
        %4080 = vmatmul.f32.gmra.mxu0 %v2530
        %v4081 = vpop.f32.mrf.mxu0
        %v4082 = vadd.f32 %v4044, %v4081
        %4083 = vmatmul.f32.gmra.mxu0 %v2547
        %v4084 = vpop.f32.mrf.mxu0
        %v4085 = vadd.f32 %v4047, %v4084
        %4086 = vmatmul.f32.gmra.mxu0 %v2564
        %v4087 = vpop.f32.mrf.mxu0
        %v4088 = vadd.f32 %v4050, %v4087
        %4089 = vmatmul.f32.gmra.mxu0 %v2581
        %v4090 = vpop.f32.mrf.mxu0
        %v4091 = vadd.f32 %v4053, %v4090
        %4092 = vmatmul.f32.gmra.mxu0 %v2598
        %v4093 = vpop.f32.mrf.mxu0
        %v4094 = vadd.f32 %v4056, %v4093
        %4095 = vdwg.mxu0
        %4096 = vmatpush.msra.mxu0 %v2895
        %4097 = vmatpush.msra.mxu0 %v2893
        %4098 = vmatpush.msra.mxu0 %v2891
        %4099 = vmatpush.msra.mxu0 %v2889
        %4100 = vmatpush.msra.mxu0 %v2887
        %4101 = vmatpush.msra.mxu0 %v2885
        %4102 = vmatpush.msra.mxu0 %v2883
        %4103 = vmatpush.msra.mxu0 %v2881
        %4104 = vmatpush.msra.mxu0 %v2879
        %4105 = vmatpush.msra.mxu0 %v2877
        %4106 = vmatpush.msra.mxu0 %v2875
        %4107 = vmatpush.msra.mxu0 %v2873
        %4108 = vmatpush.msra.mxu0 %v2871
        %4109 = vmatpush.msra.mxu0 %v2869
        %4110 = vmatpush.msra.mxu0 %v2867
        %4111 = vmatpush.msra.mxu0 %v2865
        %4112 = vmatmul.f32.gmra.mxu0 %v2497
        %v4113 = vpop.f32.mrf.mxu0
        %v4114 = vadd.f32 %v4076, %v4113
        %4115 = vmatmul.f32.gmra.mxu0 %v2514
        %v4116 = vpop.f32.mrf.mxu0
        %v4117 = vadd.f32 %v4079, %v4116
        %4118 = vmatmul.f32.gmra.mxu0 %v2531
        %v4119 = vpop.f32.mrf.mxu0
        %v4120 = vadd.f32 %v4082, %v4119
        %4121 = vmatmul.f32.gmra.mxu0 %v2548
        %v4122 = vpop.f32.mrf.mxu0
        %v4123 = vadd.f32 %v4085, %v4122
        %4124 = vmatmul.f32.gmra.mxu0 %v2565
        %v4125 = vpop.f32.mrf.mxu0
        %v4126 = vadd.f32 %v4088, %v4125
        %4127 = vmatmul.f32.gmra.mxu0 %v2582
        %v4128 = vpop.f32.mrf.mxu0
        %v4129 = vadd.f32 %v4091, %v4128
        %4130 = vmatmul.f32.gmra.mxu0 %v2599
        %v4131 = vpop.f32.mrf.mxu0
        %v4132 = vadd.f32 %v4094, %v4131
        %4133 = vdwg.mxu0
        %4134 = vmatpush.msra.mxu0 %v2927
        %4135 = vmatpush.msra.mxu0 %v2925
        %4136 = vmatpush.msra.mxu0 %v2923
        %4137 = vmatpush.msra.mxu0 %v2921
        %4138 = vmatpush.msra.mxu0 %v2919
        %4139 = vmatpush.msra.mxu0 %v2917
        %4140 = vmatpush.msra.mxu0 %v2915
        %4141 = vmatpush.msra.mxu0 %v2913
        %4142 = vmatpush.msra.mxu0 %v2911
        %4143 = vmatpush.msra.mxu0 %v2909
        %4144 = vmatpush.msra.mxu0 %v2907
        %4145 = vmatpush.msra.mxu0 %v2905
        %4146 = vmatpush.msra.mxu0 %v2903
        %4147 = vmatpush.msra.mxu0 %v2901
        %4148 = vmatpush.msra.mxu0 %v2899
        %4149 = vmatpush.msra.mxu0 %v2897
        %4150 = vmatmul.f32.gmra.mxu0 %v2498
        %v4151 = vpop.f32.mrf.mxu0
        %v4152 = vadd.f32 %v4114, %v4151
        %4153 = vmatmul.f32.gmra.mxu0 %v2515
        %v4154 = vpop.f32.mrf.mxu0
        %v4155 = vadd.f32 %v4117, %v4154
        %4156 = vmatmul.f32.gmra.mxu0 %v2532
        %v4157 = vpop.f32.mrf.mxu0
        %v4158 = vadd.f32 %v4120, %v4157
        %4159 = vmatmul.f32.gmra.mxu0 %v2549
        %v4160 = vpop.f32.mrf.mxu0
        %v4161 = vadd.f32 %v4123, %v4160
        %4162 = vmatmul.f32.gmra.mxu0 %v2566
        %v4163 = vpop.f32.mrf.mxu0
        %v4164 = vadd.f32 %v4126, %v4163
        %4165 = vmatmul.f32.gmra.mxu0 %v2583
        %v4166 = vpop.f32.mrf.mxu0
        %v4167 = vadd.f32 %v4129, %v4166
        %4168 = vmatmul.f32.gmra.mxu0 %v2600
        %v4169 = vpop.f32.mrf.mxu0
        %v4170 = vadd.f32 %v4132, %v4169
        %4171 = vdwg.mxu0
        %4172 = vmatpush.msra.mxu0 %v2959
        %4173 = vmatpush.msra.mxu0 %v2957
        %4174 = vmatpush.msra.mxu0 %v2955
        %4175 = vmatpush.msra.mxu0 %v2953
        %4176 = vmatpush.msra.mxu0 %v2951
        %4177 = vmatpush.msra.mxu0 %v2949
        %4178 = vmatpush.msra.mxu0 %v2947
        %4179 = vmatpush.msra.mxu0 %v2945
        %4180 = vmatpush.msra.mxu0 %v2943
        %4181 = vmatpush.msra.mxu0 %v2941
        %4182 = vmatpush.msra.mxu0 %v2939
        %4183 = vmatpush.msra.mxu0 %v2937
        %4184 = vmatpush.msra.mxu0 %v2935
        %4185 = vmatpush.msra.mxu0 %v2933
        %4186 = vmatpush.msra.mxu0 %v2931
        %4187 = vmatpush.msra.mxu0 %v2929
        %4188 = vmatmul.f32.gmra.mxu0 %v2499
        %v4189 = vpop.f32.mrf.mxu0
        %v4190 = vadd.f32 %v4152, %v4189
        %4191 = vmatmul.f32.gmra.mxu0 %v2516
        %v4192 = vpop.f32.mrf.mxu0
        %v4193 = vadd.f32 %v4155, %v4192
        %4194 = vmatmul.f32.gmra.mxu0 %v2533
        %v4195 = vpop.f32.mrf.mxu0
        %v4196 = vadd.f32 %v4158, %v4195
        %4197 = vmatmul.f32.gmra.mxu0 %v2550
        %v4198 = vpop.f32.mrf.mxu0
        %v4199 = vadd.f32 %v4161, %v4198
        %4200 = vmatmul.f32.gmra.mxu0 %v2567
        %v4201 = vpop.f32.mrf.mxu0
        %v4202 = vadd.f32 %v4164, %v4201
        %4203 = vmatmul.f32.gmra.mxu0 %v2584
        %v4204 = vpop.f32.mrf.mxu0
        %v4205 = vadd.f32 %v4167, %v4204
        %4206 = vmatmul.f32.gmra.mxu0 %v2601
        %v4207 = vpop.f32.mrf.mxu0
        %v4208 = vadd.f32 %v4170, %v4207
        %4209 = vdwg.mxu0
        %4210 = vmatpush.msra.mxu0 %v2991
        %4211 = vmatpush.msra.mxu0 %v2989
        %4212 = vmatpush.msra.mxu0 %v2987
        %4213 = vmatpush.msra.mxu0 %v2985
        %4214 = vmatpush.msra.mxu0 %v2983
        %4215 = vmatpush.msra.mxu0 %v2981
        %4216 = vmatpush.msra.mxu0 %v2979
        %4217 = vmatpush.msra.mxu0 %v2977
        %4218 = vmatpush.msra.mxu0 %v2975
        %4219 = vmatpush.msra.mxu0 %v2973
        %4220 = vmatpush.msra.mxu0 %v2971
        %4221 = vmatpush.msra.mxu0 %v2969
        %4222 = vmatpush.msra.mxu0 %v2967
        %4223 = vmatpush.msra.mxu0 %v2965
        %4224 = vmatpush.msra.mxu0 %v2963
        %4225 = vmatpush.msra.mxu0 %v2961
        %4226 = vmatmul.f32.gmra.mxu0 %v2500
        %v4227 = vpop.f32.mrf.mxu0
        %v4228 = vadd.f32 %v4190, %v4227
        %4229 = vmatmul.f32.gmra.mxu0 %v2517
        %v4230 = vpop.f32.mrf.mxu0
        %v4231 = vadd.f32 %v4193, %v4230
        %4232 = vmatmul.f32.gmra.mxu0 %v2534
        %v4233 = vpop.f32.mrf.mxu0
        %v4234 = vadd.f32 %v4196, %v4233
        %4235 = vmatmul.f32.gmra.mxu0 %v2551
        %v4236 = vpop.f32.mrf.mxu0
        %v4237 = vadd.f32 %v4199, %v4236
        %4238 = vmatmul.f32.gmra.mxu0 %v2568
        %v4239 = vpop.f32.mrf.mxu0
        %v4240 = vadd.f32 %v4202, %v4239
        %4241 = vmatmul.f32.gmra.mxu0 %v2585
        %v4242 = vpop.f32.mrf.mxu0
        %v4243 = vadd.f32 %v4205, %v4242
        %4244 = vmatmul.f32.gmra.mxu0 %v2602
        %v4245 = vpop.f32.mrf.mxu0
        %v4246 = vadd.f32 %v4208, %v4245
        %4247 = vdwg.mxu0
        %4248 = vmatpush.msra.mxu0 %v3023
        %4249 = vmatpush.msra.mxu0 %v3021
        %4250 = vmatpush.msra.mxu0 %v3019
        %4251 = vmatpush.msra.mxu0 %v3017
        %4252 = vmatpush.msra.mxu0 %v3015
        %4253 = vmatpush.msra.mxu0 %v3013
        %4254 = vmatpush.msra.mxu0 %v3011
        %4255 = vmatpush.msra.mxu0 %v3009
        %4256 = vmatpush.msra.mxu0 %v3007
        %4257 = vmatpush.msra.mxu0 %v3005
        %4258 = vmatpush.msra.mxu0 %v3003
        %4259 = vmatpush.msra.mxu0 %v3001
        %4260 = vmatpush.msra.mxu0 %v2999
        %4261 = vmatpush.msra.mxu0 %v2997
        %4262 = vmatpush.msra.mxu0 %v2995
        %4263 = vmatpush.msra.mxu0 %v2993
        %4264 = vmatmul.f32.gmra.mxu0 %v2501
        %v4265 = vpop.f32.mrf.mxu0
        %v4266 = vadd.f32 %v4228, %v4265
        %4267 = vmatmul.f32.gmra.mxu0 %v2518
        %v4268 = vpop.f32.mrf.mxu0
        %v4269 = vadd.f32 %v4231, %v4268
        %4270 = vmatmul.f32.gmra.mxu0 %v2535
        %v4271 = vpop.f32.mrf.mxu0
        %v4272 = vadd.f32 %v4234, %v4271
        %4273 = vmatmul.f32.gmra.mxu0 %v2552
        %v4274 = vpop.f32.mrf.mxu0
        %v4275 = vadd.f32 %v4237, %v4274
        %4276 = vmatmul.f32.gmra.mxu0 %v2569
        %v4277 = vpop.f32.mrf.mxu0
        %v4278 = vadd.f32 %v4240, %v4277
        %4279 = vmatmul.f32.gmra.mxu0 %v2586
        %v4280 = vpop.f32.mrf.mxu0
        %v4281 = vadd.f32 %v4243, %v4280
        %4282 = vmatmul.f32.gmra.mxu0 %v2603
        %v4283 = vpop.f32.mrf.mxu0
        %v4284 = vadd.f32 %v4246, %v4283
        %4285 = vdwg.mxu0
        %4286 = vmatpush.msra.mxu0 %v3055
        %4287 = vmatpush.msra.mxu0 %v3053
        %4288 = vmatpush.msra.mxu0 %v3051
        %4289 = vmatpush.msra.mxu0 %v3049
        %4290 = vmatpush.msra.mxu0 %v3047
        %4291 = vmatpush.msra.mxu0 %v3045
        %4292 = vmatpush.msra.mxu0 %v3043
        %4293 = vmatpush.msra.mxu0 %v3041
        %4294 = vmatpush.msra.mxu0 %v3039
        %4295 = vmatpush.msra.mxu0 %v3037
        %4296 = vmatpush.msra.mxu0 %v3035
        %4297 = vmatpush.msra.mxu0 %v3033
        %4298 = vmatpush.msra.mxu0 %v3031
        %4299 = vmatpush.msra.mxu0 %v3029
        %4300 = vmatpush.msra.mxu0 %v3027
        %4301 = vmatpush.msra.mxu0 %v3025
        %4302 = vmatmul.f32.gmra.mxu0 %v2502
        %v4303 = vpop.f32.mrf.mxu0
        %v4304 = vadd.f32 %v4266, %v4303
        %4305 = vmatmul.f32.gmra.mxu0 %v2519
        %v4306 = vpop.f32.mrf.mxu0
        %v4307 = vadd.f32 %v4269, %v4306
        %4308 = vmatmul.f32.gmra.mxu0 %v2536
        %v4309 = vpop.f32.mrf.mxu0
        %v4310 = vadd.f32 %v4272, %v4309
        %4311 = vmatmul.f32.gmra.mxu0 %v2553
        %v4312 = vpop.f32.mrf.mxu0
        %v4313 = vadd.f32 %v4275, %v4312
        %4314 = vmatmul.f32.gmra.mxu0 %v2570
        %v4315 = vpop.f32.mrf.mxu0
        %v4316 = vadd.f32 %v4278, %v4315
        %4317 = vmatmul.f32.gmra.mxu0 %v2587
        %v4318 = vpop.f32.mrf.mxu0
        %v4319 = vadd.f32 %v4281, %v4318
        %4320 = vmatmul.f32.gmra.mxu0 %v2604
        %v4321 = vpop.f32.mrf.mxu0
        %v4322 = vadd.f32 %v4284, %v4321
        %4323 = vdwg.mxu0
        %4324 = vmatpush.msra.mxu0 %v3087
        %4325 = vmatpush.msra.mxu0 %v3085
        %4326 = vmatpush.msra.mxu0 %v3083
        %4327 = vmatpush.msra.mxu0 %v3081
        %4328 = vmatpush.msra.mxu0 %v3079
        %4329 = vmatpush.msra.mxu0 %v3077
        %4330 = vmatpush.msra.mxu0 %v3075
        %4331 = vmatpush.msra.mxu0 %v3073
        %4332 = vmatpush.msra.mxu0 %v3071
        %4333 = vmatpush.msra.mxu0 %v3069
        %4334 = vmatpush.msra.mxu0 %v3067
        %4335 = vmatpush.msra.mxu0 %v3065
        %4336 = vmatpush.msra.mxu0 %v3063
        %4337 = vmatpush.msra.mxu0 %v3061
        %4338 = vmatpush.msra.mxu0 %v3059
        %4339 = vmatpush.msra.mxu0 %v3057
        %4340 = vmatmul.f32.gmra.mxu0 %v2503
        %v4341 = vpop.f32.mrf.mxu0
        %v4342 = vadd.f32 %v4304, %v4341
        %4343 = vmatmul.f32.gmra.mxu0 %v2520
        %v4344 = vpop.f32.mrf.mxu0
        %v4345 = vadd.f32 %v4307, %v4344
        %4346 = vmatmul.f32.gmra.mxu0 %v2537
        %v4347 = vpop.f32.mrf.mxu0
        %v4348 = vadd.f32 %v4310, %v4347
        %4349 = vmatmul.f32.gmra.mxu0 %v2554
        %v4350 = vpop.f32.mrf.mxu0
        %v4351 = vadd.f32 %v4313, %v4350
        %4352 = vmatmul.f32.gmra.mxu0 %v2571
        %v4353 = vpop.f32.mrf.mxu0
        %v4354 = vadd.f32 %v4316, %v4353
        %4355 = vmatmul.f32.gmra.mxu0 %v2588
        %v4356 = vpop.f32.mrf.mxu0
        %v4357 = vadd.f32 %v4319, %v4356
        %4358 = vmatmul.f32.gmra.mxu0 %v2605
        %v4359 = vpop.f32.mrf.mxu0
        %v4360 = vadd.f32 %v4322, %v4359
        %4361 = vdwg.mxu0
        %4362 = vmatpush.msra.mxu0 %v3119
        %4363 = vmatpush.msra.mxu0 %v3117
        %4364 = vmatpush.msra.mxu0 %v3115
        %4365 = vmatpush.msra.mxu0 %v3113
        %4366 = vmatpush.msra.mxu0 %v3111
        %4367 = vmatpush.msra.mxu0 %v3109
        %4368 = vmatpush.msra.mxu0 %v3107
        %4369 = vmatpush.msra.mxu0 %v3105
        %4370 = vmatpush.msra.mxu0 %v3103
        %4371 = vmatpush.msra.mxu0 %v3101
        %4372 = vmatpush.msra.mxu0 %v3099
        %4373 = vmatpush.msra.mxu0 %v3097
        %4374 = vmatpush.msra.mxu0 %v3095
        %4375 = vmatpush.msra.mxu0 %v3093
        %4376 = vmatpush.msra.mxu0 %v3091
        %4377 = vmatpush.msra.mxu0 %v3089
        %4378 = vmatmul.f32.gmra.mxu0 %v2504
        %v4379 = vpop.f32.mrf.mxu0
        %v4380 = vadd.f32 %v4342, %v4379
        %4381 = vmatmul.f32.gmra.mxu0 %v2521
        %v4382 = vpop.f32.mrf.mxu0
        %v4383 = vadd.f32 %v4345, %v4382
        %4384 = vmatmul.f32.gmra.mxu0 %v2538
        %v4385 = vpop.f32.mrf.mxu0
        %v4386 = vadd.f32 %v4348, %v4385
        %4387 = vmatmul.f32.gmra.mxu0 %v2555
        %v4388 = vpop.f32.mrf.mxu0
        %v4389 = vadd.f32 %v4351, %v4388
        %4390 = vmatmul.f32.gmra.mxu0 %v2572
        %v4391 = vpop.f32.mrf.mxu0
        %v4392 = vadd.f32 %v4354, %v4391
        %4393 = vmatmul.f32.gmra.mxu0 %v2589
        %v4394 = vpop.f32.mrf.mxu0
        %v4395 = vadd.f32 %v4357, %v4394
        %4396 = vmatmul.f32.gmra.mxu0 %v2606
        %v4397 = vpop.f32.mrf.mxu0
        %v4398 = vadd.f32 %v4360, %v4397
        %4399 = vdwg.mxu0
        %4400 = vmatpush.msra.mxu0 0.0
        %4401 = vmatpush.msra.mxu0 0.0
        %4402 = vmatpush.msra.mxu0 0.0
        %4403 = vmatpush.msra.mxu0 0.0
        %4404 = vmatpush.msra.mxu0 0.0
        %4405 = vmatpush.msra.mxu0 0.0
        %4406 = vmatpush.msra.mxu0 0.0
        %4407 = vmatpush.msra.mxu0 0.0
        %4408 = vmatpush.msra.mxu0 0.0
        %4409 = vmatpush.msra.mxu0 0.0
        %4410 = vmatpush.msra.mxu0 0.0
        %4411 = vmatpush.msra.mxu0 0.0
        %4412 = vmatpush.msra.mxu0 0.0
        %4413 = vmatpush.msra.mxu0 0.0
        %4414 = vmatpush.msra.mxu0 %v3123
        %4415 = vmatpush.msra.mxu0 %v3121
        %4416 = vmatmul.f32.gmra.mxu0 %v3126
        %v4417 = vpop.f32.mrf.mxu0
        %v4418 = vadd.f32 %v4380, %v4417
        %4419 = vmatmul.f32.gmra.mxu0 %v3129
        %v4420 = vpop.f32.mrf.mxu0
        %v4421 = vadd.f32 %v4383, %v4420
        %4422 = vmatmul.f32.gmra.mxu0 %v3132
        %v4423 = vpop.f32.mrf.mxu0
        %v4424 = vadd.f32 %v4386, %v4423
        %4425 = vmatmul.f32.gmra.mxu0 %v3135
        %v4426 = vpop.f32.mrf.mxu0
        %v4427 = vadd.f32 %v4389, %v4426
        %4428 = vmatmul.f32.gmra.mxu0 %v3138
        %v4429 = vpop.f32.mrf.mxu0
        %v4430 = vadd.f32 %v4392, %v4429
        %4431 = vmatmul.f32.gmra.mxu0 %v3141
        %v4432 = vpop.f32.mrf.mxu0
        %v4433 = vadd.f32 %v4395, %v4432
        %4434 = vmatmul.f32.gmra.mxu0 %v3144
        %v4435 = vpop.f32.mrf.mxu0
        %v4436 = vadd.f32 %v4398, %v4435
        %4437 = vdwg.mxu0
        %4438 = vst [vmem:[%s2319] sm:$0xff] %v3772
        %4439 = vst [vmem:[%s2319 + $0x8] sm:$0xff] %v4418
        %4440 = vst [vmem:[%s2319 + $0x10] sm:$0xff] %v3775
        %4441 = vst [vmem:[%s2319 + $0x18] sm:$0xff] %v4421
        %4442 = vst [vmem:[%s2319 + $0x20] sm:$0xff] %v3778
        %4443 = vst [vmem:[%s2319 + $0x28] sm:$0xff] %v4424
        %4444 = vst [vmem:[%s2319 + $0x30] sm:$0xff] %v3781
        %4445 = vst [vmem:[%s2319 + $0x38] sm:$0xff] %v4427
        %4446 = vst [vmem:[%s2319 + $0x40] sm:$0xff] %v3784
        %4447 = vst [vmem:[%s2319 + $0x48] sm:$0xff] %v4430
        %4448 = vst [vmem:[%s2319 + $0x50] sm:$0xff] %v3787
        %4449 = vst [vmem:[%s2319 + $0x58] sm:$0xff] %v4433
        %4450 = vst [vmem:[%s2319 + $0x60] sm:$0x1] %v3790
        %4451 = vst [vmem:[%s2319 + $0x68] sm:$0x1] %v4436
        %s4452 = sand.u32 %s93, 1
        %s4453 = scalar_lea.sflag [#allocation4], %s4452
        %s4454 = sand.u32 %s93, 1
        %s4455 = smul.addr %s4454, 112
        %s4456 = scalar_lea.vmem [#allocation3], %s4455
        // Predicated region
        $region85: #{tpu_custom_call.1} parent=79 // pred_check
          %p4457 = pneg %p103
        $region86: #{tpu_custom_call.1} parent=79 // pred_check_branch
          %4459 = sbr.rel (%p4457) target = $region88
        $region87: #{tpu_custom_call.1} parent=79 // pred_region
          %s4460 = smul.u32 2, %s17
          %s4461 = ssub.s32 3, %s4460
          %p4462 = scmp.lt.s32.totalorder %s4461, 2
          %s4463 = scalar_select %p4462, %s4461, 2
          %s4464 = smul.u32 56, %s4463
          %s4465 = ssub.s32 112, %s4464
          %s4466 = sshll.u32 %s4465, 4
          %4467 = vsyncadd %s4453, %s4466
          %p4468 = scmp.ne.s32.totalorder 0, %s4464
          %s4469 = smul.addr %s4460, 8
          %s4470 = scalar_lea.hbm %s3, %s4469
          %s4471 = smul.u32 %s4463, 8
          %s4472 = smul.u32 %s4471, 7
          %s4473 = sshll.u32 %s4456, 4
          %s4474 = int_to_ptr.vmem [resolvable:$true] %s4473
          %s4475 = sshll.u32 %s4470, 4
          %s4476 = int_to_ptr.hbm [resolvable:$true] %s4475
          %s4477 = sshll.u32 %s4472, 4
          %4481 = dma.vmem_to_hbm [thread:$0]  (%p4468), %s4474, %s4477, %s4476, %s4453, 256, 384, %s4471
        $region88: #{tpu_custom_call.1} parent=79 // pred_fallthru
          _
      $region80: #{tpu_custom_call.1} parent=5 // pred_fallthru
        _
      %p4482 = scmp.le.s32.totalorder 2, %s12
      // Predicated region
      $region89: #{tpu_custom_call.1} parent=5 // pred_check
        %p4483 = pneg %p4482
      $region90: #{tpu_custom_call.1} parent=5 // pred_check_branch
        %4485 = sbr.rel (%p4483) target = $region92
      $region91: #{tpu_custom_call.1} parent=5 // pred_region
        %s4486 = ssub.s32 %s12, 2
        // Predicated region
        $region93: #{tpu_custom_call.1} parent=91 // pred_check
          %p4487 = pneg %p109
        $region94: #{tpu_custom_call.1} parent=91 // pred_check_branch
          %4489 = sbr.rel (%p4487) target = $region96
        $region95: #{tpu_custom_call.1} parent=91 // pred_region
          %s4490 = sand.u32 %s94, 1
          %s4491 = scalar_lea.sflag [#allocation4], %s4490
          %s4492 = sand.u32 %s94, 1
          %s4493 = smul.addr %s4492, 112
          %s4494 = scalar_lea.vmem [#allocation3], %s4493
          %4496 = dma.done %s4491, 1792
        $region96: #{tpu_custom_call.1} parent=91 // pred_fallthru
          _
      $region92: #{tpu_custom_call.1} parent=5 // pred_fallthru
        _
    $region6: #{tpu_custom_call.1} parent=1 // loop_footer
      %s16 = sadd.s32 1, %s12
    $region7: #{tpu_custom_call.1} parent=1 // loop_footer_branch
      %11 = sbr.rel target = $region3
    $region8: #{tpu_custom_call.1} parent=1 // loop_exit
      _
    %4497 = vsyncpa [#allocation4], 1
    %s4498 = scalar_lea.sflag [#allocation4], 1
    %4499 = vsyncpa %s4498, 1

</llo_original>
